<compile_context>
chip_gen: v7x
topology: tpu7x:2x2x1
jax: 0.10.0
libtpu: 0.0.40
codegen_flags: <defaults>
</compile_context>

<pallas_src>
import numpy as np
import jax
import jax.numpy as jnp
from jax.experimental import pallas as pl
from jax.experimental.pallas import tpu as pltpu

NEG_MASK = -10000.0  # masked keys / invalid global slots (matches the PyTorch module)


def _sparse_attn_global_kernel(q_ref, k_ref, v_ref, gk_ref, gv_ref,
                               kbias_ref, gbias_ref, o_ref):
    """Block-local + global attention for one (batch, chunk) grid step, all heads."""
    H = q_ref.shape[1]
    D = q_ref.shape[4]
    kbias = kbias_ref[0, 0][:, None, :]       # (C, 1, B) per-key local mask bias
    gbias = gbias_ref[0]                      # (1, G) global-slot bias (-1e4 if invalid)
    for h in range(H):                        # static unroll; store per head -> short live ranges
        qb = q_ref[0, h]                      # (C, B, D) bf16
        kb = k_ref[0, h]
        vb = v_ref[0, h]
        gk = gk_ref[0, h]                     # (G, D) bf16
        gv = gv_ref[0, h]
        # block-diagonal local scores: only the B keys of a query's own block
        s_loc = jnp.einsum('cqd,ckd->cqk', qb, kb,
                           preferred_element_type=jnp.float32) + kbias      # (C, B, B)
        s_glb = jnp.einsum('cqd,gd->cqg', qb, gk,
                           preferred_element_type=jnp.float32) + gbias      # (C, B, G)
        m = jnp.maximum(jnp.max(s_loc, axis=-1, keepdims=True),
                        jnp.max(s_glb, axis=-1, keepdims=True))             # (C, B, 1)
        p_loc = jnp.exp(s_loc - m)
        p_glb = jnp.exp(s_glb - m)
        denom = (jnp.sum(p_loc, axis=-1, keepdims=True) +
                 jnp.sum(p_glb, axis=-1, keepdims=True))
        inv = pl.reciprocal(denom, approx=True)
        acc = jnp.einsum('cqk,ckd->cqd', p_loc.astype(vb.dtype), vb,
                         preferred_element_type=jnp.float32)
        acc = acc + jnp.einsum('cqg,gd->cqd', p_glb.astype(gv.dtype), gv,
                               preferred_element_type=jnp.float32)
        o_ref[0, :, :, h * D:(h + 1) * D] = (acc * inv).astype(o_ref.dtype)


def _sparse_attn_local_kernel(q_ref, k_ref, v_ref, kbias_ref, o_ref):
    """Block-local-only attention (stride_c == -1)."""
    H = q_ref.shape[1]
    D = q_ref.shape[4]
    kbias = kbias_ref[0, 0][:, None, :]       # (C, 1, B)
    for h in range(H):
        qb = q_ref[0, h]
        kb = k_ref[0, h]
        vb = v_ref[0, h]
        s_loc = jnp.einsum('cqd,ckd->cqk', qb, kb,
                           preferred_element_type=jnp.float32) + kbias      # (C, B, B)
        m = jnp.max(s_loc, axis=-1, keepdims=True)
        p = jnp.exp(s_loc - m)
        inv = pl.reciprocal(jnp.sum(p, axis=-1, keepdims=True), approx=True)
        acc = jnp.einsum('cqk,ckd->cqd', p.astype(vb.dtype), vb,
                         preferred_element_type=jnp.float32)
        o_ref[0, :, :, h * D:(h + 1) * D] = (acc * inv).astype(o_ref.dtype)


def sparse_self_attention(query, key, value, mask, *, block_size, stride_c,
                          chunk_rows=256, out_dtype=None,
                          single_buffer_globals=True):
    """Pallas implementation of SparseSelfAttention.forward (is_decoder=False).

    chunk_rows ~ number of query rows processed per grid step (use 128 on v5e,
    256 on v6e/v7x).  out_dtype defaults to query.dtype.
    """
    bs, H, L, D = query.shape
    B = block_size
    nb = (L + B - 1) // B
    cur = nb * B                                    # reference padded length
    if out_dtype is None:
        out_dtype = query.dtype

    C = max(1, min(nb, max(1, chunk_rows // B)))    # blocks per grid step
    num_chunks = (nb + C - 1) // C
    nb_pad = num_chunks * C
    cur_pad = nb_pad * B
    pad = cur_pad - L

    qp = jnp.pad(query, ((0, 0), (0, 0), (0, pad), (0, 0))).astype(jnp.bfloat16)
    kp = jnp.pad(key,   ((0, 0), (0, 0), (0, pad), (0, 0))).astype(jnp.bfloat16)
    vp = jnp.pad(value, ((0, 0), (0, 0), (0, pad), (0, 0))).astype(jnp.bfloat16)
    mp = jnp.pad(mask,  ((0, 0), (0, pad)))

    # blocked layout: (bs, H, nb_pad, B, D) -> kernel sees (C, B, D) per head, no in-kernel
    # reshapes and no (8,128)-divisibility coupling between CB and block_size.
    qb = qp.reshape(bs, H, nb_pad, B, D)
    kb = kp.reshape(bs, H, nb_pad, B, D)
    vb = vp.reshape(bs, H, nb_pad, B, D)

    # per-key mask bias grouped per chunk/block: (bs, num_chunks, C, B)
    kbias = jnp.where(mp != 0.0, 0.0, NEG_MASK).astype(jnp.float32)
    kbias = kbias.reshape(bs, num_chunks, C, B)

    out_shape = jax.ShapeDtypeStruct((bs, nb_pad, B, H * D), out_dtype)
    cparams = pltpu.CompilerParams(
        dimension_semantics=("parallel", "parallel"),   # no cross-step accumulator
        vmem_limit_bytes=64 * 1024 * 1024)

    qkv_spec = pl.BlockSpec((1, H, C, B, D), lambda b, c: (b, 0, c, 0, 0))
    kbias_spec = pl.BlockSpec((1, 1, C, B), lambda b, c: (b, c, 0, 0))
    out_spec = pl.BlockSpec((1, C, B, H * D), lambda b, c: (b, c, 0, 0))

    has_global = stride_c != -1
    if not has_global:
        grid_spec = pltpu.PrefetchScalarGridSpec(
            num_scalar_prefetch=0, grid=(bs, num_chunks),
            in_specs=[qkv_spec, qkv_spec, qkv_spec, kbias_spec],
            out_specs=out_spec)
        out = pl.pallas_call(_sparse_attn_local_kernel, out_shape=out_shape,
                             grid_spec=grid_spec, compiler_params=cparams)(
            qb, kb, vb, kbias)
    else:
        # static global-key pattern (first element + last stride_c of every block)
        rem = np.arange(cur) % B
        pattern = np.logical_or(rem == 0, rem >= B - stride_c)
        gidx = np.nonzero(pattern)[0]
        G = int(gidx.shape[0])

        gk = kp[:, :, gidx, :]                           # (bs, H, G, D) bf16
        gv = vp[:, :, gidx, :]
        gbias = jnp.where(mp[:, gidx] != 0.0, 0.0, NEG_MASK).astype(jnp.float32)
        gbias = gbias.reshape(bs, 1, G)

        def _run(single_buffer):
            # globals are VMEM-resident across the whole chunk axis -> single-buffer them
            pm = pl.Buffered(buffer_count=1) if single_buffer else None
            g_spec = pl.BlockSpec((1, H, G, D), lambda b, c: (b, 0, 0, 0),
                                  pipeline_mode=pm)
            gbias_spec = pl.BlockSpec((1, 1, G), lambda b, c: (b, 0, 0),
                                      pipeline_mode=pm)
            grid_spec = pltpu.PrefetchScalarGridSpec(
                num_scalar_prefetch=0, grid=(bs, num_chunks),
                in_specs=[qkv_spec, qkv_spec, qkv_spec, g_spec, g_spec,
                          kbias_spec, gbias_spec],
                out_specs=out_spec)
            return pl.pallas_call(_sparse_attn_global_kernel, out_shape=out_shape,
                                  grid_spec=grid_spec, compiler_params=cparams)(
                qb, kb, vb, gk, gv, kbias, gbias)

        if single_buffer_globals:
            try:
                out = _run(True)
            except Exception:
                # graceful fallback if this jax build rejects Buffered(1) on pallas_call
                out = _run(False)
        else:
            out = _run(False)

    out = out.reshape(bs, cur_pad, H, D).transpose(0, 2, 1, 3)
    return out[:, :, :L, :]


def _reference_np(q, k, v, mask, block_size, stride_c):
    """Numpy port of the PyTorch forward (faithful, including global compaction)."""
    bs, H, L, D = q.shape
    nb = (L + block_size - 1) // block_size
    pad = nb * block_size - L
    cur = L + pad
    qp = np.pad(q, ((0, 0), (0, 0), (0, pad), (0, 0)))
    kp = np.pad(k, ((0, 0), (0, 0), (0, pad), (0, 0)))
    vp = np.pad(v, ((0, 0), (0, 0), (0, pad), (0, 0)))
    mp = np.pad(mask, ((0, 0), (0, pad)))

    bq = qp.reshape(bs, H, nb, block_size, D)
    bk = kp.reshape(bs, H, nb, block_size, D)
    bv = vp.reshape(bs, H, nb, block_size, D)

    s_loc = np.einsum('shbxd,shbyd->shbxy', bq, bk).reshape(bs, H, cur, block_size)
    float_mask = np.where(mp == 0.0, -10000.0, 0.0).astype(np.float32)
    blocked_mask = np.broadcast_to(
        float_mask.reshape(bs, 1, nb, 1, block_size),
        (bs, 1, nb, block_size, block_size)).reshape(bs, 1, cur, block_size)
    s_loc = s_loc + blocked_mask

    has_global = stride_c != -1
    if has_global:
        rem = np.arange(cur) % block_size
        unmasked = np.logical_or(rem == 0, rem >= block_size - stride_c)
        is_g = np.logical_and(mp != 0.0, unmasked[None, :])
        num_per = is_g.sum(axis=1)
        max_g = int(num_per.max())
        gkey = np.zeros((bs, H, max_g, D), np.float32)
        gval = np.zeros((bs, H, max_g, D), np.float32)
        for b in range(bs):
            idx = np.nonzero(is_g[b])[0]
            gkey[b, :, :len(idx), :] = kp[b][:, idx, :]
            gval[b, :, :len(idx), :] = vp[b][:, idx, :]
        s_glb = np.einsum('shnd,shzd->shnz', qp, gkey)
        for b in range(bs):
            s_glb[b, :, :, int(num_per[b]):] = -10000.0
        scores = np.concatenate([s_loc, s_glb], axis=-1)
    else:
        scores = s_loc

    scores = scores.astype(np.float32)
    m = scores.max(-1, keepdims=True)
    p = np.exp(scores - m)
    p = p / p.sum(-1, keepdims=True)

    p_loc = p[..., :block_size].reshape(bs, H, nb, block_size, block_size)
    out = np.matmul(p_loc, bv).reshape(bs, H, cur, D)
    if has_global:
        out = out + np.matmul(p[..., block_size:], gval)
    return out[:, :, :L, :]


def _run_case(seed, bs, H, L, D, block_size, stride_c, masked_positions,
              chunk_rows=256):
    kq, kk, kv = jax.random.split(jax.random.PRNGKey(seed), 3)
    # quantize inputs to bf16 once so the kernel's internal bf16 cast is lossless and the
    # f32 numpy reference sees the same values
    q = jax.random.normal(kq, (bs, H, L, D), jnp.float32).astype(jnp.bfloat16).astype(jnp.float32)
    k = jax.random.normal(kk, (bs, H, L, D), jnp.float32).astype(jnp.bfloat16).astype(jnp.float32)
    v = jax.random.normal(kv, (bs, H, L, D), jnp.float32).astype(jnp.bfloat16).astype(jnp.float32)
    mask = jnp.ones((bs, L), dtype=jnp.float32)
    for (b, pos) in masked_positions:
        mask = mask.at[b, pos].set(0.0)

    out = sparse_self_attention(q, k, v, mask, block_size=block_size,
                                stride_c=stride_c, chunk_rows=chunk_rows)
    out = jax.block_until_ready(out)

    ref = _reference_np(np.asarray(q), np.asarray(k), np.asarray(v),
                        np.asarray(mask), block_size, stride_c)
    np.testing.assert_allclose(np.asarray(out), ref, rtol=2e-2, atol=2e-2)


if __name__ == "__main__":
    D = 16
    # 1) block-local + global attention, short padded sequence (single chunk)
    _run_case(0, bs=2, H=2, L=14, D=D, block_size=8, stride_c=2,
              masked_positions=[(0, 5), (0, 6), (1, 12)])
    # 2) longer sequence with chunk_rows=128 -> multiple chunks + ragged block padding
    #    (exercises the chunked grid, resident single-buffered globals, parallel axes)
    _run_case(0, bs=2, H=2, L=200, D=D, block_size=8, stride_c=2,
              masked_positions=[(0, 7), (1, 100)], chunk_rows=128)
    # 3) local-only path (stride_c == -1)
    _run_case(0, bs=2, H=2, L=14, D=D, block_size=8, stride_c=-1,
              masked_positions=[(0, 5), (1, 12)])
    print("KERNEL_OK")
</pallas_src>

<mosaic_0001>
module attributes {stable_mosaic.version = 11 : i64} {
  func.func @_sparse_attn_global_kernel(%arg0: i32, %arg1: i32, %arg2: memref<1x2x2x8x16xbf16, #tpu.memory_space<vmem>>, %arg3: memref<1x2x2x8x16xbf16, #tpu.memory_space<vmem>>, %arg4: memref<1x2x2x8x16xbf16, #tpu.memory_space<vmem>>, %arg5: memref<1x2x6x16xbf16, #tpu.memory_space<vmem>>, %arg6: memref<1x2x6x16xbf16, #tpu.memory_space<vmem>>, %arg7: memref<1x1x2x8xf32, #tpu.memory_space<vmem>>, %arg8: memref<1x1x6xf32, #tpu.memory_space<vmem>>, %arg9: memref<1x2x8x32xf32, #tpu.memory_space<vmem>>) attributes {dimension_semantics = [#tpu.dimension_semantics<parallel>, #tpu.dimension_semantics<parallel>], iteration_bounds = array<i64: 2, 1>, scalar_prefetch = 0 : i64, scratch_operands = 0 : i64, tpu.core_type = #tpu.core_type<tc>, window_params = [{transform_indices = @transform_0, window_bounds = array<i64: 1, 2, 2, 8, 16>}, {transform_indices = @transform_1, window_bounds = array<i64: 1, 2, 2, 8, 16>}, {transform_indices = @transform_2, window_bounds = array<i64: 1, 2, 2, 8, 16>}, {pipeline_mode = #tpu.pipeline_mode<synchronous>, transform_indices = @transform_3, window_bounds = array<i64: 1, 2, 6, 16>}, {pipeline_mode = #tpu.pipeline_mode<synchronous>, transform_indices = @transform_4, window_bounds = array<i64: 1, 2, 6, 16>}, {transform_indices = @transform_5, window_bounds = array<i64: 1, 1, 2, 8>}, {pipeline_mode = #tpu.pipeline_mode<synchronous>, transform_indices = @transform_6, window_bounds = array<i64: 1, 1, 6>}, {transform_indices = @transform_7, window_bounds = array<i64: 1, 2, 8, 32>}]} {
    %c0 = arith.constant 0 : index
    %c0_0 = arith.constant 0 : index
    %c0_1 = arith.constant 0 : index
    %c0_2 = arith.constant 0 : index
    %0 = vector.load %arg7[%c0, %c0_0, %c0_1, %c0_2] : memref<1x1x2x8xf32, #tpu.memory_space<vmem>>, vector<1x1x2x8xf32>
    %1 = vector.shape_cast %0 : vector<1x1x2x8xf32> to vector<2x8xf32>
    %2 = vector.shape_cast %1 : vector<2x8xf32> to vector<2x1x8xf32>
    %c0_3 = arith.constant 0 : index
    %c0_4 = arith.constant 0 : index
    %c0_5 = arith.constant 0 : index
    %3 = vector.load %arg8[%c0_3, %c0_4, %c0_5] : memref<1x1x6xf32, #tpu.memory_space<vmem>>, vector<1x1x6xf32>
    %4 = vector.shape_cast %3 : vector<1x1x6xf32> to vector<1x6xf32>
    %c0_6 = arith.constant 0 : index
    %c0_7 = arith.constant 0 : index
    %c0_8 = arith.constant 0 : index
    %c0_9 = arith.constant 0 : index
    %c0_10 = arith.constant 0 : index
    %5 = vector.load %arg2[%c0_6, %c0_7, %c0_8, %c0_9, %c0_10] : memref<1x2x2x8x16xbf16, #tpu.memory_space<vmem>>, vector<1x1x2x8x16xbf16>
    %6 = vector.shape_cast %5 : vector<1x1x2x8x16xbf16> to vector<2x8x16xbf16>
    %c0_11 = arith.constant 0 : index
    %c0_12 = arith.constant 0 : index
    %c0_13 = arith.constant 0 : index
    %c0_14 = arith.constant 0 : index
    %c0_15 = arith.constant 0 : index
    %7 = vector.load %arg3[%c0_11, %c0_12, %c0_13, %c0_14, %c0_15] : memref<1x2x2x8x16xbf16, #tpu.memory_space<vmem>>, vector<1x1x2x8x16xbf16>
    %8 = vector.shape_cast %7 : vector<1x1x2x8x16xbf16> to vector<2x8x16xbf16>
    %c0_16 = arith.constant 0 : index
    %c0_17 = arith.constant 0 : index
    %c0_18 = arith.constant 0 : index
    %c0_19 = arith.constant 0 : index
    %c0_20 = arith.constant 0 : index
    %9 = vector.load %arg4[%c0_16, %c0_17, %c0_18, %c0_19, %c0_20] : memref<1x2x2x8x16xbf16, #tpu.memory_space<vmem>>, vector<1x1x2x8x16xbf16>
    %10 = vector.shape_cast %9 : vector<1x1x2x8x16xbf16> to vector<2x8x16xbf16>
    %c0_21 = arith.constant 0 : index
    %c0_22 = arith.constant 0 : index
    %c0_23 = arith.constant 0 : index
    %c0_24 = arith.constant 0 : index
    %11 = vector.load %arg5[%c0_21, %c0_22, %c0_23, %c0_24] : memref<1x2x6x16xbf16, #tpu.memory_space<vmem>>, vector<1x1x6x16xbf16>
    %12 = vector.shape_cast %11 : vector<1x1x6x16xbf16> to vector<6x16xbf16>
    %c0_25 = arith.constant 0 : index
    %c0_26 = arith.constant 0 : index
    %c0_27 = arith.constant 0 : index
    %c0_28 = arith.constant 0 : index
    %13 = vector.load %arg6[%c0_25, %c0_26, %c0_27, %c0_28] : memref<1x2x6x16xbf16, #tpu.memory_space<vmem>>, vector<1x1x6x16xbf16>
    %14 = vector.shape_cast %13 : vector<1x1x6x16xbf16> to vector<6x16xbf16>
    "tpu.trace_start"() <{level = 10 : i32, message = "cqd,ckd->cqk"}> : () -> ()
    %cst = arith.constant dense<0.000000e+00> : vector<2x8x8xf32>
    %15 = tpu.matmul %6, %8, %cst {dimension_numbers = #tpu.dot_dimension_numbers<[2], [2], [1], [1], [0, 0, 0, 1, 1, 1], [0], [0]>} : vector<2x8x16xbf16>, vector<2x8x16xbf16>, vector<2x8x8xf32> -> vector<2x8x8xf32>
    "tpu.trace_stop"() : () -> ()
    %16 = vector.broadcast %2 : vector<2x1x8xf32> to vector<2x8x8xf32>
    %17 = arith.addf %15, %16 : vector<2x8x8xf32>
    "tpu.trace_start"() <{level = 10 : i32, message = "cqd,gd->cqg"}> : () -> ()
    %cst_29 = arith.constant dense<0.000000e+00> : vector<2x8x6xf32>
    %18 = tpu.matmul %6, %12, %cst_29 {dimension_numbers = #tpu.dot_dimension_numbers<[2], [1], [0, 1], [0], [0, 0, 0, 1, 1, 0], [], []>} : vector<2x8x16xbf16>, vector<6x16xbf16>, vector<2x8x6xf32> -> vector<2x8x6xf32>
    "tpu.trace_stop"() : () -> ()
    %19 = vector.shape_cast %4 : vector<1x6xf32> to vector<1x1x6xf32>
    %20 = vector.broadcast %19 : vector<1x1x6xf32> to vector<2x8x6xf32>
    %21 = arith.addf %18, %20 : vector<2x8x6xf32>
    %cst_30 = arith.constant dense<0xFF800000> : vector<2x8xf32>
    %22 = vector.multi_reduction <maximumf>, %17, %cst_30 [2] : vector<2x8x8xf32> to vector<2x8xf32>
    %23 = vector.shape_cast %22 : vector<2x8xf32> to vector<2x8x1xf32>
    %cst_31 = arith.constant dense<0xFF800000> : vector<2x8xf32>
    %24 = vector.multi_reduction <maximumf>, %21, %cst_31 [2] : vector<2x8x6xf32> to vector<2x8xf32>
    %25 = vector.shape_cast %24 : vector<2x8xf32> to vector<2x8x1xf32>
    %26 = arith.maximumf %23, %25 : vector<2x8x1xf32>
    %27 = vector.broadcast %26 : vector<2x8x1xf32> to vector<2x8x8xf32>
    %28 = arith.subf %17, %27 : vector<2x8x8xf32>
    %29 = math.exp %28 : vector<2x8x8xf32>
    %30 = vector.broadcast %26 : vector<2x8x1xf32> to vector<2x8x6xf32>
    %31 = arith.subf %21, %30 : vector<2x8x6xf32>
    %32 = math.exp %31 : vector<2x8x6xf32>
    %cst_32 = arith.constant dense<0.000000e+00> : vector<2x8xf32>
    %33 = vector.multi_reduction <add>, %29, %cst_32 [2] : vector<2x8x8xf32> to vector<2x8xf32>
    %34 = vector.shape_cast %33 : vector<2x8xf32> to vector<2x8x1xf32>
    %cst_33 = arith.constant dense<0.000000e+00> : vector<2x8xf32>
    %35 = vector.multi_reduction <add>, %32, %cst_33 [2] : vector<2x8x6xf32> to vector<2x8xf32>
    %36 = vector.shape_cast %35 : vector<2x8xf32> to vector<2x8x1xf32>
    %37 = arith.addf %34, %36 : vector<2x8x1xf32>
    %38 = tpu.reciprocal %37 {approx = true} : vector<2x8x1xf32> -> vector<2x8x1xf32>
    %39 = arith.truncf %29 : vector<2x8x8xf32> to vector<2x8x8xbf16>
    "tpu.trace_start"() <{level = 10 : i32, message = "cqk,ckd->cqd"}> : () -> ()
    %cst_34 = arith.constant dense<0.000000e+00> : vector<2x8x16xf32>
    %40 = tpu.matmul %39, %10, %cst_34 {dimension_numbers = #tpu.dot_dimension_numbers<[2], [1], [1], [2], [0, 0, 0, 1, 1, 2], [0], [0]>} : vector<2x8x8xbf16>, vector<2x8x16xbf16>, vector<2x8x16xf32> -> vector<2x8x16xf32>
    "tpu.trace_stop"() : () -> ()
    %41 = arith.truncf %32 : vector<2x8x6xf32> to vector<2x8x6xbf16>
    "tpu.trace_start"() <{level = 10 : i32, message = "cqg,gd->cqd"}> : () -> ()
    %cst_35 = arith.constant dense<0.000000e+00> : vector<2x8x16xf32>
    %42 = tpu.matmul %41, %14, %cst_35 {dimension_numbers = #tpu.dot_dimension_numbers<[2], [0], [0, 1], [1], [0, 0, 0, 1, 1, 1], [], []>} : vector<2x8x6xbf16>, vector<6x16xbf16>, vector<2x8x16xf32> -> vector<2x8x16xf32>
    "tpu.trace_stop"() : () -> ()
    %43 = arith.addf %40, %42 : vector<2x8x16xf32>
    %44 = vector.broadcast %38 : vector<2x8x1xf32> to vector<2x8x16xf32>
    %45 = arith.mulf %43, %44 : vector<2x8x16xf32>
    %c0_36 = arith.constant 0 : index
    %c0_37 = arith.constant 0 : index
    %c0_38 = arith.constant 0 : index
    %c0_39 = arith.constant 0 : index
    %46 = vector.load %arg9[%c0_36, %c0_37, %c0_38, %c0_39] : memref<1x2x8x32xf32, #tpu.memory_space<vmem>>, vector<1x2x8x16xf32>
    %47 = vector.shape_cast %46 : vector<1x2x8x16xf32> to vector<2x8x16xf32>
    %48 = vector.shape_cast %45 : vector<2x8x16xf32> to vector<1x2x8x16xf32>
    tpu.vector_store %arg9[%c0_36, %c0_37, %c0_38, %c0_39], %48 {strides = array<i32>} : memref<1x2x8x32xf32, #tpu.memory_space<vmem>>, vector<1x2x8x16xf32>,
    %c0_40 = arith.constant 0 : index
    %c1 = arith.constant 1 : index
    %c0_41 = arith.constant 0 : index
    %c0_42 = arith.constant 0 : index
    %c0_43 = arith.constant 0 : index
    %49 = vector.load %arg2[%c0_40, %c1, %c0_41, %c0_42, %c0_43] : memref<1x2x2x8x16xbf16, #tpu.memory_space<vmem>>, vector<1x1x2x8x16xbf16>
    %50 = vector.shape_cast %49 : vector<1x1x2x8x16xbf16> to vector<2x8x16xbf16>
    %c0_44 = arith.constant 0 : index
    %c1_45 = arith.constant 1 : index
    %c0_46 = arith.constant 0 : index
    %c0_47 = arith.constant 0 : index
    %c0_48 = arith.constant 0 : index
    %51 = vector.load %arg3[%c0_44, %c1_45, %c0_46, %c0_47, %c0_48] : memref<1x2x2x8x16xbf16, #tpu.memory_space<vmem>>, vector<1x1x2x8x16xbf16>
    %52 = vector.shape_cast %51 : vector<1x1x2x8x16xbf16> to vector<2x8x16xbf16>
    %c0_49 = arith.constant 0 : index
    %c1_50 = arith.constant 1 : index
    %c0_51 = arith.constant 0 : index
    %c0_52 = arith.constant 0 : index
    %c0_53 = arith.constant 0 : index
    %53 = vector.load %arg4[%c0_49, %c1_50, %c0_51, %c0_52, %c0_53] : memref<1x2x2x8x16xbf16, #tpu.memory_space<vmem>>, vector<1x1x2x8x16xbf16>
    %54 = vector.shape_cast %53 : vector<1x1x2x8x16xbf16> to vector<2x8x16xbf16>
    %c0_54 = arith.constant 0 : index
    %c1_55 = arith.constant 1 : index
    %c0_56 = arith.constant 0 : index
    %c0_57 = arith.constant 0 : index
    %55 = vector.load %arg5[%c0_54, %c1_55, %c0_56, %c0_57] : memref<1x2x6x16xbf16, #tpu.memory_space<vmem>>, vector<1x1x6x16xbf16>
    %56 = vector.shape_cast %55 : vector<1x1x6x16xbf16> to vector<6x16xbf16>
    %c0_58 = arith.constant 0 : index
    %c1_59 = arith.constant 1 : index
    %c0_60 = arith.constant 0 : index
    %c0_61 = arith.constant 0 : index
    %57 = vector.load %arg6[%c0_58, %c1_59, %c0_60, %c0_61] : memref<1x2x6x16xbf16, #tpu.memory_space<vmem>>, vector<1x1x6x16xbf16>
    %58 = vector.shape_cast %57 : vector<1x1x6x16xbf16> to vector<6x16xbf16>
    "tpu.trace_start"() <{level = 10 : i32, message = "cqd,ckd->cqk"}> : () -> ()
    %cst_62 = arith.constant dense<0.000000e+00> : vector<2x8x8xf32>
    %59 = tpu.matmul %50, %52, %cst_62 {dimension_numbers = #tpu.dot_dimension_numbers<[2], [2], [1], [1], [0, 0, 0, 1, 1, 1], [0], [0]>} : vector<2x8x16xbf16>, vector<2x8x16xbf16>, vector<2x8x8xf32> -> vector<2x8x8xf32>
    "tpu.trace_stop"() : () -> ()
    %60 = vector.broadcast %2 : vector<2x1x8xf32> to vector<2x8x8xf32>
    %61 = arith.addf %59, %60 : vector<2x8x8xf32>
    "tpu.trace_start"() <{level = 10 : i32, message = "cqd,gd->cqg"}> : () -> ()
    %cst_63 = arith.constant dense<0.000000e+00> : vector<2x8x6xf32>
    %62 = tpu.matmul %50, %56, %cst_63 {dimension_numbers = #tpu.dot_dimension_numbers<[2], [1], [0, 1], [0], [0, 0, 0, 1, 1, 0], [], []>} : vector<2x8x16xbf16>, vector<6x16xbf16>, vector<2x8x6xf32> -> vector<2x8x6xf32>
    "tpu.trace_stop"() : () -> ()
    %63 = vector.shape_cast %4 : vector<1x6xf32> to vector<1x1x6xf32>
    %64 = vector.broadcast %63 : vector<1x1x6xf32> to vector<2x8x6xf32>
    %65 = arith.addf %62, %64 : vector<2x8x6xf32>
    %cst_64 = arith.constant dense<0xFF800000> : vector<2x8xf32>
    %66 = vector.multi_reduction <maximumf>, %61, %cst_64 [2] : vector<2x8x8xf32> to vector<2x8xf32>
    %67 = vector.shape_cast %66 : vector<2x8xf32> to vector<2x8x1xf32>
    %cst_65 = arith.constant dense<0xFF800000> : vector<2x8xf32>
    %68 = vector.multi_reduction <maximumf>, %65, %cst_65 [2] : vector<2x8x6xf32> to vector<2x8xf32>
    %69 = vector.shape_cast %68 : vector<2x8xf32> to vector<2x8x1xf32>
    %70 = arith.maximumf %67, %69 : vector<2x8x1xf32>
    %71 = vector.broadcast %70 : vector<2x8x1xf32> to vector<2x8x8xf32>
    %72 = arith.subf %61, %71 : vector<2x8x8xf32>
    %73 = math.exp %72 : vector<2x8x8xf32>
    %74 = vector.broadcast %70 : vector<2x8x1xf32> to vector<2x8x6xf32>
    %75 = arith.subf %65, %74 : vector<2x8x6xf32>
    %76 = math.exp %75 : vector<2x8x6xf32>
    %cst_66 = arith.constant dense<0.000000e+00> : vector<2x8xf32>
    %77 = vector.multi_reduction <add>, %73, %cst_66 [2] : vector<2x8x8xf32> to vector<2x8xf32>
    %78 = vector.shape_cast %77 : vector<2x8xf32> to vector<2x8x1xf32>
    %cst_67 = arith.constant dense<0.000000e+00> : vector<2x8xf32>
    %79 = vector.multi_reduction <add>, %76, %cst_67 [2] : vector<2x8x6xf32> to vector<2x8xf32>
    %80 = vector.shape_cast %79 : vector<2x8xf32> to vector<2x8x1xf32>
    %81 = arith.addf %78, %80 : vector<2x8x1xf32>
    %82 = tpu.reciprocal %81 {approx = true} : vector<2x8x1xf32> -> vector<2x8x1xf32>
    %83 = arith.truncf %73 : vector<2x8x8xf32> to vector<2x8x8xbf16>
    "tpu.trace_start"() <{level = 10 : i32, message = "cqk,ckd->cqd"}> : () -> ()
    %cst_68 = arith.constant dense<0.000000e+00> : vector<2x8x16xf32>
    %84 = tpu.matmul %83, %54, %cst_68 {dimension_numbers = #tpu.dot_dimension_numbers<[2], [1], [1], [2], [0, 0, 0, 1, 1, 2], [0], [0]>} : vector<2x8x8xbf16>, vector<2x8x16xbf16>, vector<2x8x16xf32> -> vector<2x8x16xf32>
    "tpu.trace_stop"() : () -> ()
    %85 = arith.truncf %76 : vector<2x8x6xf32> to vector<2x8x6xbf16>
    "tpu.trace_start"() <{level = 10 : i32, message = "cqg,gd->cqd"}> : () -> ()
    %cst_69 = arith.constant dense<0.000000e+00> : vector<2x8x16xf32>
    %86 = tpu.matmul %85, %58, %cst_69 {dimension_numbers = #tpu.dot_dimension_numbers<[2], [0], [0, 1], [1], [0, 0, 0, 1, 1, 1], [], []>} : vector<2x8x6xbf16>, vector<6x16xbf16>, vector<2x8x16xf32> -> vector<2x8x16xf32>
    "tpu.trace_stop"() : () -> ()
    %87 = arith.addf %84, %86 : vector<2x8x16xf32>
    %88 = vector.broadcast %82 : vector<2x8x1xf32> to vector<2x8x16xf32>
    %89 = arith.mulf %87, %88 : vector<2x8x16xf32>
    %c0_70 = arith.constant 0 : index
    %c0_71 = arith.constant 0 : index
    %c0_72 = arith.constant 0 : index
    %c16 = arith.constant 16 : index
    %90 = vector.load %arg9[%c0_70, %c0_71, %c0_72, %c16] : memref<1x2x8x32xf32, #tpu.memory_space<vmem>>, vector<1x2x8x16xf32>
    %91 = vector.shape_cast %90 : vector<1x2x8x16xf32> to vector<2x8x16xf32>
    %92 = vector.shape_cast %89 : vector<2x8x16xf32> to vector<1x2x8x16xf32>
    tpu.vector_store %arg9[%c0_70, %c0_71, %c0_72, %c16], %92 {strides = array<i32>} : memref<1x2x8x32xf32, #tpu.memory_space<vmem>>, vector<1x2x8x16xf32>,
    return
  }
  func.func @transform_0(%arg0: i32, %arg1: i32) -> (i32, i32, i32, i32, i32) {
    %c0_i32 = arith.constant 0 : i32
    %c0_i32_0 = arith.constant 0 : i32
    %c0_i32_1 = arith.constant 0 : i32
    %c0_i32_2 = arith.constant 0 : i32
    return %arg0, %c0_i32, %arg1, %c0_i32_0, %c0_i32_1 : i32, i32, i32, i32, i32
  }
  func.func @transform_1(%arg0: i32, %arg1: i32) -> (i32, i32, i32, i32, i32) {
    %c0_i32 = arith.constant 0 : i32
    %c0_i32_0 = arith.constant 0 : i32
    %c0_i32_1 = arith.constant 0 : i32
    %c0_i32_2 = arith.constant 0 : i32
    return %arg0, %c0_i32, %arg1, %c0_i32_0, %c0_i32_1 : i32, i32, i32, i32, i32
  }
  func.func @transform_2(%arg0: i32, %arg1: i32) -> (i32, i32, i32, i32, i32) {
    %c0_i32 = arith.constant 0 : i32
    %c0_i32_0 = arith.constant 0 : i32
    %c0_i32_1 = arith.constant 0 : i32
    %c0_i32_2 = arith.constant 0 : i32
    return %arg0, %c0_i32, %arg1, %c0_i32_0, %c0_i32_1 : i32, i32, i32, i32, i32
  }
  func.func @transform_3(%arg0: i32, %arg1: i32) -> (i32, i32, i32, i32) {
    %c0_i32 = arith.constant 0 : i32
    %c0_i32_0 = arith.constant 0 : i32
    %c0_i32_1 = arith.constant 0 : i32
    %c0_i32_2 = arith.constant 0 : i32
    return %arg0, %c0_i32, %c0_i32_0, %c0_i32_1 : i32, i32, i32, i32
  }
  func.func @transform_4(%arg0: i32, %arg1: i32) -> (i32, i32, i32, i32) {
    %c0_i32 = arith.constant 0 : i32
    %c0_i32_0 = arith.constant 0 : i32
    %c0_i32_1 = arith.constant 0 : i32
    %c0_i32_2 = arith.constant 0 : i32
    return %arg0, %c0_i32, %c0_i32_0, %c0_i32_1 : i32, i32, i32, i32
  }
  func.func @transform_5(%arg0: i32, %arg1: i32) -> (i32, i32, i32, i32) {
    %c0_i32 = arith.constant 0 : i32
    %c0_i32_0 = arith.constant 0 : i32
    %c0_i32_1 = arith.constant 0 : i32
    return %arg0, %arg1, %c0_i32, %c0_i32_0 : i32, i32, i32, i32
  }
  func.func @transform_6(%arg0: i32, %arg1: i32) -> (i32, i32, i32) {
    %c0_i32 = arith.constant 0 : i32
    %c0_i32_0 = arith.constant 0 : i32
    %c0_i32_1 = arith.constant 0 : i32
    return %arg0, %c0_i32, %c0_i32_0 : i32, i32, i32
  }
  func.func @transform_7(%arg0: i32, %arg1: i32) -> (i32, i32, i32, i32) {
    %c0_i32 = arith.constant 0 : i32
    %c0_i32_0 = arith.constant 0 : i32
    %c0_i32_1 = arith.constant 0 : i32
    return %arg0, %arg1, %c0_i32, %c0_i32_0 : i32, i32, i32, i32
  }
}

module attributes {stable_mosaic.version = 11 : i64} {
  func.func @_sparse_attn_global_kernel(%arg0: i32, %arg1: i32, %arg2: memref<1x2x2x8x16xbf16, #tpu.memory_space<vmem>>, %arg3: memref<1x2x2x8x16xbf16, #tpu.memory_space<vmem>>, %arg4: memref<1x2x2x8x16xbf16, #tpu.memory_space<vmem>>, %arg5: memref<1x2x6x16xbf16, #tpu.memory_space<vmem>>, %arg6: memref<1x2x6x16xbf16, #tpu.memory_space<vmem>>, %arg7: memref<1x1x2x8xf32, #tpu.memory_space<vmem>>, %arg8: memref<1x1x6xf32, #tpu.memory_space<vmem>>, %arg9: memref<1x2x8x32xf32, #tpu.memory_space<vmem>>) attributes {dimension_semantics = [#tpu.dimension_semantics<parallel>, #tpu.dimension_semantics<parallel>], iteration_bounds = array<i64: 2, 1>, scalar_prefetch = 0 : i64, scratch_operands = 0 : i64, tpu.core_type = #tpu.core_type<tc>, window_params = [{transform_indices = @transform_0, window_bounds = array<i64: 1, 2, 2, 8, 16>}, {transform_indices = @transform_1, window_bounds = array<i64: 1, 2, 2, 8, 16>}, {transform_indices = @transform_2, window_bounds = array<i64: 1, 2, 2, 8, 16>}, {transform_indices = @transform_3, window_bounds = array<i64: 1, 2, 6, 16>}, {transform_indices = @transform_4, window_bounds = array<i64: 1, 2, 6, 16>}, {transform_indices = @transform_5, window_bounds = array<i64: 1, 1, 2, 8>}, {transform_indices = @transform_6, window_bounds = array<i64: 1, 1, 6>}, {transform_indices = @transform_7, window_bounds = array<i64: 1, 2, 8, 32>}]} {
    %c0 = arith.constant 0 : index
    %c0_0 = arith.constant 0 : index
    %c0_1 = arith.constant 0 : index
    %c0_2 = arith.constant 0 : index
    %0 = vector.load %arg7[%c0, %c0_0, %c0_1, %c0_2] : memref<1x1x2x8xf32, #tpu.memory_space<vmem>>, vector<1x1x2x8xf32>
    %1 = vector.shape_cast %0 : vector<1x1x2x8xf32> to vector<2x8xf32>
    %2 = vector.shape_cast %1 : vector<2x8xf32> to vector<2x1x8xf32>
    %c0_3 = arith.constant 0 : index
    %c0_4 = arith.constant 0 : index
    %c0_5 = arith.constant 0 : index
    %3 = vector.load %arg8[%c0_3, %c0_4, %c0_5] : memref<1x1x6xf32, #tpu.memory_space<vmem>>, vector<1x1x6xf32>
    %4 = vector.shape_cast %3 : vector<1x1x6xf32> to vector<1x6xf32>
    %c0_6 = arith.constant 0 : index
    %c0_7 = arith.constant 0 : index
    %c0_8 = arith.constant 0 : index
    %c0_9 = arith.constant 0 : index
    %c0_10 = arith.constant 0 : index
    %5 = vector.load %arg2[%c0_6, %c0_7, %c0_8, %c0_9, %c0_10] : memref<1x2x2x8x16xbf16, #tpu.memory_space<vmem>>, vector<1x1x2x8x16xbf16>
    %6 = vector.shape_cast %5 : vector<1x1x2x8x16xbf16> to vector<2x8x16xbf16>
    %c0_11 = arith.constant 0 : index
    %c0_12 = arith.constant 0 : index
    %c0_13 = arith.constant 0 : index
    %c0_14 = arith.constant 0 : index
    %c0_15 = arith.constant 0 : index
    %7 = vector.load %arg3[%c0_11, %c0_12, %c0_13, %c0_14, %c0_15] : memref<1x2x2x8x16xbf16, #tpu.memory_space<vmem>>, vector<1x1x2x8x16xbf16>
    %8 = vector.shape_cast %7 : vector<1x1x2x8x16xbf16> to vector<2x8x16xbf16>
    %c0_16 = arith.constant 0 : index
    %c0_17 = arith.constant 0 : index
    %c0_18 = arith.constant 0 : index
    %c0_19 = arith.constant 0 : index
    %c0_20 = arith.constant 0 : index
    %9 = vector.load %arg4[%c0_16, %c0_17, %c0_18, %c0_19, %c0_20] : memref<1x2x2x8x16xbf16, #tpu.memory_space<vmem>>, vector<1x1x2x8x16xbf16>
    %10 = vector.shape_cast %9 : vector<1x1x2x8x16xbf16> to vector<2x8x16xbf16>
    %c0_21 = arith.constant 0 : index
    %c0_22 = arith.constant 0 : index
    %c0_23 = arith.constant 0 : index
    %c0_24 = arith.constant 0 : index
    %11 = vector.load %arg5[%c0_21, %c0_22, %c0_23, %c0_24] : memref<1x2x6x16xbf16, #tpu.memory_space<vmem>>, vector<1x1x6x16xbf16>
    %12 = vector.shape_cast %11 : vector<1x1x6x16xbf16> to vector<6x16xbf16>
    %c0_25 = arith.constant 0 : index
    %c0_26 = arith.constant 0 : index
    %c0_27 = arith.constant 0 : index
    %c0_28 = arith.constant 0 : index
    %13 = vector.load %arg6[%c0_25, %c0_26, %c0_27, %c0_28] : memref<1x2x6x16xbf16, #tpu.memory_space<vmem>>, vector<1x1x6x16xbf16>
    %14 = vector.shape_cast %13 : vector<1x1x6x16xbf16> to vector<6x16xbf16>
    "tpu.trace_start"() <{level = 10 : i32, message = "cqd,ckd->cqk"}> : () -> ()
    %cst = arith.constant dense<0.000000e+00> : vector<2x8x8xf32>
    %15 = tpu.matmul %6, %8, %cst {dimension_numbers = #tpu.dot_dimension_numbers<[2], [2], [1], [1], [0, 0, 0, 1, 1, 1], [0], [0]>} : vector<2x8x16xbf16>, vector<2x8x16xbf16>, vector<2x8x8xf32> -> vector<2x8x8xf32>
    "tpu.trace_stop"() : () -> ()
    %16 = vector.broadcast %2 : vector<2x1x8xf32> to vector<2x8x8xf32>
    %17 = arith.addf %15, %16 : vector<2x8x8xf32>
    "tpu.trace_start"() <{level = 10 : i32, message = "cqd,gd->cqg"}> : () -> ()
    %cst_29 = arith.constant dense<0.000000e+00> : vector<2x8x6xf32>
    %18 = tpu.matmul %6, %12, %cst_29 {dimension_numbers = #tpu.dot_dimension_numbers<[2], [1], [0, 1], [0], [0, 0, 0, 1, 1, 0], [], []>} : vector<2x8x16xbf16>, vector<6x16xbf16>, vector<2x8x6xf32> -> vector<2x8x6xf32>
    "tpu.trace_stop"() : () -> ()
    %19 = vector.shape_cast %4 : vector<1x6xf32> to vector<1x1x6xf32>
    %20 = vector.broadcast %19 : vector<1x1x6xf32> to vector<2x8x6xf32>
    %21 = arith.addf %18, %20 : vector<2x8x6xf32>
    %cst_30 = arith.constant dense<0xFF800000> : vector<2x8xf32>
    %22 = vector.multi_reduction <maximumf>, %17, %cst_30 [2] : vector<2x8x8xf32> to vector<2x8xf32>
    %23 = vector.shape_cast %22 : vector<2x8xf32> to vector<2x8x1xf32>
    %cst_31 = arith.constant dense<0xFF800000> : vector<2x8xf32>
    %24 = vector.multi_reduction <maximumf>, %21, %cst_31 [2] : vector<2x8x6xf32> to vector<2x8xf32>
    %25 = vector.shape_cast %24 : vector<2x8xf32> to vector<2x8x1xf32>
    %26 = arith.maximumf %23, %25 : vector<2x8x1xf32>
    %27 = vector.broadcast %26 : vector<2x8x1xf32> to vector<2x8x8xf32>
    %28 = arith.subf %17, %27 : vector<2x8x8xf32>
    %29 = math.exp %28 : vector<2x8x8xf32>
    %30 = vector.broadcast %26 : vector<2x8x1xf32> to vector<2x8x6xf32>
    %31 = arith.subf %21, %30 : vector<2x8x6xf32>
    %32 = math.exp %31 : vector<2x8x6xf32>
    %cst_32 = arith.constant dense<0.000000e+00> : vector<2x8xf32>
    %33 = vector.multi_reduction <add>, %29, %cst_32 [2] : vector<2x8x8xf32> to vector<2x8xf32>
    %34 = vector.shape_cast %33 : vector<2x8xf32> to vector<2x8x1xf32>
    %cst_33 = arith.constant dense<0.000000e+00> : vector<2x8xf32>
    %35 = vector.multi_reduction <add>, %32, %cst_33 [2] : vector<2x8x6xf32> to vector<2x8xf32>
    %36 = vector.shape_cast %35 : vector<2x8xf32> to vector<2x8x1xf32>
    %37 = arith.addf %34, %36 : vector<2x8x1xf32>
    %38 = tpu.reciprocal %37 {approx = true} : vector<2x8x1xf32> -> vector<2x8x1xf32>
    %39 = arith.truncf %29 : vector<2x8x8xf32> to vector<2x8x8xbf16>
    "tpu.trace_start"() <{level = 10 : i32, message = "cqk,ckd->cqd"}> : () -> ()
    %cst_34 = arith.constant dense<0.000000e+00> : vector<2x8x16xf32>
    %40 = tpu.matmul %39, %10, %cst_34 {dimension_numbers = #tpu.dot_dimension_numbers<[2], [1], [1], [2], [0, 0, 0, 1, 1, 2], [0], [0]>} : vector<2x8x8xbf16>, vector<2x8x16xbf16>, vector<2x8x16xf32> -> vector<2x8x16xf32>
    "tpu.trace_stop"() : () -> ()
    %41 = arith.truncf %32 : vector<2x8x6xf32> to vector<2x8x6xbf16>
    "tpu.trace_start"() <{level = 10 : i32, message = "cqg,gd->cqd"}> : () -> ()
    %cst_35 = arith.constant dense<0.000000e+00> : vector<2x8x16xf32>
    %42 = tpu.matmul %41, %14, %cst_35 {dimension_numbers = #tpu.dot_dimension_numbers<[2], [0], [0, 1], [1], [0, 0, 0, 1, 1, 1], [], []>} : vector<2x8x6xbf16>, vector<6x16xbf16>, vector<2x8x16xf32> -> vector<2x8x16xf32>
    "tpu.trace_stop"() : () -> ()
    %43 = arith.addf %40, %42 : vector<2x8x16xf32>
    %44 = vector.broadcast %38 : vector<2x8x1xf32> to vector<2x8x16xf32>
    %45 = arith.mulf %43, %44 : vector<2x8x16xf32>
    %c0_36 = arith.constant 0 : index
    %c0_37 = arith.constant 0 : index
    %c0_38 = arith.constant 0 : index
    %c0_39 = arith.constant 0 : index
    %46 = vector.load %arg9[%c0_36, %c0_37, %c0_38, %c0_39] : memref<1x2x8x32xf32, #tpu.memory_space<vmem>>, vector<1x2x8x16xf32>
    %47 = vector.shape_cast %46 : vector<1x2x8x16xf32> to vector<2x8x16xf32>
    %48 = vector.shape_cast %45 : vector<2x8x16xf32> to vector<1x2x8x16xf32>
    tpu.vector_store %arg9[%c0_36, %c0_37, %c0_38, %c0_39], %48 {strides = array<i32>} : memref<1x2x8x32xf32, #tpu.memory_space<vmem>>, vector<1x2x8x16xf32>,
    %c0_40 = arith.constant 0 : index
    %c1 = arith.constant 1 : index
    %c0_41 = arith.constant 0 : index
    %c0_42 = arith.constant 0 : index
    %c0_43 = arith.constant 0 : index
    %49 = vector.load %arg2[%c0_40, %c1, %c0_41, %c0_42, %c0_43] : memref<1x2x2x8x16xbf16, #tpu.memory_space<vmem>>, vector<1x1x2x8x16xbf16>
    %50 = vector.shape_cast %49 : vector<1x1x2x8x16xbf16> to vector<2x8x16xbf16>
    %c0_44 = arith.constant 0 : index
    %c1_45 = arith.constant 1 : index
    %c0_46 = arith.constant 0 : index
    %c0_47 = arith.constant 0 : index
    %c0_48 = arith.constant 0 : index
    %51 = vector.load %arg3[%c0_44, %c1_45, %c0_46, %c0_47, %c0_48] : memref<1x2x2x8x16xbf16, #tpu.memory_space<vmem>>, vector<1x1x2x8x16xbf16>
    %52 = vector.shape_cast %51 : vector<1x1x2x8x16xbf16> to vector<2x8x16xbf16>
    %c0_49 = arith.constant 0 : index
    %c1_50 = arith.constant 1 : index
    %c0_51 = arith.constant 0 : index
    %c0_52 = arith.constant 0 : index
    %c0_53 = arith.constant 0 : index
    %53 = vector.load %arg4[%c0_49, %c1_50, %c0_51, %c0_52, %c0_53] : memref<1x2x2x8x16xbf16, #tpu.memory_space<vmem>>, vector<1x1x2x8x16xbf16>
    %54 = vector.shape_cast %53 : vector<1x1x2x8x16xbf16> to vector<2x8x16xbf16>
    %c0_54 = arith.constant 0 : index
    %c1_55 = arith.constant 1 : index
    %c0_56 = arith.constant 0 : index
    %c0_57 = arith.constant 0 : index
    %55 = vector.load %arg5[%c0_54, %c1_55, %c0_56, %c0_57] : memref<1x2x6x16xbf16, #tpu.memory_space<vmem>>, vector<1x1x6x16xbf16>
    %56 = vector.shape_cast %55 : vector<1x1x6x16xbf16> to vector<6x16xbf16>
    %c0_58 = arith.constant 0 : index
    %c1_59 = arith.constant 1 : index
    %c0_60 = arith.constant 0 : index
    %c0_61 = arith.constant 0 : index
    %57 = vector.load %arg6[%c0_58, %c1_59, %c0_60, %c0_61] : memref<1x2x6x16xbf16, #tpu.memory_space<vmem>>, vector<1x1x6x16xbf16>
    %58 = vector.shape_cast %57 : vector<1x1x6x16xbf16> to vector<6x16xbf16>
    "tpu.trace_start"() <{level = 10 : i32, message = "cqd,ckd->cqk"}> : () -> ()
    %cst_62 = arith.constant dense<0.000000e+00> : vector<2x8x8xf32>
    %59 = tpu.matmul %50, %52, %cst_62 {dimension_numbers = #tpu.dot_dimension_numbers<[2], [2], [1], [1], [0, 0, 0, 1, 1, 1], [0], [0]>} : vector<2x8x16xbf16>, vector<2x8x16xbf16>, vector<2x8x8xf32> -> vector<2x8x8xf32>
    "tpu.trace_stop"() : () -> ()
    %60 = vector.broadcast %2 : vector<2x1x8xf32> to vector<2x8x8xf32>
    %61 = arith.addf %59, %60 : vector<2x8x8xf32>
    "tpu.trace_start"() <{level = 10 : i32, message = "cqd,gd->cqg"}> : () -> ()
    %cst_63 = arith.constant dense<0.000000e+00> : vector<2x8x6xf32>
    %62 = tpu.matmul %50, %56, %cst_63 {dimension_numbers = #tpu.dot_dimension_numbers<[2], [1], [0, 1], [0], [0, 0, 0, 1, 1, 0], [], []>} : vector<2x8x16xbf16>, vector<6x16xbf16>, vector<2x8x6xf32> -> vector<2x8x6xf32>
    "tpu.trace_stop"() : () -> ()
    %63 = vector.shape_cast %4 : vector<1x6xf32> to vector<1x1x6xf32>
    %64 = vector.broadcast %63 : vector<1x1x6xf32> to vector<2x8x6xf32>
    %65 = arith.addf %62, %64 : vector<2x8x6xf32>
    %cst_64 = arith.constant dense<0xFF800000> : vector<2x8xf32>
    %66 = vector.multi_reduction <maximumf>, %61, %cst_64 [2] : vector<2x8x8xf32> to vector<2x8xf32>
    %67 = vector.shape_cast %66 : vector<2x8xf32> to vector<2x8x1xf32>
    %cst_65 = arith.constant dense<0xFF800000> : vector<2x8xf32>
    %68 = vector.multi_reduction <maximumf>, %65, %cst_65 [2] : vector<2x8x6xf32> to vector<2x8xf32>
    %69 = vector.shape_cast %68 : vector<2x8xf32> to vector<2x8x1xf32>
    %70 = arith.maximumf %67, %69 : vector<2x8x1xf32>
    %71 = vector.broadcast %70 : vector<2x8x1xf32> to vector<2x8x8xf32>
    %72 = arith.subf %61, %71 : vector<2x8x8xf32>
    %73 = math.exp %72 : vector<2x8x8xf32>
    %74 = vector.broadcast %70 : vector<2x8x1xf32> to vector<2x8x6xf32>
    %75 = arith.subf %65, %74 : vector<2x8x6xf32>
    %76 = math.exp %75 : vector<2x8x6xf32>
    %cst_66 = arith.constant dense<0.000000e+00> : vector<2x8xf32>
    %77 = vector.multi_reduction <add>, %73, %cst_66 [2] : vector<2x8x8xf32> to vector<2x8xf32>
    %78 = vector.shape_cast %77 : vector<2x8xf32> to vector<2x8x1xf32>
    %cst_67 = arith.constant dense<0.000000e+00> : vector<2x8xf32>
    %79 = vector.multi_reduction <add>, %76, %cst_67 [2] : vector<2x8x6xf32> to vector<2x8xf32>
    %80 = vector.shape_cast %79 : vector<2x8xf32> to vector<2x8x1xf32>
    %81 = arith.addf %78, %80 : vector<2x8x1xf32>
    %82 = tpu.reciprocal %81 {approx = true} : vector<2x8x1xf32> -> vector<2x8x1xf32>
    %83 = arith.truncf %73 : vector<2x8x8xf32> to vector<2x8x8xbf16>
    "tpu.trace_start"() <{level = 10 : i32, message = "cqk,ckd->cqd"}> : () -> ()
    %cst_68 = arith.constant dense<0.000000e+00> : vector<2x8x16xf32>
    %84 = tpu.matmul %83, %54, %cst_68 {dimension_numbers = #tpu.dot_dimension_numbers<[2], [1], [1], [2], [0, 0, 0, 1, 1, 2], [0], [0]>} : vector<2x8x8xbf16>, vector<2x8x16xbf16>, vector<2x8x16xf32> -> vector<2x8x16xf32>
    "tpu.trace_stop"() : () -> ()
    %85 = arith.truncf %76 : vector<2x8x6xf32> to vector<2x8x6xbf16>
    "tpu.trace_start"() <{level = 10 : i32, message = "cqg,gd->cqd"}> : () -> ()
    %cst_69 = arith.constant dense<0.000000e+00> : vector<2x8x16xf32>
    %86 = tpu.matmul %85, %58, %cst_69 {dimension_numbers = #tpu.dot_dimension_numbers<[2], [0], [0, 1], [1], [0, 0, 0, 1, 1, 1], [], []>} : vector<2x8x6xbf16>, vector<6x16xbf16>, vector<2x8x16xf32> -> vector<2x8x16xf32>
    "tpu.trace_stop"() : () -> ()
    %87 = arith.addf %84, %86 : vector<2x8x16xf32>
    %88 = vector.broadcast %82 : vector<2x8x1xf32> to vector<2x8x16xf32>
    %89 = arith.mulf %87, %88 : vector<2x8x16xf32>
    %c0_70 = arith.constant 0 : index
    %c0_71 = arith.constant 0 : index
    %c0_72 = arith.constant 0 : index
    %c16 = arith.constant 16 : index
    %90 = vector.load %arg9[%c0_70, %c0_71, %c0_72, %c16] : memref<1x2x8x32xf32, #tpu.memory_space<vmem>>, vector<1x2x8x16xf32>
    %91 = vector.shape_cast %90 : vector<1x2x8x16xf32> to vector<2x8x16xf32>
    %92 = vector.shape_cast %89 : vector<2x8x16xf32> to vector<1x2x8x16xf32>
    tpu.vector_store %arg9[%c0_70, %c0_71, %c0_72, %c16], %92 {strides = array<i32>} : memref<1x2x8x32xf32, #tpu.memory_space<vmem>>, vector<1x2x8x16xf32>,
    return
  }
  func.func @transform_0(%arg0: i32, %arg1: i32) -> (i32, i32, i32, i32, i32) {
    %c0_i32 = arith.constant 0 : i32
    %c0_i32_0 = arith.constant 0 : i32
    %c0_i32_1 = arith.constant 0 : i32
    %c0_i32_2 = arith.constant 0 : i32
    return %arg0, %c0_i32, %arg1, %c0_i32_0, %c0_i32_1 : i32, i32, i32, i32, i32
  }
  func.func @transform_1(%arg0: i32, %arg1: i32) -> (i32, i32, i32, i32, i32) {
    %c0_i32 = arith.constant 0 : i32
    %c0_i32_0 = arith.constant 0 : i32
    %c0_i32_1 = arith.constant 0 : i32
    %c0_i32_2 = arith.constant 0 : i32
    return %arg0, %c0_i32, %arg1, %c0_i32_0, %c0_i32_1 : i32, i32, i32, i32, i32
  }
  func.func @transform_2(%arg0: i32, %arg1: i32) -> (i32, i32, i32, i32, i32) {
    %c0_i32 = arith.constant 0 : i32
    %c0_i32_0 = arith.constant 0 : i32
    %c0_i32_1 = arith.constant 0 : i32
    %c0_i32_2 = arith.constant 0 : i32
    return %arg0, %c0_i32, %arg1, %c0_i32_0, %c0_i32_1 : i32, i32, i32, i32, i32
  }
  func.func @transform_3(%arg0: i32, %arg1: i32) -> (i32, i32, i32, i32) {
    %c0_i32 = arith.constant 0 : i32
    %c0_i32_0 = arith.constant 0 : i32
    %c0_i32_1 = arith.constant 0 : i32
    %c0_i32_2 = arith.constant 0 : i32
    return %arg0, %c0_i32, %c0_i32_0, %c0_i32_1 : i32, i32, i32, i32
  }
  func.func @transform_4(%arg0: i32, %arg1: i32) -> (i32, i32, i32, i32) {
    %c0_i32 = arith.constant 0 : i32
    %c0_i32_0 = arith.constant 0 : i32
    %c0_i32_1 = arith.constant 0 : i32
    %c0_i32_2 = arith.constant 0 : i32
    return %arg0, %c0_i32, %c0_i32_0, %c0_i32_1 : i32, i32, i32, i32
  }
  func.func @transform_5(%arg0: i32, %arg1: i32) -> (i32, i32, i32, i32) {
    %c0_i32 = arith.constant 0 : i32
    %c0_i32_0 = arith.constant 0 : i32
    %c0_i32_1 = arith.constant 0 : i32
    return %arg0, %arg1, %c0_i32, %c0_i32_0 : i32, i32, i32, i32
  }
  func.func @transform_6(%arg0: i32, %arg1: i32) -> (i32, i32, i32) {
    %c0_i32 = arith.constant 0 : i32
    %c0_i32_0 = arith.constant 0 : i32
    %c0_i32_1 = arith.constant 0 : i32
    return %arg0, %c0_i32, %c0_i32_0 : i32, i32, i32
  }
  func.func @transform_7(%arg0: i32, %arg1: i32) -> (i32, i32, i32, i32) {
    %c0_i32 = arith.constant 0 : i32
    %c0_i32_0 = arith.constant 0 : i32
    %c0_i32_1 = arith.constant 0 : i32
    return %arg0, %arg1, %c0_i32, %c0_i32_0 : i32, i32, i32, i32
  }
}

</mosaic_0001>

<llo_original>
// kernel: tpu_custom_call.1
$region0: #{tpu_custom_call.1}
  #allocation0 [shape = 'u32[]', space=smem, size = 0x4, offset = 0x4, fixed_abs, tag = 'smem constant byte address 0x4 - core index']
  #allocation1 [shape = 'u32[144,128]{1,0:T(1,128)}', space=vmem, size = 0x12000, scoped, tag = 'internal scratch']
  %s0 = inlined_call_operand.hbm [shape: bf16[2,2,2,8,16], index: 0, kind: input, shape index: {}]
  %s1 = inlined_call_operand.hbm [shape: bf16[2,2,2,8,16], index: 1, kind: input, shape index: {}]
  %s2 = inlined_call_operand.hbm [shape: bf16[2,2,2,8,16], index: 2, kind: input, shape index: {}]
  %s3 = inlined_call_operand.hbm [shape: bf16[2,2,6,16], index: 3, kind: input, shape index: {}]
  %s4 = inlined_call_operand.hbm [shape: bf16[2,2,6,16], index: 4, kind: input, shape index: {}]
  %s5 = inlined_call_operand.hbm [shape: f32[2,1,2,8], index: 5, kind: input, shape index: {}]
  %s6 = inlined_call_operand.hbm [shape: f32[2,1,6], index: 6, kind: input, shape index: {}]
  %s7 = inlined_call_operand.hbm [shape: f32[2,2,8,32], index: 7, kind: output, shape index: {}]
  %s8 = sld [smem:[#allocation0]]
  $region89: #{tpu_custom_call.1} parent=0
    _
  %s10 = ssub.s32 1, %s8
  %s11 = scalar_select 0, %s10, %s8
  $region1: #{tpu_custom_call.1} parent=0
    #allocation2 [shape = 'u8[16384]{0}', space=vmem, size = 0x4000, scoped, tag = 'input window, operand 0']
    #allocation3 [shape = 's32[2]{0}', space=sflag, size = 0x8, scoped, tag = 'scoped memory for tpu_custom_call.1']
    #allocation4 [shape = 's32[2]{0}', space=sflag, size = 0x8, scoped, tag = 'scoped memory for tpu_custom_call.1']
    #allocation5 [shape = 'u8[16384]{0}', space=vmem, size = 0x4000, scoped, tag = 'input window, operand 1']
    #allocation6 [shape = 's32[2]{0}', space=sflag, size = 0x8, scoped, tag = 'scoped memory for tpu_custom_call.1']
    #allocation7 [shape = 'u8[16384]{0}', space=vmem, size = 0x4000, scoped, tag = 'input window, operand 2']
    #allocation8 [shape = 'u8[4096]{0}', space=vmem, size = 0x1000, scoped, tag = 'input window, operand 3, single buffered']
    #allocation9 [shape = 's32[1]{0}', space=sflag, size = 0x4, scoped, tag = 'scoped memory for tpu_custom_call.1']
    #allocation10 [shape = 'u8[4096]{0}', space=vmem, size = 0x1000, scoped, tag = 'input window, operand 4, single buffered']
    #allocation11 [shape = 'u8[2048]{0}', space=vmem, size = 0x800, scoped, tag = 'input window, operand 5']
    #allocation12 [shape = 's32[2]{0}', space=sflag, size = 0x8, scoped, tag = 'scoped memory for tpu_custom_call.1']
    #allocation13 [shape = 'u8[512]{0}', space=vmem, size = 0x400, scoped, tag = 'input window, operand 6, single buffered']
    #allocation14 [shape = 'u8[16384]{0}', space=vmem, size = 0x4000, scoped, tag = 'output window, operand 0']
    %12 = vsyncpa [#allocation3], 0
    %s13 = scalar_lea.sflag [#allocation3], 1
    %14 = vsyncpa %s13, 0
    %15 = vsyncpa [#allocation6], 0
    %s16 = scalar_lea.sflag [#allocation6], 1
    %17 = vsyncpa %s16, 0
    %18 = vsyncpa [#allocation9], 0
    %19 = vsyncpa [#allocation12], 0
    %s20 = scalar_lea.sflag [#allocation12], 1
    %21 = vsyncpa %s20, 0
    %22 = vsyncpa [#allocation4], 0
    %s23 = scalar_lea.sflag [#allocation4], 1
    %24 = vsyncpa %s23, 0
    loop: start=0, step=1, limit=4
    $region2: #{tpu_custom_call.1} parent=1 // loop_pre_header
      _
    $region3: #{tpu_custom_call.1} parent=1 // loop_header
      %s26 = sphi 0, %s30
      %p27 = scmp.ge.s32.totalorder %s26, 4
      %s33 = sphi 0, %s45
      %s34 = sphi 0, %s41
      %s35 = sphi 0, %s33
      %s36 = sphi 0, %s34
      %s37 = sphi 0, %s35
      %s38 = sphi 0, %s36
      %s50 = sphi 0, %s52
      %s53 = sphi 0, %s50
      %s54 = sphi 0, %s53
      %s70 = sphi 0, %s54
      %s78 = sphi 0, %s80
      %s81 = sphi 0, %s78
      %s82 = sphi 0, %s81
      %s98 = sphi 0, %s82
      %s106 = sphi 0, %s108
      %s109 = sphi 0, %s106
      %s110 = sphi 0, %s109
      %s126 = sphi 0, %s110
      %s132 = sphi 0, %s134
      %s135 = sphi 0, %s132
      %s136 = sphi 0, %s135
      %s152 = sphi 0, %s136
      %s158 = sphi 0, %s160
      %s161 = sphi 0, %s158
      %s162 = sphi 0, %s161
      %s178 = sphi 0, %s162
      %s186 = sphi 0, %s188
      %s189 = sphi 0, %s186
      %s190 = sphi 0, %s189
      %s206 = sphi 0, %s190
      %s212 = sphi 0, %s214
      %s215 = sphi 0, %s212
      %s216 = sphi 0, %s215
      %s232 = sphi 0, %s216
      %s240 = sphi 0, %s242
      %s243 = sphi 0, %s240
      %s244 = sphi 0, %s243
      %s260 = sphi 0, %s244
    $region4: #{tpu_custom_call.1} parent=1 // loop_header_branch
      %29 = sbr.rel (%p27) target = $region8
    $region5: #{tpu_custom_call.1} parent=1 // loop_body
      %s31 = ssub.s32 %s26, 1
      %s32 = ssub.s32 %s26, 2
      %s39 = sadd.s32 1, %s34
      %p40 = scmp.ge.s32.totalorder %s39, 1
      %s41 = scalar_select %p40, 0, %s39
      %s42 = sadd.s32 1, %s33
      %s43 = scalar_select %p40, %s42, %s33
      %p44 = scmp.ge.s32.totalorder %s43, 2
      %s45 = scalar_select %p44, 0, %s43
      %s46 = ssub.s32 %s33, %s45
      %s47 = ssub.s32 %s34, %s41
      %s48 = sor.u32 %s46, %s47
      %p49 = scmp.eq.s32.totalorder %s48, 0
      %s51 = sadd.s32 %s50, 1
      %s52 = scalar_select %p49, %s50, %s51
      %p55 = pneg %p49
      %p56 = scmp.eq.s32.totalorder %s26, 1
      %p57 = por %p55, %p56
      %p58 = scmp.ne.s32.totalorder %s50, %s53
      %p59 = scmp.eq.s32.totalorder %s26, 0
      %p60 = por %p58, %p59
      %p61 = scmp.ne.s32.totalorder %s50, %s53
      %p62 = scmp.eq.s32.totalorder %s31, 1
      %p63 = por %p61, %p62
      %p64 = scmp.ne.s32.totalorder %s53, %s54
      %p65 = scmp.eq.s32.totalorder %s31, 0
      %p66 = por %p64, %p65
      %p67 = scmp.ne.s32.totalorder %s53, %s54
      %p68 = scmp.eq.s32.totalorder %s32, 1
      %p69 = por %p67, %p68
      %p71 = scmp.ne.s32.totalorder %s54, %s70
      %p72 = scmp.eq.s32.totalorder %s32, 0
      %p73 = por %p71, %p72
      %s74 = ssub.s32 %s33, %s45
      %s75 = ssub.s32 %s34, %s41
      %s76 = sor.u32 %s74, %s75
      %p77 = scmp.eq.s32.totalorder %s76, 0
      %s79 = sadd.s32 %s78, 1
      %s80 = scalar_select %p77, %s78, %s79
      %p83 = pneg %p77
      %p84 = scmp.eq.s32.totalorder %s26, 1
      %p85 = por %p83, %p84
      %p86 = scmp.ne.s32.totalorder %s78, %s81
      %p87 = scmp.eq.s32.totalorder %s26, 0
      %p88 = por %p86, %p87
      %p89 = scmp.ne.s32.totalorder %s78, %s81
      %p90 = scmp.eq.s32.totalorder %s31, 1
      %p91 = por %p89, %p90
      %p92 = scmp.ne.s32.totalorder %s81, %s82
      %p93 = scmp.eq.s32.totalorder %s31, 0
      %p94 = por %p92, %p93
      %p95 = scmp.ne.s32.totalorder %s81, %s82
      %p96 = scmp.eq.s32.totalorder %s32, 1
      %p97 = por %p95, %p96
      %p99 = scmp.ne.s32.totalorder %s82, %s98
      %p100 = scmp.eq.s32.totalorder %s32, 0
      %p101 = por %p99, %p100
      %s102 = ssub.s32 %s33, %s45
      %s103 = ssub.s32 %s34, %s41
      %s104 = sor.u32 %s102, %s103
      %p105 = scmp.eq.s32.totalorder %s104, 0
      %s107 = sadd.s32 %s106, 1
      %s108 = scalar_select %p105, %s106, %s107
      %p111 = pneg %p105
      %p112 = scmp.eq.s32.totalorder %s26, 1
      %p113 = por %p111, %p112
      %p114 = scmp.ne.s32.totalorder %s106, %s109
      %p115 = scmp.eq.s32.totalorder %s26, 0
      %p116 = por %p114, %p115
      %p117 = scmp.ne.s32.totalorder %s106, %s109
      %p118 = scmp.eq.s32.totalorder %s31, 1
      %p119 = por %p117, %p118
      %p120 = scmp.ne.s32.totalorder %s109, %s110
      %p121 = scmp.eq.s32.totalorder %s31, 0
      %p122 = por %p120, %p121
      %p123 = scmp.ne.s32.totalorder %s109, %s110
      %p124 = scmp.eq.s32.totalorder %s32, 1
      %p125 = por %p123, %p124
      %p127 = scmp.ne.s32.totalorder %s110, %s126
      %p128 = scmp.eq.s32.totalorder %s32, 0
      %p129 = por %p127, %p128
      %s130 = ssub.s32 %s33, %s45
      %p131 = scmp.eq.s32.totalorder %s130, 0
      %s133 = sadd.s32 %s132, 1
      %s134 = scalar_select %p131, %s132, %s133
      %p137 = pneg %p131
      %p138 = scmp.eq.s32.totalorder %s26, 1
      %p139 = por %p137, %p138
      %p140 = scmp.ne.s32.totalorder %s132, %s135
      %p141 = scmp.eq.s32.totalorder %s26, 0
      %p142 = por %p140, %p141
      %p143 = scmp.ne.s32.totalorder %s132, %s135
      %p144 = scmp.eq.s32.totalorder %s31, 1
      %p145 = por %p143, %p144
      %p146 = scmp.ne.s32.totalorder %s135, %s136
      %p147 = scmp.eq.s32.totalorder %s31, 0
      %p148 = por %p146, %p147
      %p149 = scmp.ne.s32.totalorder %s135, %s136
      %p150 = scmp.eq.s32.totalorder %s32, 1
      %p151 = por %p149, %p150
      %p153 = scmp.ne.s32.totalorder %s136, %s152
      %p154 = scmp.eq.s32.totalorder %s32, 0
      %p155 = por %p153, %p154
      %s156 = ssub.s32 %s33, %s45
      %p157 = scmp.eq.s32.totalorder %s156, 0
      %s159 = sadd.s32 %s158, 1
      %s160 = scalar_select %p157, %s158, %s159
      %p163 = pneg %p157
      %p164 = scmp.eq.s32.totalorder %s26, 1
      %p165 = por %p163, %p164
      %p166 = scmp.ne.s32.totalorder %s158, %s161
      %p167 = scmp.eq.s32.totalorder %s26, 0
      %p168 = por %p166, %p167
      %p169 = scmp.ne.s32.totalorder %s158, %s161
      %p170 = scmp.eq.s32.totalorder %s31, 1
      %p171 = por %p169, %p170
      %p172 = scmp.ne.s32.totalorder %s161, %s162
      %p173 = scmp.eq.s32.totalorder %s31, 0
      %p174 = por %p172, %p173
      %p175 = scmp.ne.s32.totalorder %s161, %s162
      %p176 = scmp.eq.s32.totalorder %s32, 1
      %p177 = por %p175, %p176
      %p179 = scmp.ne.s32.totalorder %s162, %s178
      %p180 = scmp.eq.s32.totalorder %s32, 0
      %p181 = por %p179, %p180
      %s182 = ssub.s32 %s33, %s45
      %s183 = ssub.s32 %s34, %s41
      %s184 = sor.u32 %s182, %s183
      %p185 = scmp.eq.s32.totalorder %s184, 0
      %s187 = sadd.s32 %s186, 1
      %s188 = scalar_select %p185, %s186, %s187
      %p191 = pneg %p185
      %p192 = scmp.eq.s32.totalorder %s26, 1
      %p193 = por %p191, %p192
      %p194 = scmp.ne.s32.totalorder %s186, %s189
      %p195 = scmp.eq.s32.totalorder %s26, 0
      %p196 = por %p194, %p195
      %p197 = scmp.ne.s32.totalorder %s186, %s189
      %p198 = scmp.eq.s32.totalorder %s31, 1
      %p199 = por %p197, %p198
      %p200 = scmp.ne.s32.totalorder %s189, %s190
      %p201 = scmp.eq.s32.totalorder %s31, 0
      %p202 = por %p200, %p201
      %p203 = scmp.ne.s32.totalorder %s189, %s190
      %p204 = scmp.eq.s32.totalorder %s32, 1
      %p205 = por %p203, %p204
      %p207 = scmp.ne.s32.totalorder %s190, %s206
      %p208 = scmp.eq.s32.totalorder %s32, 0
      %p209 = por %p207, %p208
      %s210 = ssub.s32 %s33, %s45
      %p211 = scmp.eq.s32.totalorder %s210, 0
      %s213 = sadd.s32 %s212, 1
      %s214 = scalar_select %p211, %s212, %s213
      %p217 = pneg %p211
      %p218 = scmp.eq.s32.totalorder %s26, 1
      %p219 = por %p217, %p218
      %p220 = scmp.ne.s32.totalorder %s212, %s215
      %p221 = scmp.eq.s32.totalorder %s26, 0
      %p222 = por %p220, %p221
      %p223 = scmp.ne.s32.totalorder %s212, %s215
      %p224 = scmp.eq.s32.totalorder %s31, 1
      %p225 = por %p223, %p224
      %p226 = scmp.ne.s32.totalorder %s215, %s216
      %p227 = scmp.eq.s32.totalorder %s31, 0
      %p228 = por %p226, %p227
      %p229 = scmp.ne.s32.totalorder %s215, %s216
      %p230 = scmp.eq.s32.totalorder %s32, 1
      %p231 = por %p229, %p230
      %p233 = scmp.ne.s32.totalorder %s216, %s232
      %p234 = scmp.eq.s32.totalorder %s32, 0
      %p235 = por %p233, %p234
      %s236 = ssub.s32 %s33, %s45
      %s237 = ssub.s32 %s34, %s41
      %s238 = sor.u32 %s236, %s237
      %p239 = scmp.eq.s32.totalorder %s238, 0
      %s241 = sadd.s32 %s240, 1
      %s242 = scalar_select %p239, %s240, %s241
      %p245 = pneg %p239
      %p246 = scmp.eq.s32.totalorder %s26, 1
      %p247 = por %p245, %p246
      %p248 = scmp.ne.s32.totalorder %s240, %s243
      %p249 = scmp.eq.s32.totalorder %s26, 0
      %p250 = por %p248, %p249
      %p251 = scmp.ne.s32.totalorder %s240, %s243
      %p252 = scmp.eq.s32.totalorder %s31, 1
      %p253 = por %p251, %p252
      %p254 = scmp.ne.s32.totalorder %s243, %s244
      %p255 = scmp.eq.s32.totalorder %s31, 0
      %p256 = por %p254, %p255
      %p257 = scmp.ne.s32.totalorder %s243, %s244
      %p258 = scmp.eq.s32.totalorder %s32, 1
      %p259 = por %p257, %p258
      %p261 = scmp.ne.s32.totalorder %s244, %s260
      %p262 = scmp.eq.s32.totalorder %s32, 0
      %p263 = por %p261, %p262
      %p264 = scmp.le.s32.totalorder 1, %s26
      %p265 = scmp.lt.s32.totalorder %s26, 3
      %p266 = pnand %p264, %p265
      %p267 = pneg %p266
      // Predicated region
      $region9: #{tpu_custom_call.1} parent=5 // pred_check
        _
      $region10: #{tpu_custom_call.1} parent=5 // pred_check_branch
        %269 = sbr.rel (%p266) target = $region12
      $region11: #{tpu_custom_call.1} parent=5 // pred_region
        %s270 = ssub.s32 %s26, 1
        // Predicated region
        $region13: #{tpu_custom_call.1} parent=11 // pred_check
          %p271 = pneg %p148
        $region14: #{tpu_custom_call.1} parent=11 // pred_check_branch
          %273 = sbr.rel (%p271) target = $region16
        $region15: #{tpu_custom_call.1} parent=11 // pred_region
          %s275 = ssub.s32 128, 128
          %276 = vsyncadd [#allocation9], %s275
          %s277 = smul.addr %s35, 2
          %s278 = smul.addr %s277, 64
          %s279 = scalar_lea.hbm %s3, %s278
          %s280 = sshll.u32 [#allocation8], 4
          %s281 = int_to_ptr.vmem [resolvable:$true] %s280
          %286 = dma.hbm_to_vmem [thread:$0]  %s279, 128, %s281, [#allocation9], 64, 64, 4
        $region16: #{tpu_custom_call.1} parent=11 // pred_fallthru
          _
        // Predicated region
        $region17: #{tpu_custom_call.1} parent=11 // pred_check
          %p287 = pneg %p174
        $region18: #{tpu_custom_call.1} parent=11 // pred_check_branch
          %289 = sbr.rel (%p287) target = $region20
        $region19: #{tpu_custom_call.1} parent=11 // pred_region
          %s291 = ssub.s32 128, 128
          %292 = vsyncadd [#allocation9], %s291
          %s293 = smul.addr %s35, 2
          %s294 = smul.addr %s293, 64
          %s295 = scalar_lea.hbm %s4, %s294
          %s296 = sshll.u32 [#allocation10], 4
          %s297 = int_to_ptr.vmem [resolvable:$true] %s296
          %302 = dma.hbm_to_vmem [thread:$0]  %s295, 128, %s297, [#allocation9], 64, 64, 4
        $region20: #{tpu_custom_call.1} parent=11 // pred_fallthru
          _
        // Predicated region
        $region21: #{tpu_custom_call.1} parent=11 // pred_check
          %p303 = pneg %p228
        $region22: #{tpu_custom_call.1} parent=11 // pred_check_branch
          %305 = sbr.rel (%p303) target = $region24
        $region23: #{tpu_custom_call.1} parent=11 // pred_region
          %s307 = ssub.s32 16, 16
          %308 = vsyncadd [#allocation12], %s307
          %s309 = smul.addr %s35, 16
          %s310 = scalar_lea.hbm %s6, %s309
          %s312 = sshll.u32 [#allocation13], 4
          %s313 = int_to_ptr.vmem [resolvable:$true] %s312
          %315 = dma.hbm_to_vmem [thread:$0]  %s310, 16, %s313, [#allocation12]
        $region24: #{tpu_custom_call.1} parent=11 // pred_fallthru
          _
      $region12: #{tpu_custom_call.1} parent=5 // pred_fallthru
        _
      %p316 = scmp.lt.s32.totalorder %s26, 2
      // Predicated region
      $region25: #{tpu_custom_call.1} parent=5 // pred_check
        %p317 = pneg %p316
      $region26: #{tpu_custom_call.1} parent=5 // pred_check_branch
        %319 = sbr.rel (%p317) target = $region28
      $region27: #{tpu_custom_call.1} parent=5 // pred_region
        // Predicated region
        $region29: #{tpu_custom_call.1} parent=27 // pred_check
          %p320 = pneg %p60
        $region30: #{tpu_custom_call.1} parent=27 // pred_check_branch
          %322 = sbr.rel (%p320) target = $region32
        $region31: #{tpu_custom_call.1} parent=27 // pred_region
          %s323 = sand.u32 %s50, 1
          %s324 = scalar_lea.sflag [#allocation3], %s323
          %s325 = sand.u32 %s50, 1
          %s326 = smul.addr %s325, 16
          %s327 = scalar_lea.vmem [#allocation2], %s326
          %s328 = smul.u32 2, %s34
          %s330 = ssub.s32 256, 256
          %331 = vsyncadd %s324, %s330
          %s332 = smul.addr %s33, 4
          %s333 = sadd.s32 %s328, %s332
          %s334 = smul.addr %s333, 64
          %s335 = scalar_lea.hbm %s0, %s334
          %s336 = sshll.u32 %s327, 4
          %s337 = int_to_ptr.vmem [resolvable:$true] %s336
          %342 = dma.hbm_to_vmem [thread:$0]  %s335, 256, %s337, %s324, 64, 64, 4
        $region32: #{tpu_custom_call.1} parent=27 // pred_fallthru
          _
        // Predicated region
        $region33: #{tpu_custom_call.1} parent=27 // pred_check
          %p343 = pneg %p88
        $region34: #{tpu_custom_call.1} parent=27 // pred_check_branch
          %345 = sbr.rel (%p343) target = $region36
        $region35: #{tpu_custom_call.1} parent=27 // pred_region
          %s346 = sand.u32 %s26, 1
          %s347 = scalar_lea.sflag [#allocation6], %s346
          %s348 = sand.u32 %s78, 1
          %s349 = smul.addr %s348, 16
          %s350 = scalar_lea.vmem [#allocation5], %s349
          %s351 = smul.u32 2, %s34
          %s353 = ssub.s32 256, 256
          %354 = vsyncadd %s347, %s353
          %s355 = smul.addr %s33, 4
          %s356 = sadd.s32 %s351, %s355
          %s357 = smul.addr %s356, 64
          %s358 = scalar_lea.hbm %s1, %s357
          %s359 = sshll.u32 %s350, 4
          %s360 = int_to_ptr.vmem [resolvable:$true] %s359
          %365 = dma.hbm_to_vmem [thread:$0]  %s358, 256, %s360, %s347, 64, 64, 4
        $region36: #{tpu_custom_call.1} parent=27 // pred_fallthru
          _
        // Predicated region
        $region37: #{tpu_custom_call.1} parent=27 // pred_check
          %p366 = pneg %p116
        $region38: #{tpu_custom_call.1} parent=27 // pred_check_branch
          %368 = sbr.rel (%p366) target = $region40
        $region39: #{tpu_custom_call.1} parent=27 // pred_region
          %s369 = sand.u32 %s26, 1
          %s370 = scalar_lea.sflag [#allocation6], %s369
          %s371 = sand.u32 %s106, 1
          %s372 = smul.addr %s371, 16
          %s373 = scalar_lea.vmem [#allocation7], %s372
          %s374 = smul.u32 2, %s34
          %s376 = ssub.s32 256, 256
          %377 = vsyncadd %s370, %s376
          %s378 = smul.addr %s33, 4
          %s379 = sadd.s32 %s374, %s378
          %s380 = smul.addr %s379, 64
          %s381 = scalar_lea.hbm %s2, %s380
          %s382 = sshll.u32 %s373, 4
          %s383 = int_to_ptr.vmem [resolvable:$true] %s382
          %388 = dma.hbm_to_vmem [thread:$0]  %s381, 256, %s383, %s370, 64, 64, 4
        $region40: #{tpu_custom_call.1} parent=27 // pred_fallthru
          _
        // Predicated region
        $region41: #{tpu_custom_call.1} parent=27 // pred_check
          %p389 = pneg %p196
        $region42: #{tpu_custom_call.1} parent=27 // pred_check_branch
          %391 = sbr.rel (%p389) target = $region44
        $region43: #{tpu_custom_call.1} parent=27 // pred_region
          %s392 = sand.u32 %s26, 1
          %s393 = scalar_lea.sflag [#allocation12], %s392
          %s394 = sand.u32 %s186, 1
          %s395 = smul.addr %s394, 2
          %s396 = scalar_lea.vmem [#allocation11], %s395
          %s398 = ssub.s32 32, 32
          %399 = vsyncadd %s393, %s398
          %s400 = sadd.s32 %s34, %s33
          %s401 = smul.addr %s400, 32
          %s402 = scalar_lea.hbm %s5, %s401
          %s404 = sshll.u32 %s396, 4
          %s405 = int_to_ptr.vmem [resolvable:$true] %s404
          %407 = dma.hbm_to_vmem [thread:$0]  %s402, 32, %s405, %s393
        $region44: #{tpu_custom_call.1} parent=27 // pred_fallthru
          _
      $region28: #{tpu_custom_call.1} parent=5 // pred_fallthru
        _
      %p408 = scmp.le.s32.totalorder 1, %s26
      %p409 = scmp.lt.s32.totalorder %s26, 3
      %p410 = pnand %p408, %p409
      %p411 = pneg %p410
      // Predicated region
      $region45: #{tpu_custom_call.1} parent=5 // pred_check
        _
      $region46: #{tpu_custom_call.1} parent=5 // pred_check_branch
        %413 = sbr.rel (%p410) target = $region48
      $region47: #{tpu_custom_call.1} parent=5 // pred_region
        %s414 = ssub.s32 %s26, 1
        %s415 = sand.u32 %s53, 1
        %s416 = scalar_lea.sflag [#allocation3], %s415
        %s417 = sand.u32 %s53, 1
        %s418 = smul.addr %s417, 16
        %s419 = scalar_lea.vmem [#allocation2], %s418
        // Predicated region
        $region49: #{tpu_custom_call.1} parent=47 // pred_check
          %p420 = pneg %p66
        $region50: #{tpu_custom_call.1} parent=47 // pred_check_branch
          %422 = sbr.rel (%p420) target = $region52
        $region51: #{tpu_custom_call.1} parent=47 // pred_region
          %423 = dma.done %s416, 256
        $region52: #{tpu_custom_call.1} parent=47 // pred_fallthru
          _
        %s424 = sand.u32 %s31, 1
        %s425 = scalar_lea.sflag [#allocation6], %s424
        %s426 = sand.u32 %s81, 1
        %s427 = smul.addr %s426, 16
        %s428 = scalar_lea.vmem [#allocation5], %s427
        // Predicated region
        $region53: #{tpu_custom_call.1} parent=47 // pred_check
          %p429 = pneg %p94
        $region54: #{tpu_custom_call.1} parent=47 // pred_check_branch
          %431 = sbr.rel (%p429) target = $region56
        $region55: #{tpu_custom_call.1} parent=47 // pred_region
          %432 = dma.done %s425, 256
        $region56: #{tpu_custom_call.1} parent=47 // pred_fallthru
          _
        %s433 = sand.u32 %s31, 1
        %s434 = scalar_lea.sflag [#allocation6], %s433
        %s435 = sand.u32 %s109, 1
        %s436 = smul.addr %s435, 16
        %s437 = scalar_lea.vmem [#allocation7], %s436
        // Predicated region
        $region57: #{tpu_custom_call.1} parent=47 // pred_check
          %p438 = pneg %p122
        $region58: #{tpu_custom_call.1} parent=47 // pred_check_branch
          %440 = sbr.rel (%p438) target = $region60
        $region59: #{tpu_custom_call.1} parent=47 // pred_region
          %441 = dma.done %s434, 256
        $region60: #{tpu_custom_call.1} parent=47 // pred_fallthru
          _
        // Predicated region
        $region61: #{tpu_custom_call.1} parent=47 // pred_check
          %p442 = pneg %p148
        $region62: #{tpu_custom_call.1} parent=47 // pred_check_branch
          %444 = sbr.rel (%p442) target = $region64
        $region63: #{tpu_custom_call.1} parent=47 // pred_region
          %445 = dma.done [#allocation9], 128
        $region64: #{tpu_custom_call.1} parent=47 // pred_fallthru
          _
        // Predicated region
        $region65: #{tpu_custom_call.1} parent=47 // pred_check
          %p446 = pneg %p174
        $region66: #{tpu_custom_call.1} parent=47 // pred_check_branch
          %448 = sbr.rel (%p446) target = $region68
        $region67: #{tpu_custom_call.1} parent=47 // pred_region
          %449 = dma.done [#allocation9], 128
        $region68: #{tpu_custom_call.1} parent=47 // pred_fallthru
          _
        %s450 = sand.u32 %s31, 1
        %s451 = scalar_lea.sflag [#allocation12], %s450
        %s452 = sand.u32 %s189, 1
        %s453 = smul.addr %s452, 2
        %s454 = scalar_lea.vmem [#allocation11], %s453
        // Predicated region
        $region69: #{tpu_custom_call.1} parent=47 // pred_check
          %p455 = pneg %p202
        $region70: #{tpu_custom_call.1} parent=47 // pred_check_branch
          %457 = sbr.rel (%p455) target = $region72
        $region71: #{tpu_custom_call.1} parent=47 // pred_region
          %458 = dma.done %s451, 32
        $region72: #{tpu_custom_call.1} parent=47 // pred_fallthru
          _
        // Predicated region
        $region73: #{tpu_custom_call.1} parent=47 // pred_check
          %p459 = pneg %p228
        $region74: #{tpu_custom_call.1} parent=47 // pred_check_branch
          %461 = sbr.rel (%p459) target = $region76
        $region75: #{tpu_custom_call.1} parent=47 // pred_region
          %462 = dma.done [#allocation12], 16
        $region76: #{tpu_custom_call.1} parent=47 // pred_fallthru
          _
        %s463 = sand.u32 %s53, 1
        %s464 = scalar_lea.sflag [#allocation3], %s463
        %s465 = sand.u32 %s53, 1
        %s466 = smul.addr %s465, 16
        %s467 = scalar_lea.vmem [#allocation2], %s466
        %p468 = pneg %p66
        %p469 = pneg %p63
        %s470 = sand.u32 %s31, 1
        %s471 = scalar_lea.sflag [#allocation6], %s470
        %s472 = sand.u32 %s81, 1
        %s473 = smul.addr %s472, 16
        %s474 = scalar_lea.vmem [#allocation5], %s473
        %p475 = pneg %p94
        %p476 = pneg %p91
        %s477 = sand.u32 %s31, 1
        %s478 = scalar_lea.sflag [#allocation6], %s477
        %s479 = sand.u32 %s109, 1
        %s480 = smul.addr %s479, 16
        %s481 = scalar_lea.vmem [#allocation7], %s480
        %p482 = pneg %p122
        %p483 = pneg %p119
        %p484 = pneg %p148
        %p485 = pneg %p145
        %p486 = pneg %p174
        %p487 = pneg %p171
        %s488 = sand.u32 %s31, 1
        %s489 = scalar_lea.sflag [#allocation12], %s488
        %s490 = sand.u32 %s189, 1
        %s491 = smul.addr %s490, 2
        %s492 = scalar_lea.vmem [#allocation11], %s491
        %p493 = pneg %p202
        %p494 = pneg %p199
        %p495 = pneg %p228
        %p496 = pneg %p225
        %p497 = pneg %p256
        %p498 = pneg %p253
        %s499 = sand.u32 %s243, 1
        %s500 = scalar_lea.sflag [#allocation4], %s499
        %s501 = sand.u32 %s243, 1
        %s502 = smul.addr %s501, 16
        %s503 = scalar_lea.vmem [#allocation14], %s502
        %s504 = smul.u32 2, %s36
        %s505 = smul.u32 2, %s36
        %s506 = smul.u32 2, %s36
        %s507 = smul.u32 2, %s36
        %v509 = vld [vmem:[%s454] sm:$0x3]
        %v512 = vunpack.c.l.s4 1966171168
        %v513 = vunpack.c.0.s8 %v512
        %v514 = vlaneseq
        %v515 = vshrl.u32 %v514, 7
        %v516 = vsub.s32 %v513, %v515
        %v517 = vrot.slane %v509, %v516
        %v518 = vcombine.high %v517, %v517
        %v520 = vunpack.c.l.s4 1966171168
        %v521 = vunpack.c.0.s8 %v520
        %v522 = vlaneseq
        %v523 = vshrl.u32 %v522, 7
        %v524 = vsub.s32 %v521, %v523
        %v525 = vrot.slane %v517, %v524
        %v527 = vunpack.c.l.s4 1966171168
        %v528 = vunpack.c.0.s8 %v527
        %v529 = vlaneseq
        %v530 = vshrl.u32 %v529, 7
        %v531 = vsub.s32 %v528, %v530
        %v532 = vrot.slane %v518, %v531
        %v533 = vld [vmem:[#allocation13] sm:$0x1]
        %v534 = vld [vmem:[%s419] sm:$0xf]
        %v535 = vld [vmem:[%s419 + $0x4] sm:$0xf]
        %v536 = vld [vmem:[%s428] sm:$0xf]
        %v537 = vld [vmem:[%s428 + $0x4] sm:$0xf]
        %v538 = vld [vmem:[%s437] sm:$0xf]
        %v539 = vld [vmem:[%s437 + $0x4] sm:$0xf]
        %v540 = vld [vmem:[#allocation8] sm:$0x7]
        %v541 = vld [vmem:[#allocation10] sm:$0x7]
        %v542 = vlaneseq
        %v543 = vshrl.u32 %v542, 7
        %v544 = vsub.s32 0, %v543
        %v545 = vrot.slane %v525, %v544
        %v546 = vlaneseq
        %v547 = vshrl.u32 %v546, 7
        %v548 = vsub.s32 0, %v547
        %v549 = vrot.slane %v532, %v548
        %vm552 = vcmask 130048
        %v554 = vsel %vm552, %v534, 0
        %v557 = vsel %vm552, %v536, 0
        %559 = vmatprep.subr.bf16.mxu0 0
        %560 = vmatpush1.bf16.xpose.msra.mxu0 %v557
        %561 = vmatprep.subr.bf16.mxu0 0
        %562 = vmatpush1.bf16.xpose.msra.mxu0 0
        %563 = vmatprep.subr.bf16.mxu0 0
        %564 = vmatpush1.bf16.xpose.msra.mxu0 0
        %565 = vmatprep.subr.bf16.mxu0 0
        %566 = vmatpush1.bf16.xpose.msra.mxu0 0
        %567 = vmatprep.subr.bf16.mxu0 0
        %568 = vmatpush1.bf16.xpose.msra.mxu0 0
        %569 = vmatprep.subr.bf16.mxu0 0
        %570 = vmatpush1.bf16.xpose.msra.mxu0 0
        %571 = vmatprep.subr.bf16.mxu0 0
        %572 = vmatpush1.bf16.xpose.msra.mxu0 0
        %573 = vmatprep.subr.bf16.mxu0 0
        %574 = vmatpush1.bf16.xpose.msra.mxu0 0
        %575 = vmatprep.subr.bf16.mxu0 0
        %576 = vmatpush1.bf16.xpose.msra.mxu0 0
        %577 = vmatprep.subr.bf16.mxu0 0
        %578 = vmatpush1.bf16.xpose.msra.mxu0 0
        %579 = vmatprep.subr.bf16.mxu0 0
        %580 = vmatpush1.bf16.xpose.msra.mxu0 0
        %581 = vmatprep.subr.bf16.mxu0 0
        %582 = vmatpush1.bf16.xpose.msra.mxu0 0
        %583 = vmatprep.subr.bf16.mxu0 0
        %584 = vmatpush1.bf16.xpose.msra.mxu0 0
        %585 = vmatprep.subr.bf16.mxu0 0
        %586 = vmatpush1.bf16.xpose.msra.mxu0 0
        %587 = vmatprep.subr.bf16.mxu0 0
        %588 = vmatpush1.bf16.xpose.msra.mxu0 0
        %589 = vmatprep.subr.bf16.mxu0 0
        %590 = vmatpush1.bf16.xpose.msra.mxu0 0
        %591 = vmatprep.mubr.bf16.mxu0 0
        %592 = vmatmul.mubr.bf16.gmra.mrb[0].mxu0 %v554
        %v593 = vpop.f32.mrb[0].mxu0
        %v594 = vadd.f32 %v545, %v593
        %v595 = vpop.f32.mrb[0].mxu0
        %v596 = vpop.f32.mrb[0].mxu0
        %v597 = vpop.f32.mrb[0].mxu0
        %598 = vdwg.mxu0
        %v600 = vsel %vm552, %v535, 0
        %v603 = vsel %vm552, %v537, 0
        %605 = vmatprep.subr.bf16.mxu0 0
        %606 = vmatpush1.bf16.xpose.msra.mxu0 %v603
        %607 = vmatprep.subr.bf16.mxu0 0
        %608 = vmatpush1.bf16.xpose.msra.mxu0 0
        %609 = vmatprep.subr.bf16.mxu0 0
        %610 = vmatpush1.bf16.xpose.msra.mxu0 0
        %611 = vmatprep.subr.bf16.mxu0 0
        %612 = vmatpush1.bf16.xpose.msra.mxu0 0
        %613 = vmatprep.subr.bf16.mxu0 0
        %614 = vmatpush1.bf16.xpose.msra.mxu0 0
        %615 = vmatprep.subr.bf16.mxu0 0
        %616 = vmatpush1.bf16.xpose.msra.mxu0 0
        %617 = vmatprep.subr.bf16.mxu0 0
        %618 = vmatpush1.bf16.xpose.msra.mxu0 0
        %619 = vmatprep.subr.bf16.mxu0 0
        %620 = vmatpush1.bf16.xpose.msra.mxu0 0
        %621 = vmatprep.subr.bf16.mxu0 0
        %622 = vmatpush1.bf16.xpose.msra.mxu0 0
        %623 = vmatprep.subr.bf16.mxu0 0
        %624 = vmatpush1.bf16.xpose.msra.mxu0 0
        %625 = vmatprep.subr.bf16.mxu0 0
        %626 = vmatpush1.bf16.xpose.msra.mxu0 0
        %627 = vmatprep.subr.bf16.mxu0 0
        %628 = vmatpush1.bf16.xpose.msra.mxu0 0
        %629 = vmatprep.subr.bf16.mxu0 0
        %630 = vmatpush1.bf16.xpose.msra.mxu0 0
        %631 = vmatprep.subr.bf16.mxu0 0
        %632 = vmatpush1.bf16.xpose.msra.mxu0 0
        %633 = vmatprep.subr.bf16.mxu0 0
        %634 = vmatpush1.bf16.xpose.msra.mxu0 0
        %635 = vmatprep.subr.bf16.mxu0 0
        %636 = vmatpush1.bf16.xpose.msra.mxu0 0
        %637 = vmatprep.mubr.bf16.mxu0 0
        %638 = vmatmul.mubr.bf16.gmra.mrb[0].mxu0 %v600
        %v639 = vpop.f32.mrb[0].mxu0
        %v640 = vadd.f32 %v549, %v639
        %v641 = vpop.f32.mrb[0].mxu0
        %v642 = vpop.f32.mrb[0].mxu0
        %v643 = vpop.f32.mrb[0].mxu0
        %644 = vdwg.mxu0
        %v646 = vlaneseq
        %v647 = vshrl.u32 %v646, 7
        %v648 = vsub.s32 0, %v647
        %v649 = vrot.slane %v533, %v648
        %v653 = vunpack.c.l.b16 %v534
        %v654 = vunpack.c.l.b16 %v535
        %v655 = vpack.c.b16 %v654, %v653
        %v657 = vsel %vm552, %v655, 0
        %v660 = vsel %vm552, %v540, 0
        %662 = vmatprep.subr.bf16.mxu0 0
        %663 = vmatpush1.bf16.xpose.msra.mxu0 %v660
        %664 = vmatprep.subr.bf16.mxu0 0
        %665 = vmatpush1.bf16.xpose.msra.mxu0 0
        %666 = vmatprep.subr.bf16.mxu0 0
        %667 = vmatpush1.bf16.xpose.msra.mxu0 0
        %668 = vmatprep.subr.bf16.mxu0 0
        %669 = vmatpush1.bf16.xpose.msra.mxu0 0
        %670 = vmatprep.subr.bf16.mxu0 0
        %671 = vmatpush1.bf16.xpose.msra.mxu0 0
        %672 = vmatprep.subr.bf16.mxu0 0
        %673 = vmatpush1.bf16.xpose.msra.mxu0 0
        %674 = vmatprep.subr.bf16.mxu0 0
        %675 = vmatpush1.bf16.xpose.msra.mxu0 0
        %676 = vmatprep.subr.bf16.mxu0 0
        %677 = vmatpush1.bf16.xpose.msra.mxu0 0
        %678 = vmatprep.subr.bf16.mxu0 0
        %679 = vmatpush1.bf16.xpose.msra.mxu0 0
        %680 = vmatprep.subr.bf16.mxu0 0
        %681 = vmatpush1.bf16.xpose.msra.mxu0 0
        %682 = vmatprep.subr.bf16.mxu0 0
        %683 = vmatpush1.bf16.xpose.msra.mxu0 0
        %684 = vmatprep.subr.bf16.mxu0 0
        %685 = vmatpush1.bf16.xpose.msra.mxu0 0
        %686 = vmatprep.subr.bf16.mxu0 0
        %687 = vmatpush1.bf16.xpose.msra.mxu0 0
        %688 = vmatprep.subr.bf16.mxu0 0
        %689 = vmatpush1.bf16.xpose.msra.mxu0 0
        %690 = vmatprep.subr.bf16.mxu0 0
        %691 = vmatpush1.bf16.xpose.msra.mxu0 0
        %692 = vmatprep.subr.bf16.mxu0 0
        %693 = vmatpush1.bf16.xpose.msra.mxu0 0
        %694 = vmatprep.mubr.bf16.mxu0 0
        %695 = vmatmul.mubr.bf16.gmra.mrb[0].mxu0 %v657
        %v696 = vpop.f32.mrb[0].mxu0
        %v697 = vadd.f32 %v649, %v696
        %v698 = vpop.f32.mrb[0].mxu0
        %v699 = vpop.f32.mrb[0].mxu0
        %v700 = vadd.f32 %v649, %v699
        %v701 = vpop.f32.mrb[0].mxu0
        %702 = vdwg.mxu0
        %vm703 = vcmask 64512
        %v704 = vsel %vm703, %v594, -inf
        %705 = vmax.xlane.f32.xlu0 %v704
        %v706 = vpop.xlane.xlu0 %705
        %v707 = vsel %vm703, %v640, -inf
        %708 = vmax.xlane.f32.xlu0 %v707
        %v709 = vpop.xlane.xlu0 %708
        %vm710 = vcmask 48128
        %v711 = vsel %vm710, %v697, -inf
        %712 = vmax.xlane.f32.xlu0 %v711
        %v713 = vpop.xlane.xlu0 %712
        %v714 = vsel %vm710, %v700, -inf
        %715 = vmax.xlane.f32.xlu0 %v714
        %v716 = vpop.xlane.xlu0 %715
        %v717 = vmax.f32 %v706, %v713
        %v718 = vmax.f32 %v709, %v716
        %v719 = vsub.f32 %v594, %v717
        %v720 = vsub.f32 %v640, %v718
        %v721 = vmul.f32 %v719, 1.442695
        %v722 = vpow.pop %v721
        %v723 = vmul.f32 %v720, 1.442695
        %v724 = vpow.pop %v723
        %v725 = vsub.f32 %v697, %v717
        %v726 = vsub.f32 %v700, %v718
        %v727 = vmul.f32 %v725, 1.442695
        %v728 = vpow.pop %v727
        %v729 = vmul.f32 %v726, 1.442695
        %v730 = vpow.pop %v729
        %v731 = vsel %vm703, %v722, 0.0
        %732 = vadd.xlane.f32.xlu0 %v731
        %v733 = vpop.xlane.xlu0 %732
        %v734 = vsel %vm703, %v724, 0.0
        %735 = vadd.xlane.f32.xlu0 %v734
        %v736 = vpop.xlane.xlu0 %735
        %v737 = vsel %vm710, %v728, 0.0
        %738 = vadd.xlane.f32.xlu0 %v737
        %v739 = vpop.xlane.xlu0 %738
        %v740 = vsel %vm710, %v730, 0.0
        %741 = vadd.xlane.f32.xlu0 %v740
        %v742 = vpop.xlane.xlu0 %741
        %v743 = vadd.f32 %v733, %v739
        %v744 = vadd.f32 %v736, %v742
        %v745 = vrcp.pop %v743
        %v746 = vrcp.pop %v744
        %v747 = vpack.c.bf16 %v722, %v722
        %v748 = vpack.c.bf16 %v724, %v724
        %v749 = vpack.c.bf16 %v728, %v728
        %v750 = vpack.c.bf16 %v730, %v730
        %v753 = vunpack.c.l.b16 %v749
        %v754 = vunpack.c.l.b16 %v750
        %v755 = vpack.c.b16 %v754, %v753
        %v757 = vsel %vm710, %v755, 0
        %vm759 = vcmask 1042432
        %v761 = vsel %vm759, %v541, 0
        %763 = vmatprep.subr.bf16.mxu0 0
        %764 = vmatpush1.bf16.msra.mxu0 %v761
        %765 = vmatprep.subr.bf16.mxu0 0
        %766 = vmatpush1.bf16.msra.mxu0 0
        %767 = vmatprep.subr.bf16.mxu0 0
        %768 = vmatpush1.bf16.msra.mxu0 0
        %769 = vmatprep.subr.bf16.mxu0 0
        %770 = vmatpush1.bf16.msra.mxu0 0
        %771 = vmatprep.subr.bf16.mxu0 0
        %772 = vmatpush1.bf16.msra.mxu0 0
        %773 = vmatprep.subr.bf16.mxu0 0
        %774 = vmatpush1.bf16.msra.mxu0 0
        %775 = vmatprep.subr.bf16.mxu0 0
        %776 = vmatpush1.bf16.msra.mxu0 0
        %777 = vmatprep.subr.bf16.mxu0 0
        %778 = vmatpush1.bf16.msra.mxu0 0
        %779 = vmatprep.subr.bf16.mxu0 0
        %780 = vmatpush1.bf16.msra.mxu0 0
        %781 = vmatprep.subr.bf16.mxu0 0
        %782 = vmatpush1.bf16.msra.mxu0 0
        %783 = vmatprep.subr.bf16.mxu0 0
        %784 = vmatpush1.bf16.msra.mxu0 0
        %785 = vmatprep.subr.bf16.mxu0 0
        %786 = vmatpush1.bf16.msra.mxu0 0
        %787 = vmatprep.subr.bf16.mxu0 0
        %788 = vmatpush1.bf16.msra.mxu0 0
        %789 = vmatprep.subr.bf16.mxu0 0
        %790 = vmatpush1.bf16.msra.mxu0 0
        %791 = vmatprep.subr.bf16.mxu0 0
        %792 = vmatpush1.bf16.msra.mxu0 0
        %793 = vmatprep.subr.bf16.mxu0 0
        %794 = vmatpush1.bf16.msra.mxu0 0
        %795 = vmatprep.mubr.bf16.mxu0 0
        %796 = vmatmul.mubr.bf16.gmra.mrb[0].mxu0 %v757
        %v797 = vpop.f32.mrb[0].mxu0
        %v798 = vadd.f32 0.0, %v797
        %v799 = vpop.f32.mrb[0].mxu0
        %v800 = vpop.f32.mrb[0].mxu0
        %v801 = vadd.f32 0.0, %v800
        %v802 = vpop.f32.mrb[0].mxu0
        %803 = vdwg.mxu0
        %v805 = vsel %vm703, %v747, 0
        %vm807 = vcmask 1043456
        %v809 = vsel %vm807, %v538, 0
        %811 = vmatprep.subr.bf16.mxu0 0
        %812 = vmatpush1.bf16.msra.mxu0 %v809
        %813 = vmatprep.subr.bf16.mxu0 0
        %814 = vmatpush1.bf16.msra.mxu0 0
        %815 = vmatprep.subr.bf16.mxu0 0
        %816 = vmatpush1.bf16.msra.mxu0 0
        %817 = vmatprep.subr.bf16.mxu0 0
        %818 = vmatpush1.bf16.msra.mxu0 0
        %819 = vmatprep.subr.bf16.mxu0 0
        %820 = vmatpush1.bf16.msra.mxu0 0
        %821 = vmatprep.subr.bf16.mxu0 0
        %822 = vmatpush1.bf16.msra.mxu0 0
        %823 = vmatprep.subr.bf16.mxu0 0
        %824 = vmatpush1.bf16.msra.mxu0 0
        %825 = vmatprep.subr.bf16.mxu0 0
        %826 = vmatpush1.bf16.msra.mxu0 0
        %827 = vmatprep.subr.bf16.mxu0 0
        %828 = vmatpush1.bf16.msra.mxu0 0
        %829 = vmatprep.subr.bf16.mxu0 0
        %830 = vmatpush1.bf16.msra.mxu0 0
        %831 = vmatprep.subr.bf16.mxu0 0
        %832 = vmatpush1.bf16.msra.mxu0 0
        %833 = vmatprep.subr.bf16.mxu0 0
        %834 = vmatpush1.bf16.msra.mxu0 0
        %835 = vmatprep.subr.bf16.mxu0 0
        %836 = vmatpush1.bf16.msra.mxu0 0
        %837 = vmatprep.subr.bf16.mxu0 0
        %838 = vmatpush1.bf16.msra.mxu0 0
        %839 = vmatprep.subr.bf16.mxu0 0
        %840 = vmatpush1.bf16.msra.mxu0 0
        %841 = vmatprep.subr.bf16.mxu0 0
        %842 = vmatpush1.bf16.msra.mxu0 0
        %843 = vmatprep.mubr.bf16.mxu0 0
        %844 = vmatmul.mubr.bf16.gmra.mrb[0].mxu0 %v805
        %v845 = vpop.f32.mrb[0].mxu0
        %v846 = vadd.f32 %v798, %v845
        %v847 = vpop.f32.mrb[0].mxu0
        %v848 = vpop.f32.mrb[0].mxu0
        %v849 = vpop.f32.mrb[0].mxu0
        %850 = vdwg.mxu0
        %v852 = vsel %vm703, %v748, 0
        %v855 = vsel %vm807, %v539, 0
        %857 = vmatprep.subr.bf16.mxu0 0
        %858 = vmatpush1.bf16.msra.mxu0 %v855
        %859 = vmatprep.subr.bf16.mxu0 0
        %860 = vmatpush1.bf16.msra.mxu0 0
        %861 = vmatprep.subr.bf16.mxu0 0
        %862 = vmatpush1.bf16.msra.mxu0 0
        %863 = vmatprep.subr.bf16.mxu0 0
        %864 = vmatpush1.bf16.msra.mxu0 0
        %865 = vmatprep.subr.bf16.mxu0 0
        %866 = vmatpush1.bf16.msra.mxu0 0
        %867 = vmatprep.subr.bf16.mxu0 0
        %868 = vmatpush1.bf16.msra.mxu0 0
        %869 = vmatprep.subr.bf16.mxu0 0
        %870 = vmatpush1.bf16.msra.mxu0 0
        %871 = vmatprep.subr.bf16.mxu0 0
        %872 = vmatpush1.bf16.msra.mxu0 0
        %873 = vmatprep.subr.bf16.mxu0 0
        %874 = vmatpush1.bf16.msra.mxu0 0
        %875 = vmatprep.subr.bf16.mxu0 0
        %876 = vmatpush1.bf16.msra.mxu0 0
        %877 = vmatprep.subr.bf16.mxu0 0
        %878 = vmatpush1.bf16.msra.mxu0 0
        %879 = vmatprep.subr.bf16.mxu0 0
        %880 = vmatpush1.bf16.msra.mxu0 0
        %881 = vmatprep.subr.bf16.mxu0 0
        %882 = vmatpush1.bf16.msra.mxu0 0
        %883 = vmatprep.subr.bf16.mxu0 0
        %884 = vmatpush1.bf16.msra.mxu0 0
        %885 = vmatprep.subr.bf16.mxu0 0
        %886 = vmatpush1.bf16.msra.mxu0 0
        %887 = vmatprep.subr.bf16.mxu0 0
        %888 = vmatpush1.bf16.msra.mxu0 0
        %889 = vmatprep.mubr.bf16.mxu0 0
        %890 = vmatmul.mubr.bf16.gmra.mrb[0].mxu0 %v852
        %v891 = vpop.f32.mrb[0].mxu0
        %v892 = vadd.f32 %v801, %v891
        %v893 = vpop.f32.mrb[0].mxu0
        %v894 = vpop.f32.mrb[0].mxu0
        %v895 = vpop.f32.mrb[0].mxu0
        %896 = vdwg.mxu0
        %v897 = vmul.f32 %v846, %v745
        %v898 = vmul.f32 %v892, %v746
        %899 = vst.msk [vmem:[%s503] sm:$0xff] %vm552, %v897
        %900 = vst.msk [vmem:[%s503 + $0x8] sm:$0xff] %vm552, %v898
        %s901 = scalar_lea.vmem %s419, 8 [#allocation2]
        %v902 = vld [vmem:[%s901] sm:$0xf]
        %v903 = vld [vmem:[%s901 + $0x4] sm:$0xf]
        %s904 = scalar_lea.vmem %s428, 8 [#allocation5]
        %v905 = vld [vmem:[%s904] sm:$0xf]
        %v906 = vld [vmem:[%s904 + $0x4] sm:$0xf]
        %s907 = scalar_lea.vmem %s437, 8 [#allocation7]
        %v908 = vld [vmem:[%s907] sm:$0xf]
        %v909 = vld [vmem:[%s907 + $0x4] sm:$0xf]
        %s910 = scalar_lea.vmem [#allocation8], 4
        %v911 = vld [vmem:[%s910] sm:$0x7]
        %s912 = scalar_lea.vmem [#allocation10], 4
        %v913 = vld [vmem:[%s912] sm:$0x7]
        %v915 = vsel %vm552, %v902, 0
        %v918 = vsel %vm552, %v905, 0
        %920 = vmatprep.subr.bf16.mxu0 0
        %921 = vmatpush1.bf16.xpose.msra.mxu0 %v918
        %922 = vmatprep.subr.bf16.mxu0 0
        %923 = vmatpush1.bf16.xpose.msra.mxu0 0
        %924 = vmatprep.subr.bf16.mxu0 0
        %925 = vmatpush1.bf16.xpose.msra.mxu0 0
        %926 = vmatprep.subr.bf16.mxu0 0
        %927 = vmatpush1.bf16.xpose.msra.mxu0 0
        %928 = vmatprep.subr.bf16.mxu0 0
        %929 = vmatpush1.bf16.xpose.msra.mxu0 0
        %930 = vmatprep.subr.bf16.mxu0 0
        %931 = vmatpush1.bf16.xpose.msra.mxu0 0
        %932 = vmatprep.subr.bf16.mxu0 0
        %933 = vmatpush1.bf16.xpose.msra.mxu0 0
        %934 = vmatprep.subr.bf16.mxu0 0
        %935 = vmatpush1.bf16.xpose.msra.mxu0 0
        %936 = vmatprep.subr.bf16.mxu0 0
        %937 = vmatpush1.bf16.xpose.msra.mxu0 0
        %938 = vmatprep.subr.bf16.mxu0 0
        %939 = vmatpush1.bf16.xpose.msra.mxu0 0
        %940 = vmatprep.subr.bf16.mxu0 0
        %941 = vmatpush1.bf16.xpose.msra.mxu0 0
        %942 = vmatprep.subr.bf16.mxu0 0
        %943 = vmatpush1.bf16.xpose.msra.mxu0 0
        %944 = vmatprep.subr.bf16.mxu0 0
        %945 = vmatpush1.bf16.xpose.msra.mxu0 0
        %946 = vmatprep.subr.bf16.mxu0 0
        %947 = vmatpush1.bf16.xpose.msra.mxu0 0
        %948 = vmatprep.subr.bf16.mxu0 0
        %949 = vmatpush1.bf16.xpose.msra.mxu0 0
        %950 = vmatprep.subr.bf16.mxu0 0
        %951 = vmatpush1.bf16.xpose.msra.mxu0 0
        %952 = vmatprep.mubr.bf16.mxu0 0
        %953 = vmatmul.mubr.bf16.gmra.mrb[0].mxu0 %v915
        %v954 = vpop.f32.mrb[0].mxu0
        %v955 = vadd.f32 %v545, %v954
        %v956 = vpop.f32.mrb[0].mxu0
        %v957 = vpop.f32.mrb[0].mxu0
        %v958 = vpop.f32.mrb[0].mxu0
        %959 = vdwg.mxu0
        %v961 = vsel %vm552, %v903, 0
        %v964 = vsel %vm552, %v906, 0
        %966 = vmatprep.subr.bf16.mxu0 0
        %967 = vmatpush1.bf16.xpose.msra.mxu0 %v964
        %968 = vmatprep.subr.bf16.mxu0 0
        %969 = vmatpush1.bf16.xpose.msra.mxu0 0
        %970 = vmatprep.subr.bf16.mxu0 0
        %971 = vmatpush1.bf16.xpose.msra.mxu0 0
        %972 = vmatprep.subr.bf16.mxu0 0
        %973 = vmatpush1.bf16.xpose.msra.mxu0 0
        %974 = vmatprep.subr.bf16.mxu0 0
        %975 = vmatpush1.bf16.xpose.msra.mxu0 0
        %976 = vmatprep.subr.bf16.mxu0 0
        %977 = vmatpush1.bf16.xpose.msra.mxu0 0
        %978 = vmatprep.subr.bf16.mxu0 0
        %979 = vmatpush1.bf16.xpose.msra.mxu0 0
        %980 = vmatprep.subr.bf16.mxu0 0
        %981 = vmatpush1.bf16.xpose.msra.mxu0 0
        %982 = vmatprep.subr.bf16.mxu0 0
        %983 = vmatpush1.bf16.xpose.msra.mxu0 0
        %984 = vmatprep.subr.bf16.mxu0 0
        %985 = vmatpush1.bf16.xpose.msra.mxu0 0
        %986 = vmatprep.subr.bf16.mxu0 0
        %987 = vmatpush1.bf16.xpose.msra.mxu0 0
        %988 = vmatprep.subr.bf16.mxu0 0
        %989 = vmatpush1.bf16.xpose.msra.mxu0 0
        %990 = vmatprep.subr.bf16.mxu0 0
        %991 = vmatpush1.bf16.xpose.msra.mxu0 0
        %992 = vmatprep.subr.bf16.mxu0 0
        %993 = vmatpush1.bf16.xpose.msra.mxu0 0
        %994 = vmatprep.subr.bf16.mxu0 0
        %995 = vmatpush1.bf16.xpose.msra.mxu0 0
        %996 = vmatprep.subr.bf16.mxu0 0
        %997 = vmatpush1.bf16.xpose.msra.mxu0 0
        %998 = vmatprep.mubr.bf16.mxu0 0
        %999 = vmatmul.mubr.bf16.gmra.mrb[0].mxu0 %v961
        %v1000 = vpop.f32.mrb[0].mxu0
        %v1001 = vadd.f32 %v549, %v1000
        %v1002 = vpop.f32.mrb[0].mxu0
        %v1003 = vpop.f32.mrb[0].mxu0
        %v1004 = vpop.f32.mrb[0].mxu0
        %1005 = vdwg.mxu0
        %v1008 = vunpack.c.l.b16 %v902
        %v1009 = vunpack.c.l.b16 %v903
        %v1010 = vpack.c.b16 %v1009, %v1008
        %v1012 = vsel %vm552, %v1010, 0
        %v1015 = vsel %vm552, %v911, 0
        %1017 = vmatprep.subr.bf16.mxu0 0
        %1018 = vmatpush1.bf16.xpose.msra.mxu0 %v1015
        %1019 = vmatprep.subr.bf16.mxu0 0
        %1020 = vmatpush1.bf16.xpose.msra.mxu0 0
        %1021 = vmatprep.subr.bf16.mxu0 0
        %1022 = vmatpush1.bf16.xpose.msra.mxu0 0
        %1023 = vmatprep.subr.bf16.mxu0 0
        %1024 = vmatpush1.bf16.xpose.msra.mxu0 0
        %1025 = vmatprep.subr.bf16.mxu0 0
        %1026 = vmatpush1.bf16.xpose.msra.mxu0 0
        %1027 = vmatprep.subr.bf16.mxu0 0
        %1028 = vmatpush1.bf16.xpose.msra.mxu0 0
        %1029 = vmatprep.subr.bf16.mxu0 0
        %1030 = vmatpush1.bf16.xpose.msra.mxu0 0
        %1031 = vmatprep.subr.bf16.mxu0 0
        %1032 = vmatpush1.bf16.xpose.msra.mxu0 0
        %1033 = vmatprep.subr.bf16.mxu0 0
        %1034 = vmatpush1.bf16.xpose.msra.mxu0 0
        %1035 = vmatprep.subr.bf16.mxu0 0
        %1036 = vmatpush1.bf16.xpose.msra.mxu0 0
        %1037 = vmatprep.subr.bf16.mxu0 0
        %1038 = vmatpush1.bf16.xpose.msra.mxu0 0
        %1039 = vmatprep.subr.bf16.mxu0 0
        %1040 = vmatpush1.bf16.xpose.msra.mxu0 0
        %1041 = vmatprep.subr.bf16.mxu0 0
        %1042 = vmatpush1.bf16.xpose.msra.mxu0 0
        %1043 = vmatprep.subr.bf16.mxu0 0
        %1044 = vmatpush1.bf16.xpose.msra.mxu0 0
        %1045 = vmatprep.subr.bf16.mxu0 0
        %1046 = vmatpush1.bf16.xpose.msra.mxu0 0
        %1047 = vmatprep.subr.bf16.mxu0 0
        %1048 = vmatpush1.bf16.xpose.msra.mxu0 0
        %1049 = vmatprep.mubr.bf16.mxu0 0
        %1050 = vmatmul.mubr.bf16.gmra.mrb[0].mxu0 %v1012
        %v1051 = vpop.f32.mrb[0].mxu0
        %v1052 = vadd.f32 %v649, %v1051
        %v1053 = vpop.f32.mrb[0].mxu0
        %v1054 = vpop.f32.mrb[0].mxu0
        %v1055 = vadd.f32 %v649, %v1054
        %v1056 = vpop.f32.mrb[0].mxu0
        %1057 = vdwg.mxu0
        %v1058 = vsel %vm703, %v955, -inf
        %1059 = vmax.xlane.f32.xlu0 %v1058
        %v1060 = vpop.xlane.xlu0 %1059
        %v1061 = vsel %vm703, %v1001, -inf
        %1062 = vmax.xlane.f32.xlu0 %v1061
        %v1063 = vpop.xlane.xlu0 %1062
        %v1064 = vsel %vm710, %v1052, -inf
        %1065 = vmax.xlane.f32.xlu0 %v1064
        %v1066 = vpop.xlane.xlu0 %1065
        %v1067 = vsel %vm710, %v1055, -inf
        %1068 = vmax.xlane.f32.xlu0 %v1067
        %v1069 = vpop.xlane.xlu0 %1068
        %v1070 = vmax.f32 %v1060, %v1066
        %v1071 = vmax.f32 %v1063, %v1069
        %v1072 = vsub.f32 %v955, %v1070
        %v1073 = vsub.f32 %v1001, %v1071
        %v1074 = vmul.f32 %v1072, 1.442695
        %v1075 = vpow.pop %v1074
        %v1076 = vmul.f32 %v1073, 1.442695
        %v1077 = vpow.pop %v1076
        %v1078 = vsub.f32 %v1052, %v1070
        %v1079 = vsub.f32 %v1055, %v1071
        %v1080 = vmul.f32 %v1078, 1.442695
        %v1081 = vpow.pop %v1080
        %v1082 = vmul.f32 %v1079, 1.442695
        %v1083 = vpow.pop %v1082
        %v1084 = vsel %vm703, %v1075, 0.0
        %1085 = vadd.xlane.f32.xlu0 %v1084
        %v1086 = vpop.xlane.xlu0 %1085
        %v1087 = vsel %vm703, %v1077, 0.0
        %1088 = vadd.xlane.f32.xlu0 %v1087
        %v1089 = vpop.xlane.xlu0 %1088
        %v1090 = vsel %vm710, %v1081, 0.0
        %1091 = vadd.xlane.f32.xlu0 %v1090
        %v1092 = vpop.xlane.xlu0 %1091
        %v1093 = vsel %vm710, %v1083, 0.0
        %1094 = vadd.xlane.f32.xlu0 %v1093
        %v1095 = vpop.xlane.xlu0 %1094
        %v1096 = vadd.f32 %v1086, %v1092
        %v1097 = vadd.f32 %v1089, %v1095
        %v1098 = vrcp.pop %v1096
        %v1099 = vrcp.pop %v1097
        %v1100 = vpack.c.bf16 %v1075, %v1075
        %v1101 = vpack.c.bf16 %v1077, %v1077
        %v1102 = vpack.c.bf16 %v1081, %v1081
        %v1103 = vpack.c.bf16 %v1083, %v1083
        %v1106 = vunpack.c.l.b16 %v1102
        %v1107 = vunpack.c.l.b16 %v1103
        %v1108 = vpack.c.b16 %v1107, %v1106
        %v1110 = vsel %vm710, %v1108, 0
        %v1113 = vsel %vm759, %v913, 0
        %1115 = vmatprep.subr.bf16.mxu0 0
        %1116 = vmatpush1.bf16.msra.mxu0 %v1113
        %1117 = vmatprep.subr.bf16.mxu0 0
        %1118 = vmatpush1.bf16.msra.mxu0 0
        %1119 = vmatprep.subr.bf16.mxu0 0
        %1120 = vmatpush1.bf16.msra.mxu0 0
        %1121 = vmatprep.subr.bf16.mxu0 0
        %1122 = vmatpush1.bf16.msra.mxu0 0
        %1123 = vmatprep.subr.bf16.mxu0 0
        %1124 = vmatpush1.bf16.msra.mxu0 0
        %1125 = vmatprep.subr.bf16.mxu0 0
        %1126 = vmatpush1.bf16.msra.mxu0 0
        %1127 = vmatprep.subr.bf16.mxu0 0
        %1128 = vmatpush1.bf16.msra.mxu0 0
        %1129 = vmatprep.subr.bf16.mxu0 0
        %1130 = vmatpush1.bf16.msra.mxu0 0
        %1131 = vmatprep.subr.bf16.mxu0 0
        %1132 = vmatpush1.bf16.msra.mxu0 0
        %1133 = vmatprep.subr.bf16.mxu0 0
        %1134 = vmatpush1.bf16.msra.mxu0 0
        %1135 = vmatprep.subr.bf16.mxu0 0
        %1136 = vmatpush1.bf16.msra.mxu0 0
        %1137 = vmatprep.subr.bf16.mxu0 0
        %1138 = vmatpush1.bf16.msra.mxu0 0
        %1139 = vmatprep.subr.bf16.mxu0 0
        %1140 = vmatpush1.bf16.msra.mxu0 0
        %1141 = vmatprep.subr.bf16.mxu0 0
        %1142 = vmatpush1.bf16.msra.mxu0 0
        %1143 = vmatprep.subr.bf16.mxu0 0
        %1144 = vmatpush1.bf16.msra.mxu0 0
        %1145 = vmatprep.subr.bf16.mxu0 0
        %1146 = vmatpush1.bf16.msra.mxu0 0
        %1147 = vmatprep.mubr.bf16.mxu0 0
        %1148 = vmatmul.mubr.bf16.gmra.mrb[0].mxu0 %v1110
        %v1149 = vpop.f32.mrb[0].mxu0
        %v1150 = vadd.f32 0.0, %v1149
        %v1151 = vpop.f32.mrb[0].mxu0
        %v1152 = vpop.f32.mrb[0].mxu0
        %v1153 = vadd.f32 0.0, %v1152
        %v1154 = vpop.f32.mrb[0].mxu0
        %1155 = vdwg.mxu0
        %v1157 = vsel %vm703, %v1100, 0
        %v1160 = vsel %vm807, %v908, 0
        %1162 = vmatprep.subr.bf16.mxu0 0
        %1163 = vmatpush1.bf16.msra.mxu0 %v1160
        %1164 = vmatprep.subr.bf16.mxu0 0
        %1165 = vmatpush1.bf16.msra.mxu0 0
        %1166 = vmatprep.subr.bf16.mxu0 0
        %1167 = vmatpush1.bf16.msra.mxu0 0
        %1168 = vmatprep.subr.bf16.mxu0 0
        %1169 = vmatpush1.bf16.msra.mxu0 0
        %1170 = vmatprep.subr.bf16.mxu0 0
        %1171 = vmatpush1.bf16.msra.mxu0 0
        %1172 = vmatprep.subr.bf16.mxu0 0
        %1173 = vmatpush1.bf16.msra.mxu0 0
        %1174 = vmatprep.subr.bf16.mxu0 0
        %1175 = vmatpush1.bf16.msra.mxu0 0
        %1176 = vmatprep.subr.bf16.mxu0 0
        %1177 = vmatpush1.bf16.msra.mxu0 0
        %1178 = vmatprep.subr.bf16.mxu0 0
        %1179 = vmatpush1.bf16.msra.mxu0 0
        %1180 = vmatprep.subr.bf16.mxu0 0
        %1181 = vmatpush1.bf16.msra.mxu0 0
        %1182 = vmatprep.subr.bf16.mxu0 0
        %1183 = vmatpush1.bf16.msra.mxu0 0
        %1184 = vmatprep.subr.bf16.mxu0 0
        %1185 = vmatpush1.bf16.msra.mxu0 0
        %1186 = vmatprep.subr.bf16.mxu0 0
        %1187 = vmatpush1.bf16.msra.mxu0 0
        %1188 = vmatprep.subr.bf16.mxu0 0
        %1189 = vmatpush1.bf16.msra.mxu0 0
        %1190 = vmatprep.subr.bf16.mxu0 0
        %1191 = vmatpush1.bf16.msra.mxu0 0
        %1192 = vmatprep.subr.bf16.mxu0 0
        %1193 = vmatpush1.bf16.msra.mxu0 0
        %1194 = vmatprep.mubr.bf16.mxu0 0
        %1195 = vmatmul.mubr.bf16.gmra.mrb[0].mxu0 %v1157
        %v1196 = vpop.f32.mrb[0].mxu0
        %v1197 = vadd.f32 %v1150, %v1196
        %v1198 = vpop.f32.mrb[0].mxu0
        %v1199 = vpop.f32.mrb[0].mxu0
        %v1200 = vpop.f32.mrb[0].mxu0
        %1201 = vdwg.mxu0
        %v1203 = vsel %vm703, %v1101, 0
        %v1206 = vsel %vm807, %v909, 0
        %1208 = vmatprep.subr.bf16.mxu0 0
        %1209 = vmatpush1.bf16.msra.mxu0 %v1206
        %1210 = vmatprep.subr.bf16.mxu0 0
        %1211 = vmatpush1.bf16.msra.mxu0 0
        %1212 = vmatprep.subr.bf16.mxu0 0
        %1213 = vmatpush1.bf16.msra.mxu0 0
        %1214 = vmatprep.subr.bf16.mxu0 0
        %1215 = vmatpush1.bf16.msra.mxu0 0
        %1216 = vmatprep.subr.bf16.mxu0 0
        %1217 = vmatpush1.bf16.msra.mxu0 0
        %1218 = vmatprep.subr.bf16.mxu0 0
        %1219 = vmatpush1.bf16.msra.mxu0 0
        %1220 = vmatprep.subr.bf16.mxu0 0
        %1221 = vmatpush1.bf16.msra.mxu0 0
        %1222 = vmatprep.subr.bf16.mxu0 0
        %1223 = vmatpush1.bf16.msra.mxu0 0
        %1224 = vmatprep.subr.bf16.mxu0 0
        %1225 = vmatpush1.bf16.msra.mxu0 0
        %1226 = vmatprep.subr.bf16.mxu0 0
        %1227 = vmatpush1.bf16.msra.mxu0 0
        %1228 = vmatprep.subr.bf16.mxu0 0
        %1229 = vmatpush1.bf16.msra.mxu0 0
        %1230 = vmatprep.subr.bf16.mxu0 0
        %1231 = vmatpush1.bf16.msra.mxu0 0
        %1232 = vmatprep.subr.bf16.mxu0 0
        %1233 = vmatpush1.bf16.msra.mxu0 0
        %1234 = vmatprep.subr.bf16.mxu0 0
        %1235 = vmatpush1.bf16.msra.mxu0 0
        %1236 = vmatprep.subr.bf16.mxu0 0
        %1237 = vmatpush1.bf16.msra.mxu0 0
        %1238 = vmatprep.subr.bf16.mxu0 0
        %1239 = vmatpush1.bf16.msra.mxu0 0
        %1240 = vmatprep.mubr.bf16.mxu0 0
        %1241 = vmatmul.mubr.bf16.gmra.mrb[0].mxu0 %v1203
        %v1242 = vpop.f32.mrb[0].mxu0
        %v1243 = vadd.f32 %v1153, %v1242
        %v1244 = vpop.f32.mrb[0].mxu0
        %v1245 = vpop.f32.mrb[0].mxu0
        %v1246 = vpop.f32.mrb[0].mxu0
        %1247 = vdwg.mxu0
        %v1248 = vmul.f32 %v1197, %v1098
        %v1249 = vmul.f32 %v1243, %v1099
        %1252 = vrot.lane.b32.xlu0 %v1248, 16
        %v1253 = vpop.permute.xlu0 %1252
        %1254 = vrot.lane.b32.xlu0 %v1249, 16
        %v1255 = vpop.permute.xlu0 %1254
        %vm1258 = vcmask 261248
        %1259 = vst.msk [vmem:[%s503] sm:$0xff] %vm1258, %v1253
        %1260 = vst.msk [vmem:[%s503 + $0x8] sm:$0xff] %vm1258, %v1255
        %s1261 = sand.u32 %s243, 1
        %s1262 = scalar_lea.sflag [#allocation4], %s1261
        %s1263 = sand.u32 %s243, 1
        %s1264 = smul.addr %s1263, 16
        %s1265 = scalar_lea.vmem [#allocation14], %s1264
        // Predicated region
        $region77: #{tpu_custom_call.1} parent=47 // pred_check
          %p1266 = pneg %p253
        $region78: #{tpu_custom_call.1} parent=47 // pred_check_branch
          %1268 = sbr.rel (%p1266) target = $region80
        $region79: #{tpu_custom_call.1} parent=47 // pred_region
          %s1269 = smul.u32 2, %s36
          %s1271 = ssub.s32 256, 256
          %1272 = vsyncadd %s1262, %s1271
          %s1273 = smul.addr %s35, 2
          %s1274 = sadd.s32 %s1269, %s1273
          %s1275 = smul.addr %s1274, 128
          %s1276 = scalar_lea.hbm %s7, %s1275
          %s1277 = sshll.u32 %s1265, 4
          %s1278 = int_to_ptr.vmem [resolvable:$true] %s1277
          %1283 = dma.vmem_to_hbm [thread:$0]  %s1278, 256, %s1276, %s1262, 128, 128, 8
        $region80: #{tpu_custom_call.1} parent=47 // pred_fallthru
          _
      $region48: #{tpu_custom_call.1} parent=5 // pred_fallthru
        _
      %p1284 = scmp.le.s32.totalorder 2, %s26
      // Predicated region
      $region81: #{tpu_custom_call.1} parent=5 // pred_check
        %p1285 = pneg %p1284
      $region82: #{tpu_custom_call.1} parent=5 // pred_check_branch
        %1287 = sbr.rel (%p1285) target = $region84
      $region83: #{tpu_custom_call.1} parent=5 // pred_region
        %s1288 = ssub.s32 %s26, 2
        // Predicated region
        $region85: #{tpu_custom_call.1} parent=83 // pred_check
          %p1289 = pneg %p259
        $region86: #{tpu_custom_call.1} parent=83 // pred_check_branch
          %1291 = sbr.rel (%p1289) target = $region88
        $region87: #{tpu_custom_call.1} parent=83 // pred_region
          %s1292 = sand.u32 %s244, 1
          %s1293 = scalar_lea.sflag [#allocation4], %s1292
          %s1294 = sand.u32 %s244, 1
          %s1295 = smul.addr %s1294, 16
          %s1296 = scalar_lea.vmem [#allocation14], %s1295
          %1297 = dma.done %s1293, 256
        $region88: #{tpu_custom_call.1} parent=83 // pred_fallthru
          _
      $region84: #{tpu_custom_call.1} parent=5 // pred_fallthru
        _
    $region6: #{tpu_custom_call.1} parent=1 // loop_footer
      %s30 = sadd.s32 1, %s26
    $region7: #{tpu_custom_call.1} parent=1 // loop_footer_branch
      %25 = sbr.rel target = $region3
    $region8: #{tpu_custom_call.1} parent=1 // loop_exit
      _
    %1298 = vsyncpa [#allocation3], 1
    %s1299 = scalar_lea.sflag [#allocation3], 1
    %1300 = vsyncpa %s1299, 1
    %1301 = vsyncpa [#allocation6], 1
    %s1302 = scalar_lea.sflag [#allocation6], 1
    %1303 = vsyncpa %s1302, 1
    %1304 = vsyncpa [#allocation9], 1
    %1305 = vsyncpa [#allocation12], 1
    %s1306 = scalar_lea.sflag [#allocation12], 1
    %1307 = vsyncpa %s1306, 1
    %1308 = vsyncpa [#allocation4], 1
    %s1309 = scalar_lea.sflag [#allocation4], 1
    %1310 = vsyncpa %s1309, 1

// kernel: tpu_custom_call.1
$region0: #{tpu_custom_call.1}
  #allocation0 [shape = 'u32[]', space=smem, size = 0x4, offset = 0x4, fixed_abs, tag = 'smem constant byte address 0x4 - core index']
  #allocation1 [shape = 'u32[144,128]{1,0:T(1,128)}', space=vmem, size = 0x12000, scoped, tag = 'internal scratch']
  %s0 = inlined_call_operand.hbm [shape: bf16[2,2,2,8,16], index: 0, kind: input, shape index: {}]
  %s1 = inlined_call_operand.hbm [shape: bf16[2,2,2,8,16], index: 1, kind: input, shape index: {}]
  %s2 = inlined_call_operand.hbm [shape: bf16[2,2,2,8,16], index: 2, kind: input, shape index: {}]
  %s3 = inlined_call_operand.hbm [shape: bf16[2,2,6,16], index: 3, kind: input, shape index: {}]
  %s4 = inlined_call_operand.hbm [shape: bf16[2,2,6,16], index: 4, kind: input, shape index: {}]
  %s5 = inlined_call_operand.hbm [shape: f32[2,1,2,8], index: 5, kind: input, shape index: {}]
  %s6 = inlined_call_operand.hbm [shape: f32[2,1,6], index: 6, kind: input, shape index: {}]
  %s7 = inlined_call_operand.hbm [shape: f32[2,2,8,32], index: 7, kind: output, shape index: {}]
  %s8 = sld [smem:[#allocation0]]
  $region89: #{tpu_custom_call.1} parent=0
    _
  %s10 = ssub.s32 1, %s8
  %s11 = scalar_select 0, %s10, %s8
  $region1: #{tpu_custom_call.1} parent=0
    #allocation2 [shape = 'u8[16384]{0}', space=vmem, size = 0x4000, scoped, tag = 'input window, operand 0']
    #allocation3 [shape = 's32[2]{0}', space=sflag, size = 0x8, scoped, tag = 'scoped memory for tpu_custom_call.1']
    #allocation4 [shape = 's32[2]{0}', space=sflag, size = 0x8, scoped, tag = 'scoped memory for tpu_custom_call.1']
    #allocation5 [shape = 'u8[16384]{0}', space=vmem, size = 0x4000, scoped, tag = 'input window, operand 1']
    #allocation6 [shape = 's32[2]{0}', space=sflag, size = 0x8, scoped, tag = 'scoped memory for tpu_custom_call.1']
    #allocation7 [shape = 'u8[16384]{0}', space=vmem, size = 0x4000, scoped, tag = 'input window, operand 2']
    #allocation8 [shape = 'u8[8192]{0}', space=vmem, size = 0x2000, scoped, tag = 'input window, operand 3']
    #allocation9 [shape = 's32[2]{0}', space=sflag, size = 0x8, scoped, tag = 'scoped memory for tpu_custom_call.1']
    #allocation10 [shape = 'u8[8192]{0}', space=vmem, size = 0x2000, scoped, tag = 'input window, operand 4']
    #allocation11 [shape = 'u8[2048]{0}', space=vmem, size = 0x800, scoped, tag = 'input window, operand 5']
    #allocation12 [shape = 's32[2]{0}', space=sflag, size = 0x8, scoped, tag = 'scoped memory for tpu_custom_call.1']
    #allocation13 [shape = 'u8[1024]{0}', space=vmem, size = 0x400, scoped, tag = 'input window, operand 6']
    #allocation14 [shape = 'u8[16384]{0}', space=vmem, size = 0x4000, scoped, tag = 'output window, operand 0']
    %12 = vsyncpa [#allocation3], 0
    %s13 = scalar_lea.sflag [#allocation3], 1
    %14 = vsyncpa %s13, 0
    %15 = vsyncpa [#allocation6], 0
    %s16 = scalar_lea.sflag [#allocation6], 1
    %17 = vsyncpa %s16, 0
    %18 = vsyncpa [#allocation9], 0
    %s19 = scalar_lea.sflag [#allocation9], 1
    %20 = vsyncpa %s19, 0
    %21 = vsyncpa [#allocation12], 0
    %s22 = scalar_lea.sflag [#allocation12], 1
    %23 = vsyncpa %s22, 0
    %24 = vsyncpa [#allocation4], 0
    %s25 = scalar_lea.sflag [#allocation4], 1
    %26 = vsyncpa %s25, 0
    loop: start=0, step=1, limit=4
    $region2: #{tpu_custom_call.1} parent=1 // loop_pre_header
      _
    $region3: #{tpu_custom_call.1} parent=1 // loop_header
      %s28 = sphi 0, %s32
      %p29 = scmp.ge.s32.totalorder %s28, 4
      %s35 = sphi 0, %s47
      %s36 = sphi 0, %s43
      %s37 = sphi 0, %s35
      %s38 = sphi 0, %s36
      %s39 = sphi 0, %s37
      %s40 = sphi 0, %s38
      %s52 = sphi 0, %s54
      %s55 = sphi 0, %s52
      %s56 = sphi 0, %s55
      %s72 = sphi 0, %s56
      %s80 = sphi 0, %s82
      %s83 = sphi 0, %s80
      %s84 = sphi 0, %s83
      %s100 = sphi 0, %s84
      %s108 = sphi 0, %s110
      %s111 = sphi 0, %s108
      %s112 = sphi 0, %s111
      %s128 = sphi 0, %s112
      %s134 = sphi 0, %s136
      %s137 = sphi 0, %s134
      %s138 = sphi 0, %s137
      %s154 = sphi 0, %s138
      %s160 = sphi 0, %s162
      %s163 = sphi 0, %s160
      %s164 = sphi 0, %s163
      %s180 = sphi 0, %s164
      %s188 = sphi 0, %s190
      %s191 = sphi 0, %s188
      %s192 = sphi 0, %s191
      %s208 = sphi 0, %s192
      %s214 = sphi 0, %s216
      %s217 = sphi 0, %s214
      %s218 = sphi 0, %s217
      %s234 = sphi 0, %s218
      %s242 = sphi 0, %s244
      %s245 = sphi 0, %s242
      %s246 = sphi 0, %s245
      %s262 = sphi 0, %s246
    $region4: #{tpu_custom_call.1} parent=1 // loop_header_branch
      %31 = sbr.rel (%p29) target = $region8
    $region5: #{tpu_custom_call.1} parent=1 // loop_body
      %s33 = ssub.s32 %s28, 1
      %s34 = ssub.s32 %s28, 2
      %s41 = sadd.s32 1, %s36
      %p42 = scmp.ge.s32.totalorder %s41, 1
      %s43 = scalar_select %p42, 0, %s41
      %s44 = sadd.s32 1, %s35
      %s45 = scalar_select %p42, %s44, %s35
      %p46 = scmp.ge.s32.totalorder %s45, 2
      %s47 = scalar_select %p46, 0, %s45
      %s48 = ssub.s32 %s35, %s47
      %s49 = ssub.s32 %s36, %s43
      %s50 = sor.u32 %s48, %s49
      %p51 = scmp.eq.s32.totalorder %s50, 0
      %s53 = sadd.s32 %s52, 1
      %s54 = scalar_select %p51, %s52, %s53
      %p57 = pneg %p51
      %p58 = scmp.eq.s32.totalorder %s28, 1
      %p59 = por %p57, %p58
      %p60 = scmp.ne.s32.totalorder %s52, %s55
      %p61 = scmp.eq.s32.totalorder %s28, 0
      %p62 = por %p60, %p61
      %p63 = scmp.ne.s32.totalorder %s52, %s55
      %p64 = scmp.eq.s32.totalorder %s33, 1
      %p65 = por %p63, %p64
      %p66 = scmp.ne.s32.totalorder %s55, %s56
      %p67 = scmp.eq.s32.totalorder %s33, 0
      %p68 = por %p66, %p67
      %p69 = scmp.ne.s32.totalorder %s55, %s56
      %p70 = scmp.eq.s32.totalorder %s34, 1
      %p71 = por %p69, %p70
      %p73 = scmp.ne.s32.totalorder %s56, %s72
      %p74 = scmp.eq.s32.totalorder %s34, 0
      %p75 = por %p73, %p74
      %s76 = ssub.s32 %s35, %s47
      %s77 = ssub.s32 %s36, %s43
      %s78 = sor.u32 %s76, %s77
      %p79 = scmp.eq.s32.totalorder %s78, 0
      %s81 = sadd.s32 %s80, 1
      %s82 = scalar_select %p79, %s80, %s81
      %p85 = pneg %p79
      %p86 = scmp.eq.s32.totalorder %s28, 1
      %p87 = por %p85, %p86
      %p88 = scmp.ne.s32.totalorder %s80, %s83
      %p89 = scmp.eq.s32.totalorder %s28, 0
      %p90 = por %p88, %p89
      %p91 = scmp.ne.s32.totalorder %s80, %s83
      %p92 = scmp.eq.s32.totalorder %s33, 1
      %p93 = por %p91, %p92
      %p94 = scmp.ne.s32.totalorder %s83, %s84
      %p95 = scmp.eq.s32.totalorder %s33, 0
      %p96 = por %p94, %p95
      %p97 = scmp.ne.s32.totalorder %s83, %s84
      %p98 = scmp.eq.s32.totalorder %s34, 1
      %p99 = por %p97, %p98
      %p101 = scmp.ne.s32.totalorder %s84, %s100
      %p102 = scmp.eq.s32.totalorder %s34, 0
      %p103 = por %p101, %p102
      %s104 = ssub.s32 %s35, %s47
      %s105 = ssub.s32 %s36, %s43
      %s106 = sor.u32 %s104, %s105
      %p107 = scmp.eq.s32.totalorder %s106, 0
      %s109 = sadd.s32 %s108, 1
      %s110 = scalar_select %p107, %s108, %s109
      %p113 = pneg %p107
      %p114 = scmp.eq.s32.totalorder %s28, 1
      %p115 = por %p113, %p114
      %p116 = scmp.ne.s32.totalorder %s108, %s111
      %p117 = scmp.eq.s32.totalorder %s28, 0
      %p118 = por %p116, %p117
      %p119 = scmp.ne.s32.totalorder %s108, %s111
      %p120 = scmp.eq.s32.totalorder %s33, 1
      %p121 = por %p119, %p120
      %p122 = scmp.ne.s32.totalorder %s111, %s112
      %p123 = scmp.eq.s32.totalorder %s33, 0
      %p124 = por %p122, %p123
      %p125 = scmp.ne.s32.totalorder %s111, %s112
      %p126 = scmp.eq.s32.totalorder %s34, 1
      %p127 = por %p125, %p126
      %p129 = scmp.ne.s32.totalorder %s112, %s128
      %p130 = scmp.eq.s32.totalorder %s34, 0
      %p131 = por %p129, %p130
      %s132 = ssub.s32 %s35, %s47
      %p133 = scmp.eq.s32.totalorder %s132, 0
      %s135 = sadd.s32 %s134, 1
      %s136 = scalar_select %p133, %s134, %s135
      %p139 = pneg %p133
      %p140 = scmp.eq.s32.totalorder %s28, 1
      %p141 = por %p139, %p140
      %p142 = scmp.ne.s32.totalorder %s134, %s137
      %p143 = scmp.eq.s32.totalorder %s28, 0
      %p144 = por %p142, %p143
      %p145 = scmp.ne.s32.totalorder %s134, %s137
      %p146 = scmp.eq.s32.totalorder %s33, 1
      %p147 = por %p145, %p146
      %p148 = scmp.ne.s32.totalorder %s137, %s138
      %p149 = scmp.eq.s32.totalorder %s33, 0
      %p150 = por %p148, %p149
      %p151 = scmp.ne.s32.totalorder %s137, %s138
      %p152 = scmp.eq.s32.totalorder %s34, 1
      %p153 = por %p151, %p152
      %p155 = scmp.ne.s32.totalorder %s138, %s154
      %p156 = scmp.eq.s32.totalorder %s34, 0
      %p157 = por %p155, %p156
      %s158 = ssub.s32 %s35, %s47
      %p159 = scmp.eq.s32.totalorder %s158, 0
      %s161 = sadd.s32 %s160, 1
      %s162 = scalar_select %p159, %s160, %s161
      %p165 = pneg %p159
      %p166 = scmp.eq.s32.totalorder %s28, 1
      %p167 = por %p165, %p166
      %p168 = scmp.ne.s32.totalorder %s160, %s163
      %p169 = scmp.eq.s32.totalorder %s28, 0
      %p170 = por %p168, %p169
      %p171 = scmp.ne.s32.totalorder %s160, %s163
      %p172 = scmp.eq.s32.totalorder %s33, 1
      %p173 = por %p171, %p172
      %p174 = scmp.ne.s32.totalorder %s163, %s164
      %p175 = scmp.eq.s32.totalorder %s33, 0
      %p176 = por %p174, %p175
      %p177 = scmp.ne.s32.totalorder %s163, %s164
      %p178 = scmp.eq.s32.totalorder %s34, 1
      %p179 = por %p177, %p178
      %p181 = scmp.ne.s32.totalorder %s164, %s180
      %p182 = scmp.eq.s32.totalorder %s34, 0
      %p183 = por %p181, %p182
      %s184 = ssub.s32 %s35, %s47
      %s185 = ssub.s32 %s36, %s43
      %s186 = sor.u32 %s184, %s185
      %p187 = scmp.eq.s32.totalorder %s186, 0
      %s189 = sadd.s32 %s188, 1
      %s190 = scalar_select %p187, %s188, %s189
      %p193 = pneg %p187
      %p194 = scmp.eq.s32.totalorder %s28, 1
      %p195 = por %p193, %p194
      %p196 = scmp.ne.s32.totalorder %s188, %s191
      %p197 = scmp.eq.s32.totalorder %s28, 0
      %p198 = por %p196, %p197
      %p199 = scmp.ne.s32.totalorder %s188, %s191
      %p200 = scmp.eq.s32.totalorder %s33, 1
      %p201 = por %p199, %p200
      %p202 = scmp.ne.s32.totalorder %s191, %s192
      %p203 = scmp.eq.s32.totalorder %s33, 0
      %p204 = por %p202, %p203
      %p205 = scmp.ne.s32.totalorder %s191, %s192
      %p206 = scmp.eq.s32.totalorder %s34, 1
      %p207 = por %p205, %p206
      %p209 = scmp.ne.s32.totalorder %s192, %s208
      %p210 = scmp.eq.s32.totalorder %s34, 0
      %p211 = por %p209, %p210
      %s212 = ssub.s32 %s35, %s47
      %p213 = scmp.eq.s32.totalorder %s212, 0
      %s215 = sadd.s32 %s214, 1
      %s216 = scalar_select %p213, %s214, %s215
      %p219 = pneg %p213
      %p220 = scmp.eq.s32.totalorder %s28, 1
      %p221 = por %p219, %p220
      %p222 = scmp.ne.s32.totalorder %s214, %s217
      %p223 = scmp.eq.s32.totalorder %s28, 0
      %p224 = por %p222, %p223
      %p225 = scmp.ne.s32.totalorder %s214, %s217
      %p226 = scmp.eq.s32.totalorder %s33, 1
      %p227 = por %p225, %p226
      %p228 = scmp.ne.s32.totalorder %s217, %s218
      %p229 = scmp.eq.s32.totalorder %s33, 0
      %p230 = por %p228, %p229
      %p231 = scmp.ne.s32.totalorder %s217, %s218
      %p232 = scmp.eq.s32.totalorder %s34, 1
      %p233 = por %p231, %p232
      %p235 = scmp.ne.s32.totalorder %s218, %s234
      %p236 = scmp.eq.s32.totalorder %s34, 0
      %p237 = por %p235, %p236
      %s238 = ssub.s32 %s35, %s47
      %s239 = ssub.s32 %s36, %s43
      %s240 = sor.u32 %s238, %s239
      %p241 = scmp.eq.s32.totalorder %s240, 0
      %s243 = sadd.s32 %s242, 1
      %s244 = scalar_select %p241, %s242, %s243
      %p247 = pneg %p241
      %p248 = scmp.eq.s32.totalorder %s28, 1
      %p249 = por %p247, %p248
      %p250 = scmp.ne.s32.totalorder %s242, %s245
      %p251 = scmp.eq.s32.totalorder %s28, 0
      %p252 = por %p250, %p251
      %p253 = scmp.ne.s32.totalorder %s242, %s245
      %p254 = scmp.eq.s32.totalorder %s33, 1
      %p255 = por %p253, %p254
      %p256 = scmp.ne.s32.totalorder %s245, %s246
      %p257 = scmp.eq.s32.totalorder %s33, 0
      %p258 = por %p256, %p257
      %p259 = scmp.ne.s32.totalorder %s245, %s246
      %p260 = scmp.eq.s32.totalorder %s34, 1
      %p261 = por %p259, %p260
      %p263 = scmp.ne.s32.totalorder %s246, %s262
      %p264 = scmp.eq.s32.totalorder %s34, 0
      %p265 = por %p263, %p264
      %p266 = scmp.le.s32.totalorder 1, %s28
      %p267 = scmp.lt.s32.totalorder %s28, 3
      %p268 = pnand %p266, %p267
      %p269 = pneg %p268
      // Predicated region
      $region9: #{tpu_custom_call.1} parent=5 // pred_check
        _
      $region10: #{tpu_custom_call.1} parent=5 // pred_check_branch
        %271 = sbr.rel (%p268) target = $region12
      $region11: #{tpu_custom_call.1} parent=5 // pred_region
        %s272 = ssub.s32 %s28, 1
      $region12: #{tpu_custom_call.1} parent=5 // pred_fallthru
        _
      %p273 = scmp.lt.s32.totalorder %s28, 2
      // Predicated region
      $region13: #{tpu_custom_call.1} parent=5 // pred_check
        %p274 = pneg %p273
      $region14: #{tpu_custom_call.1} parent=5 // pred_check_branch
        %276 = sbr.rel (%p274) target = $region16
      $region15: #{tpu_custom_call.1} parent=5 // pred_region
        // Predicated region
        $region17: #{tpu_custom_call.1} parent=15 // pred_check
          %p277 = pneg %p62
        $region18: #{tpu_custom_call.1} parent=15 // pred_check_branch
          %279 = sbr.rel (%p277) target = $region20
        $region19: #{tpu_custom_call.1} parent=15 // pred_region
          %s280 = sand.u32 %s52, 1
          %s281 = scalar_lea.sflag [#allocation3], %s280
          %s282 = sand.u32 %s52, 1
          %s283 = smul.addr %s282, 16
          %s284 = scalar_lea.vmem [#allocation2], %s283
          %s285 = smul.u32 2, %s36
          %s287 = ssub.s32 256, 256
          %288 = vsyncadd %s281, %s287
          %s289 = smul.addr %s35, 4
          %s290 = sadd.s32 %s285, %s289
          %s291 = smul.addr %s290, 64
          %s292 = scalar_lea.hbm %s0, %s291
          %s293 = sshll.u32 %s284, 4
          %s294 = int_to_ptr.vmem [resolvable:$true] %s293
          %299 = dma.hbm_to_vmem [thread:$0]  %s292, 256, %s294, %s281, 64, 64, 4
        $region20: #{tpu_custom_call.1} parent=15 // pred_fallthru
          _
        // Predicated region
        $region21: #{tpu_custom_call.1} parent=15 // pred_check
          %p300 = pneg %p90
        $region22: #{tpu_custom_call.1} parent=15 // pred_check_branch
          %302 = sbr.rel (%p300) target = $region24
        $region23: #{tpu_custom_call.1} parent=15 // pred_region
          %s303 = sand.u32 %s28, 1
          %s304 = scalar_lea.sflag [#allocation6], %s303
          %s305 = sand.u32 %s80, 1
          %s306 = smul.addr %s305, 16
          %s307 = scalar_lea.vmem [#allocation5], %s306
          %s308 = smul.u32 2, %s36
          %s310 = ssub.s32 256, 256
          %311 = vsyncadd %s304, %s310
          %s312 = smul.addr %s35, 4
          %s313 = sadd.s32 %s308, %s312
          %s314 = smul.addr %s313, 64
          %s315 = scalar_lea.hbm %s1, %s314
          %s316 = sshll.u32 %s307, 4
          %s317 = int_to_ptr.vmem [resolvable:$true] %s316
          %322 = dma.hbm_to_vmem [thread:$0]  %s315, 256, %s317, %s304, 64, 64, 4
        $region24: #{tpu_custom_call.1} parent=15 // pred_fallthru
          _
        // Predicated region
        $region25: #{tpu_custom_call.1} parent=15 // pred_check
          %p323 = pneg %p118
        $region26: #{tpu_custom_call.1} parent=15 // pred_check_branch
          %325 = sbr.rel (%p323) target = $region28
        $region27: #{tpu_custom_call.1} parent=15 // pred_region
          %s326 = sand.u32 %s28, 1
          %s327 = scalar_lea.sflag [#allocation6], %s326
          %s328 = sand.u32 %s108, 1
          %s329 = smul.addr %s328, 16
          %s330 = scalar_lea.vmem [#allocation7], %s329
          %s331 = smul.u32 2, %s36
          %s333 = ssub.s32 256, 256
          %334 = vsyncadd %s327, %s333
          %s335 = smul.addr %s35, 4
          %s336 = sadd.s32 %s331, %s335
          %s337 = smul.addr %s336, 64
          %s338 = scalar_lea.hbm %s2, %s337
          %s339 = sshll.u32 %s330, 4
          %s340 = int_to_ptr.vmem [resolvable:$true] %s339
          %345 = dma.hbm_to_vmem [thread:$0]  %s338, 256, %s340, %s327, 64, 64, 4
        $region28: #{tpu_custom_call.1} parent=15 // pred_fallthru
          _
        // Predicated region
        $region29: #{tpu_custom_call.1} parent=15 // pred_check
          %p346 = pneg %p144
        $region30: #{tpu_custom_call.1} parent=15 // pred_check_branch
          %348 = sbr.rel (%p346) target = $region32
        $region31: #{tpu_custom_call.1} parent=15 // pred_region
          %s349 = sand.u32 %s28, 1
          %s350 = scalar_lea.sflag [#allocation9], %s349
          %s351 = sand.u32 %s134, 1
          %s352 = smul.addr %s351, 8
          %s353 = scalar_lea.vmem [#allocation8], %s352
          %s355 = ssub.s32 128, 128
          %356 = vsyncadd %s350, %s355
          %s357 = smul.addr %s35, 2
          %s358 = smul.addr %s357, 64
          %s359 = scalar_lea.hbm %s3, %s358
          %s360 = sshll.u32 %s353, 4
          %s361 = int_to_ptr.vmem [resolvable:$true] %s360
          %366 = dma.hbm_to_vmem [thread:$0]  %s359, 128, %s361, %s350, 64, 64, 4
        $region32: #{tpu_custom_call.1} parent=15 // pred_fallthru
          _
        // Predicated region
        $region33: #{tpu_custom_call.1} parent=15 // pred_check
          %p367 = pneg %p170
        $region34: #{tpu_custom_call.1} parent=15 // pred_check_branch
          %369 = sbr.rel (%p367) target = $region36
        $region35: #{tpu_custom_call.1} parent=15 // pred_region
          %s370 = sand.u32 %s28, 1
          %s371 = scalar_lea.sflag [#allocation9], %s370
          %s372 = sand.u32 %s160, 1
          %s373 = smul.addr %s372, 8
          %s374 = scalar_lea.vmem [#allocation10], %s373
          %s376 = ssub.s32 128, 128
          %377 = vsyncadd %s371, %s376
          %s378 = smul.addr %s35, 2
          %s379 = smul.addr %s378, 64
          %s380 = scalar_lea.hbm %s4, %s379
          %s381 = sshll.u32 %s374, 4
          %s382 = int_to_ptr.vmem [resolvable:$true] %s381
          %387 = dma.hbm_to_vmem [thread:$0]  %s380, 128, %s382, %s371, 64, 64, 4
        $region36: #{tpu_custom_call.1} parent=15 // pred_fallthru
          _
        // Predicated region
        $region37: #{tpu_custom_call.1} parent=15 // pred_check
          %p388 = pneg %p198
        $region38: #{tpu_custom_call.1} parent=15 // pred_check_branch
          %390 = sbr.rel (%p388) target = $region40
        $region39: #{tpu_custom_call.1} parent=15 // pred_region
          %s391 = sand.u32 %s28, 1
          %s392 = scalar_lea.sflag [#allocation12], %s391
          %s393 = sand.u32 %s188, 1
          %s394 = smul.addr %s393, 2
          %s395 = scalar_lea.vmem [#allocation11], %s394
          %s397 = ssub.s32 32, 32
          %398 = vsyncadd %s392, %s397
          %s399 = sadd.s32 %s36, %s35
          %s400 = smul.addr %s399, 32
          %s401 = scalar_lea.hbm %s5, %s400
          %s403 = sshll.u32 %s395, 4
          %s404 = int_to_ptr.vmem [resolvable:$true] %s403
          %406 = dma.hbm_to_vmem [thread:$0]  %s401, 32, %s404, %s392
        $region40: #{tpu_custom_call.1} parent=15 // pred_fallthru
          _
        // Predicated region
        $region41: #{tpu_custom_call.1} parent=15 // pred_check
          %p407 = pneg %p224
        $region42: #{tpu_custom_call.1} parent=15 // pred_check_branch
          %409 = sbr.rel (%p407) target = $region44
        $region43: #{tpu_custom_call.1} parent=15 // pred_region
          %s410 = sand.u32 %s28, 1
          %s411 = scalar_lea.sflag [#allocation12], %s410
          %s412 = sand.u32 %s214, 1
          %s413 = scalar_lea.vmem [#allocation13], %s412
          %s415 = ssub.s32 16, 16
          %416 = vsyncadd %s411, %s415
          %s417 = smul.addr %s35, 16
          %s418 = scalar_lea.hbm %s6, %s417
          %s420 = sshll.u32 %s413, 4
          %s421 = int_to_ptr.vmem [resolvable:$true] %s420
          %423 = dma.hbm_to_vmem [thread:$0]  %s418, 16, %s421, %s411
        $region44: #{tpu_custom_call.1} parent=15 // pred_fallthru
          _
      $region16: #{tpu_custom_call.1} parent=5 // pred_fallthru
        _
      %p424 = scmp.le.s32.totalorder 1, %s28
      %p425 = scmp.lt.s32.totalorder %s28, 3
      %p426 = pnand %p424, %p425
      %p427 = pneg %p426
      // Predicated region
      $region45: #{tpu_custom_call.1} parent=5 // pred_check
        _
      $region46: #{tpu_custom_call.1} parent=5 // pred_check_branch
        %429 = sbr.rel (%p426) target = $region48
      $region47: #{tpu_custom_call.1} parent=5 // pred_region
        %s430 = ssub.s32 %s28, 1
        %s431 = sand.u32 %s55, 1
        %s432 = scalar_lea.sflag [#allocation3], %s431
        %s433 = sand.u32 %s55, 1
        %s434 = smul.addr %s433, 16
        %s435 = scalar_lea.vmem [#allocation2], %s434
        // Predicated region
        $region49: #{tpu_custom_call.1} parent=47 // pred_check
          %p436 = pneg %p68
        $region50: #{tpu_custom_call.1} parent=47 // pred_check_branch
          %438 = sbr.rel (%p436) target = $region52
        $region51: #{tpu_custom_call.1} parent=47 // pred_region
          %439 = dma.done %s432, 256
        $region52: #{tpu_custom_call.1} parent=47 // pred_fallthru
          _
        %s440 = sand.u32 %s33, 1
        %s441 = scalar_lea.sflag [#allocation6], %s440
        %s442 = sand.u32 %s83, 1
        %s443 = smul.addr %s442, 16
        %s444 = scalar_lea.vmem [#allocation5], %s443
        // Predicated region
        $region53: #{tpu_custom_call.1} parent=47 // pred_check
          %p445 = pneg %p96
        $region54: #{tpu_custom_call.1} parent=47 // pred_check_branch
          %447 = sbr.rel (%p445) target = $region56
        $region55: #{tpu_custom_call.1} parent=47 // pred_region
          %448 = dma.done %s441, 256
        $region56: #{tpu_custom_call.1} parent=47 // pred_fallthru
          _
        %s449 = sand.u32 %s33, 1
        %s450 = scalar_lea.sflag [#allocation6], %s449
        %s451 = sand.u32 %s111, 1
        %s452 = smul.addr %s451, 16
        %s453 = scalar_lea.vmem [#allocation7], %s452
        // Predicated region
        $region57: #{tpu_custom_call.1} parent=47 // pred_check
          %p454 = pneg %p124
        $region58: #{tpu_custom_call.1} parent=47 // pred_check_branch
          %456 = sbr.rel (%p454) target = $region60
        $region59: #{tpu_custom_call.1} parent=47 // pred_region
          %457 = dma.done %s450, 256
        $region60: #{tpu_custom_call.1} parent=47 // pred_fallthru
          _
        %s458 = sand.u32 %s33, 1
        %s459 = scalar_lea.sflag [#allocation9], %s458
        %s460 = sand.u32 %s137, 1
        %s461 = smul.addr %s460, 8
        %s462 = scalar_lea.vmem [#allocation8], %s461
        // Predicated region
        $region61: #{tpu_custom_call.1} parent=47 // pred_check
          %p463 = pneg %p150
        $region62: #{tpu_custom_call.1} parent=47 // pred_check_branch
          %465 = sbr.rel (%p463) target = $region64
        $region63: #{tpu_custom_call.1} parent=47 // pred_region
          %466 = dma.done %s459, 128
        $region64: #{tpu_custom_call.1} parent=47 // pred_fallthru
          _
        %s467 = sand.u32 %s33, 1
        %s468 = scalar_lea.sflag [#allocation9], %s467
        %s469 = sand.u32 %s163, 1
        %s470 = smul.addr %s469, 8
        %s471 = scalar_lea.vmem [#allocation10], %s470
        // Predicated region
        $region65: #{tpu_custom_call.1} parent=47 // pred_check
          %p472 = pneg %p176
        $region66: #{tpu_custom_call.1} parent=47 // pred_check_branch
          %474 = sbr.rel (%p472) target = $region68
        $region67: #{tpu_custom_call.1} parent=47 // pred_region
          %475 = dma.done %s468, 128
        $region68: #{tpu_custom_call.1} parent=47 // pred_fallthru
          _
        %s476 = sand.u32 %s33, 1
        %s477 = scalar_lea.sflag [#allocation12], %s476
        %s478 = sand.u32 %s191, 1
        %s479 = smul.addr %s478, 2
        %s480 = scalar_lea.vmem [#allocation11], %s479
        // Predicated region
        $region69: #{tpu_custom_call.1} parent=47 // pred_check
          %p481 = pneg %p204
        $region70: #{tpu_custom_call.1} parent=47 // pred_check_branch
          %483 = sbr.rel (%p481) target = $region72
        $region71: #{tpu_custom_call.1} parent=47 // pred_region
          %484 = dma.done %s477, 32
        $region72: #{tpu_custom_call.1} parent=47 // pred_fallthru
          _
        %s485 = sand.u32 %s33, 1
        %s486 = scalar_lea.sflag [#allocation12], %s485
        %s487 = sand.u32 %s217, 1
        %s488 = scalar_lea.vmem [#allocation13], %s487
        // Predicated region
        $region73: #{tpu_custom_call.1} parent=47 // pred_check
          %p489 = pneg %p230
        $region74: #{tpu_custom_call.1} parent=47 // pred_check_branch
          %491 = sbr.rel (%p489) target = $region76
        $region75: #{tpu_custom_call.1} parent=47 // pred_region
          %492 = dma.done %s486, 16
        $region76: #{tpu_custom_call.1} parent=47 // pred_fallthru
          _
        %s493 = sand.u32 %s55, 1
        %s494 = scalar_lea.sflag [#allocation3], %s493
        %s495 = sand.u32 %s55, 1
        %s496 = smul.addr %s495, 16
        %s497 = scalar_lea.vmem [#allocation2], %s496
        %p498 = pneg %p68
        %p499 = pneg %p65
        %s500 = sand.u32 %s33, 1
        %s501 = scalar_lea.sflag [#allocation6], %s500
        %s502 = sand.u32 %s83, 1
        %s503 = smul.addr %s502, 16
        %s504 = scalar_lea.vmem [#allocation5], %s503
        %p505 = pneg %p96
        %p506 = pneg %p93
        %s507 = sand.u32 %s33, 1
        %s508 = scalar_lea.sflag [#allocation6], %s507
        %s509 = sand.u32 %s111, 1
        %s510 = smul.addr %s509, 16
        %s511 = scalar_lea.vmem [#allocation7], %s510
        %p512 = pneg %p124
        %p513 = pneg %p121
        %s514 = sand.u32 %s33, 1
        %s515 = scalar_lea.sflag [#allocation9], %s514
        %s516 = sand.u32 %s137, 1
        %s517 = smul.addr %s516, 8
        %s518 = scalar_lea.vmem [#allocation8], %s517
        %p519 = pneg %p150
        %p520 = pneg %p147
        %s521 = sand.u32 %s33, 1
        %s522 = scalar_lea.sflag [#allocation9], %s521
        %s523 = sand.u32 %s163, 1
        %s524 = smul.addr %s523, 8
        %s525 = scalar_lea.vmem [#allocation10], %s524
        %p526 = pneg %p176
        %p527 = pneg %p173
        %s528 = sand.u32 %s33, 1
        %s529 = scalar_lea.sflag [#allocation12], %s528
        %s530 = sand.u32 %s191, 1
        %s531 = smul.addr %s530, 2
        %s532 = scalar_lea.vmem [#allocation11], %s531
        %p533 = pneg %p204
        %p534 = pneg %p201
        %s535 = sand.u32 %s33, 1
        %s536 = scalar_lea.sflag [#allocation12], %s535
        %s537 = sand.u32 %s217, 1
        %s538 = scalar_lea.vmem [#allocation13], %s537
        %p539 = pneg %p230
        %p540 = pneg %p227
        %p541 = pneg %p258
        %p542 = pneg %p255
        %s543 = sand.u32 %s245, 1
        %s544 = scalar_lea.sflag [#allocation4], %s543
        %s545 = sand.u32 %s245, 1
        %s546 = smul.addr %s545, 16
        %s547 = scalar_lea.vmem [#allocation14], %s546
        %s548 = smul.u32 2, %s38
        %s549 = smul.u32 2, %s38
        %s550 = smul.u32 2, %s38
        %s551 = smul.u32 2, %s38
        %v553 = vld [vmem:[%s480] sm:$0x3]
        %v556 = vunpack.c.l.s4 1966171168
        %v557 = vunpack.c.0.s8 %v556
        %v558 = vlaneseq
        %v559 = vshrl.u32 %v558, 7
        %v560 = vsub.s32 %v557, %v559
        %v561 = vrot.slane %v553, %v560
        %v562 = vcombine.high %v561, %v561
        %v564 = vunpack.c.l.s4 1966171168
        %v565 = vunpack.c.0.s8 %v564
        %v566 = vlaneseq
        %v567 = vshrl.u32 %v566, 7
        %v568 = vsub.s32 %v565, %v567
        %v569 = vrot.slane %v561, %v568
        %v571 = vunpack.c.l.s4 1966171168
        %v572 = vunpack.c.0.s8 %v571
        %v573 = vlaneseq
        %v574 = vshrl.u32 %v573, 7
        %v575 = vsub.s32 %v572, %v574
        %v576 = vrot.slane %v562, %v575
        %v577 = vld [vmem:[%s488] sm:$0x1]
        %v578 = vld [vmem:[%s435] sm:$0xf]
        %v579 = vld [vmem:[%s435 + $0x4] sm:$0xf]
        %v580 = vld [vmem:[%s444] sm:$0xf]
        %v581 = vld [vmem:[%s444 + $0x4] sm:$0xf]
        %v582 = vld [vmem:[%s453] sm:$0xf]
        %v583 = vld [vmem:[%s453 + $0x4] sm:$0xf]
        %v584 = vld [vmem:[%s462] sm:$0x7]
        %v585 = vld [vmem:[%s471] sm:$0x7]
        %v586 = vlaneseq
        %v587 = vshrl.u32 %v586, 7
        %v588 = vsub.s32 0, %v587
        %v589 = vrot.slane %v569, %v588
        %v590 = vlaneseq
        %v591 = vshrl.u32 %v590, 7
        %v592 = vsub.s32 0, %v591
        %v593 = vrot.slane %v576, %v592
        %vm596 = vcmask 130048
        %v598 = vsel %vm596, %v578, 0
        %v601 = vsel %vm596, %v580, 0
        %603 = vmatprep.subr.bf16.mxu0 0
        %604 = vmatpush1.bf16.xpose.msra.mxu0 %v601
        %605 = vmatprep.subr.bf16.mxu0 0
        %606 = vmatpush1.bf16.xpose.msra.mxu0 0
        %607 = vmatprep.subr.bf16.mxu0 0
        %608 = vmatpush1.bf16.xpose.msra.mxu0 0
        %609 = vmatprep.subr.bf16.mxu0 0
        %610 = vmatpush1.bf16.xpose.msra.mxu0 0
        %611 = vmatprep.subr.bf16.mxu0 0
        %612 = vmatpush1.bf16.xpose.msra.mxu0 0
        %613 = vmatprep.subr.bf16.mxu0 0
        %614 = vmatpush1.bf16.xpose.msra.mxu0 0
        %615 = vmatprep.subr.bf16.mxu0 0
        %616 = vmatpush1.bf16.xpose.msra.mxu0 0
        %617 = vmatprep.subr.bf16.mxu0 0
        %618 = vmatpush1.bf16.xpose.msra.mxu0 0
        %619 = vmatprep.subr.bf16.mxu0 0
        %620 = vmatpush1.bf16.xpose.msra.mxu0 0
        %621 = vmatprep.subr.bf16.mxu0 0
        %622 = vmatpush1.bf16.xpose.msra.mxu0 0
        %623 = vmatprep.subr.bf16.mxu0 0
        %624 = vmatpush1.bf16.xpose.msra.mxu0 0
        %625 = vmatprep.subr.bf16.mxu0 0
        %626 = vmatpush1.bf16.xpose.msra.mxu0 0
        %627 = vmatprep.subr.bf16.mxu0 0
        %628 = vmatpush1.bf16.xpose.msra.mxu0 0
        %629 = vmatprep.subr.bf16.mxu0 0
        %630 = vmatpush1.bf16.xpose.msra.mxu0 0
        %631 = vmatprep.subr.bf16.mxu0 0
        %632 = vmatpush1.bf16.xpose.msra.mxu0 0
        %633 = vmatprep.subr.bf16.mxu0 0
        %634 = vmatpush1.bf16.xpose.msra.mxu0 0
        %635 = vmatprep.mubr.bf16.mxu0 0
        %636 = vmatmul.mubr.bf16.gmra.mrb[0].mxu0 %v598
        %v637 = vpop.f32.mrb[0].mxu0
        %v638 = vadd.f32 %v589, %v637
        %v639 = vpop.f32.mrb[0].mxu0
        %v640 = vpop.f32.mrb[0].mxu0
        %v641 = vpop.f32.mrb[0].mxu0
        %642 = vdwg.mxu0
        %v644 = vsel %vm596, %v579, 0
        %v647 = vsel %vm596, %v581, 0
        %649 = vmatprep.subr.bf16.mxu0 0
        %650 = vmatpush1.bf16.xpose.msra.mxu0 %v647
        %651 = vmatprep.subr.bf16.mxu0 0
        %652 = vmatpush1.bf16.xpose.msra.mxu0 0
        %653 = vmatprep.subr.bf16.mxu0 0
        %654 = vmatpush1.bf16.xpose.msra.mxu0 0
        %655 = vmatprep.subr.bf16.mxu0 0
        %656 = vmatpush1.bf16.xpose.msra.mxu0 0
        %657 = vmatprep.subr.bf16.mxu0 0
        %658 = vmatpush1.bf16.xpose.msra.mxu0 0
        %659 = vmatprep.subr.bf16.mxu0 0
        %660 = vmatpush1.bf16.xpose.msra.mxu0 0
        %661 = vmatprep.subr.bf16.mxu0 0
        %662 = vmatpush1.bf16.xpose.msra.mxu0 0
        %663 = vmatprep.subr.bf16.mxu0 0
        %664 = vmatpush1.bf16.xpose.msra.mxu0 0
        %665 = vmatprep.subr.bf16.mxu0 0
        %666 = vmatpush1.bf16.xpose.msra.mxu0 0
        %667 = vmatprep.subr.bf16.mxu0 0
        %668 = vmatpush1.bf16.xpose.msra.mxu0 0
        %669 = vmatprep.subr.bf16.mxu0 0
        %670 = vmatpush1.bf16.xpose.msra.mxu0 0
        %671 = vmatprep.subr.bf16.mxu0 0
        %672 = vmatpush1.bf16.xpose.msra.mxu0 0
        %673 = vmatprep.subr.bf16.mxu0 0
        %674 = vmatpush1.bf16.xpose.msra.mxu0 0
        %675 = vmatprep.subr.bf16.mxu0 0
        %676 = vmatpush1.bf16.xpose.msra.mxu0 0
        %677 = vmatprep.subr.bf16.mxu0 0
        %678 = vmatpush1.bf16.xpose.msra.mxu0 0
        %679 = vmatprep.subr.bf16.mxu0 0
        %680 = vmatpush1.bf16.xpose.msra.mxu0 0
        %681 = vmatprep.mubr.bf16.mxu0 0
        %682 = vmatmul.mubr.bf16.gmra.mrb[0].mxu0 %v644
        %v683 = vpop.f32.mrb[0].mxu0
        %v684 = vadd.f32 %v593, %v683
        %v685 = vpop.f32.mrb[0].mxu0
        %v686 = vpop.f32.mrb[0].mxu0
        %v687 = vpop.f32.mrb[0].mxu0
        %688 = vdwg.mxu0
        %v690 = vlaneseq
        %v691 = vshrl.u32 %v690, 7
        %v692 = vsub.s32 0, %v691
        %v693 = vrot.slane %v577, %v692
        %v697 = vunpack.c.l.b16 %v578
        %v698 = vunpack.c.l.b16 %v579
        %v699 = vpack.c.b16 %v698, %v697
        %v701 = vsel %vm596, %v699, 0
        %v704 = vsel %vm596, %v584, 0
        %706 = vmatprep.subr.bf16.mxu0 0
        %707 = vmatpush1.bf16.xpose.msra.mxu0 %v704
        %708 = vmatprep.subr.bf16.mxu0 0
        %709 = vmatpush1.bf16.xpose.msra.mxu0 0
        %710 = vmatprep.subr.bf16.mxu0 0
        %711 = vmatpush1.bf16.xpose.msra.mxu0 0
        %712 = vmatprep.subr.bf16.mxu0 0
        %713 = vmatpush1.bf16.xpose.msra.mxu0 0
        %714 = vmatprep.subr.bf16.mxu0 0
        %715 = vmatpush1.bf16.xpose.msra.mxu0 0
        %716 = vmatprep.subr.bf16.mxu0 0
        %717 = vmatpush1.bf16.xpose.msra.mxu0 0
        %718 = vmatprep.subr.bf16.mxu0 0
        %719 = vmatpush1.bf16.xpose.msra.mxu0 0
        %720 = vmatprep.subr.bf16.mxu0 0
        %721 = vmatpush1.bf16.xpose.msra.mxu0 0
        %722 = vmatprep.subr.bf16.mxu0 0
        %723 = vmatpush1.bf16.xpose.msra.mxu0 0
        %724 = vmatprep.subr.bf16.mxu0 0
        %725 = vmatpush1.bf16.xpose.msra.mxu0 0
        %726 = vmatprep.subr.bf16.mxu0 0
        %727 = vmatpush1.bf16.xpose.msra.mxu0 0
        %728 = vmatprep.subr.bf16.mxu0 0
        %729 = vmatpush1.bf16.xpose.msra.mxu0 0
        %730 = vmatprep.subr.bf16.mxu0 0
        %731 = vmatpush1.bf16.xpose.msra.mxu0 0
        %732 = vmatprep.subr.bf16.mxu0 0
        %733 = vmatpush1.bf16.xpose.msra.mxu0 0
        %734 = vmatprep.subr.bf16.mxu0 0
        %735 = vmatpush1.bf16.xpose.msra.mxu0 0
        %736 = vmatprep.subr.bf16.mxu0 0
        %737 = vmatpush1.bf16.xpose.msra.mxu0 0
        %738 = vmatprep.mubr.bf16.mxu0 0
        %739 = vmatmul.mubr.bf16.gmra.mrb[0].mxu0 %v701
        %v740 = vpop.f32.mrb[0].mxu0
        %v741 = vadd.f32 %v693, %v740
        %v742 = vpop.f32.mrb[0].mxu0
        %v743 = vpop.f32.mrb[0].mxu0
        %v744 = vadd.f32 %v693, %v743
        %v745 = vpop.f32.mrb[0].mxu0
        %746 = vdwg.mxu0
        %vm747 = vcmask 64512
        %v748 = vsel %vm747, %v638, -inf
        %749 = vmax.xlane.f32.xlu0 %v748
        %v750 = vpop.xlane.xlu0 %749
        %v751 = vsel %vm747, %v684, -inf
        %752 = vmax.xlane.f32.xlu0 %v751
        %v753 = vpop.xlane.xlu0 %752
        %vm754 = vcmask 48128
        %v755 = vsel %vm754, %v741, -inf
        %756 = vmax.xlane.f32.xlu0 %v755
        %v757 = vpop.xlane.xlu0 %756
        %v758 = vsel %vm754, %v744, -inf
        %759 = vmax.xlane.f32.xlu0 %v758
        %v760 = vpop.xlane.xlu0 %759
        %v761 = vmax.f32 %v750, %v757
        %v762 = vmax.f32 %v753, %v760
        %v763 = vsub.f32 %v638, %v761
        %v764 = vsub.f32 %v684, %v762
        %v765 = vmul.f32 %v763, 1.442695
        %v766 = vpow.pop %v765
        %v767 = vmul.f32 %v764, 1.442695
        %v768 = vpow.pop %v767
        %v769 = vsub.f32 %v741, %v761
        %v770 = vsub.f32 %v744, %v762
        %v771 = vmul.f32 %v769, 1.442695
        %v772 = vpow.pop %v771
        %v773 = vmul.f32 %v770, 1.442695
        %v774 = vpow.pop %v773
        %v775 = vsel %vm747, %v766, 0.0
        %776 = vadd.xlane.f32.xlu0 %v775
        %v777 = vpop.xlane.xlu0 %776
        %v778 = vsel %vm747, %v768, 0.0
        %779 = vadd.xlane.f32.xlu0 %v778
        %v780 = vpop.xlane.xlu0 %779
        %v781 = vsel %vm754, %v772, 0.0
        %782 = vadd.xlane.f32.xlu0 %v781
        %v783 = vpop.xlane.xlu0 %782
        %v784 = vsel %vm754, %v774, 0.0
        %785 = vadd.xlane.f32.xlu0 %v784
        %v786 = vpop.xlane.xlu0 %785
        %v787 = vadd.f32 %v777, %v783
        %v788 = vadd.f32 %v780, %v786
        %v789 = vrcp.pop %v787
        %v790 = vrcp.pop %v788
        %v791 = vpack.c.bf16 %v766, %v766
        %v792 = vpack.c.bf16 %v768, %v768
        %v793 = vpack.c.bf16 %v772, %v772
        %v794 = vpack.c.bf16 %v774, %v774
        %v797 = vunpack.c.l.b16 %v793
        %v798 = vunpack.c.l.b16 %v794
        %v799 = vpack.c.b16 %v798, %v797
        %v801 = vsel %vm754, %v799, 0
        %vm803 = vcmask 1042432
        %v805 = vsel %vm803, %v585, 0
        %807 = vmatprep.subr.bf16.mxu0 0
        %808 = vmatpush1.bf16.msra.mxu0 %v805
        %809 = vmatprep.subr.bf16.mxu0 0
        %810 = vmatpush1.bf16.msra.mxu0 0
        %811 = vmatprep.subr.bf16.mxu0 0
        %812 = vmatpush1.bf16.msra.mxu0 0
        %813 = vmatprep.subr.bf16.mxu0 0
        %814 = vmatpush1.bf16.msra.mxu0 0
        %815 = vmatprep.subr.bf16.mxu0 0
        %816 = vmatpush1.bf16.msra.mxu0 0
        %817 = vmatprep.subr.bf16.mxu0 0
        %818 = vmatpush1.bf16.msra.mxu0 0
        %819 = vmatprep.subr.bf16.mxu0 0
        %820 = vmatpush1.bf16.msra.mxu0 0
        %821 = vmatprep.subr.bf16.mxu0 0
        %822 = vmatpush1.bf16.msra.mxu0 0
        %823 = vmatprep.subr.bf16.mxu0 0
        %824 = vmatpush1.bf16.msra.mxu0 0
        %825 = vmatprep.subr.bf16.mxu0 0
        %826 = vmatpush1.bf16.msra.mxu0 0
        %827 = vmatprep.subr.bf16.mxu0 0
        %828 = vmatpush1.bf16.msra.mxu0 0
        %829 = vmatprep.subr.bf16.mxu0 0
        %830 = vmatpush1.bf16.msra.mxu0 0
        %831 = vmatprep.subr.bf16.mxu0 0
        %832 = vmatpush1.bf16.msra.mxu0 0
        %833 = vmatprep.subr.bf16.mxu0 0
        %834 = vmatpush1.bf16.msra.mxu0 0
        %835 = vmatprep.subr.bf16.mxu0 0
        %836 = vmatpush1.bf16.msra.mxu0 0
        %837 = vmatprep.subr.bf16.mxu0 0
        %838 = vmatpush1.bf16.msra.mxu0 0
        %839 = vmatprep.mubr.bf16.mxu0 0
        %840 = vmatmul.mubr.bf16.gmra.mrb[0].mxu0 %v801
        %v841 = vpop.f32.mrb[0].mxu0
        %v842 = vadd.f32 0.0, %v841
        %v843 = vpop.f32.mrb[0].mxu0
        %v844 = vpop.f32.mrb[0].mxu0
        %v845 = vadd.f32 0.0, %v844
        %v846 = vpop.f32.mrb[0].mxu0
        %847 = vdwg.mxu0
        %v849 = vsel %vm747, %v791, 0
        %vm851 = vcmask 1043456
        %v853 = vsel %vm851, %v582, 0
        %855 = vmatprep.subr.bf16.mxu0 0
        %856 = vmatpush1.bf16.msra.mxu0 %v853
        %857 = vmatprep.subr.bf16.mxu0 0
        %858 = vmatpush1.bf16.msra.mxu0 0
        %859 = vmatprep.subr.bf16.mxu0 0
        %860 = vmatpush1.bf16.msra.mxu0 0
        %861 = vmatprep.subr.bf16.mxu0 0
        %862 = vmatpush1.bf16.msra.mxu0 0
        %863 = vmatprep.subr.bf16.mxu0 0
        %864 = vmatpush1.bf16.msra.mxu0 0
        %865 = vmatprep.subr.bf16.mxu0 0
        %866 = vmatpush1.bf16.msra.mxu0 0
        %867 = vmatprep.subr.bf16.mxu0 0
        %868 = vmatpush1.bf16.msra.mxu0 0
        %869 = vmatprep.subr.bf16.mxu0 0
        %870 = vmatpush1.bf16.msra.mxu0 0
        %871 = vmatprep.subr.bf16.mxu0 0
        %872 = vmatpush1.bf16.msra.mxu0 0
        %873 = vmatprep.subr.bf16.mxu0 0
        %874 = vmatpush1.bf16.msra.mxu0 0
        %875 = vmatprep.subr.bf16.mxu0 0
        %876 = vmatpush1.bf16.msra.mxu0 0
        %877 = vmatprep.subr.bf16.mxu0 0
        %878 = vmatpush1.bf16.msra.mxu0 0
        %879 = vmatprep.subr.bf16.mxu0 0
        %880 = vmatpush1.bf16.msra.mxu0 0
        %881 = vmatprep.subr.bf16.mxu0 0
        %882 = vmatpush1.bf16.msra.mxu0 0
        %883 = vmatprep.subr.bf16.mxu0 0
        %884 = vmatpush1.bf16.msra.mxu0 0
        %885 = vmatprep.subr.bf16.mxu0 0
        %886 = vmatpush1.bf16.msra.mxu0 0
        %887 = vmatprep.mubr.bf16.mxu0 0
        %888 = vmatmul.mubr.bf16.gmra.mrb[0].mxu0 %v849
        %v889 = vpop.f32.mrb[0].mxu0
        %v890 = vadd.f32 %v842, %v889
        %v891 = vpop.f32.mrb[0].mxu0
        %v892 = vpop.f32.mrb[0].mxu0
        %v893 = vpop.f32.mrb[0].mxu0
        %894 = vdwg.mxu0
        %v896 = vsel %vm747, %v792, 0
        %v899 = vsel %vm851, %v583, 0
        %901 = vmatprep.subr.bf16.mxu0 0
        %902 = vmatpush1.bf16.msra.mxu0 %v899
        %903 = vmatprep.subr.bf16.mxu0 0
        %904 = vmatpush1.bf16.msra.mxu0 0
        %905 = vmatprep.subr.bf16.mxu0 0
        %906 = vmatpush1.bf16.msra.mxu0 0
        %907 = vmatprep.subr.bf16.mxu0 0
        %908 = vmatpush1.bf16.msra.mxu0 0
        %909 = vmatprep.subr.bf16.mxu0 0
        %910 = vmatpush1.bf16.msra.mxu0 0
        %911 = vmatprep.subr.bf16.mxu0 0
        %912 = vmatpush1.bf16.msra.mxu0 0
        %913 = vmatprep.subr.bf16.mxu0 0
        %914 = vmatpush1.bf16.msra.mxu0 0
        %915 = vmatprep.subr.bf16.mxu0 0
        %916 = vmatpush1.bf16.msra.mxu0 0
        %917 = vmatprep.subr.bf16.mxu0 0
        %918 = vmatpush1.bf16.msra.mxu0 0
        %919 = vmatprep.subr.bf16.mxu0 0
        %920 = vmatpush1.bf16.msra.mxu0 0
        %921 = vmatprep.subr.bf16.mxu0 0
        %922 = vmatpush1.bf16.msra.mxu0 0
        %923 = vmatprep.subr.bf16.mxu0 0
        %924 = vmatpush1.bf16.msra.mxu0 0
        %925 = vmatprep.subr.bf16.mxu0 0
        %926 = vmatpush1.bf16.msra.mxu0 0
        %927 = vmatprep.subr.bf16.mxu0 0
        %928 = vmatpush1.bf16.msra.mxu0 0
        %929 = vmatprep.subr.bf16.mxu0 0
        %930 = vmatpush1.bf16.msra.mxu0 0
        %931 = vmatprep.subr.bf16.mxu0 0
        %932 = vmatpush1.bf16.msra.mxu0 0
        %933 = vmatprep.mubr.bf16.mxu0 0
        %934 = vmatmul.mubr.bf16.gmra.mrb[0].mxu0 %v896
        %v935 = vpop.f32.mrb[0].mxu0
        %v936 = vadd.f32 %v845, %v935
        %v937 = vpop.f32.mrb[0].mxu0
        %v938 = vpop.f32.mrb[0].mxu0
        %v939 = vpop.f32.mrb[0].mxu0
        %940 = vdwg.mxu0
        %v941 = vmul.f32 %v890, %v789
        %v942 = vmul.f32 %v936, %v790
        %943 = vst.msk [vmem:[%s547] sm:$0xff] %vm596, %v941
        %944 = vst.msk [vmem:[%s547 + $0x8] sm:$0xff] %vm596, %v942
        %s945 = scalar_lea.vmem %s435, 8 [#allocation2]
        %v946 = vld [vmem:[%s945] sm:$0xf]
        %v947 = vld [vmem:[%s945 + $0x4] sm:$0xf]
        %s948 = scalar_lea.vmem %s444, 8 [#allocation5]
        %v949 = vld [vmem:[%s948] sm:$0xf]
        %v950 = vld [vmem:[%s948 + $0x4] sm:$0xf]
        %s951 = scalar_lea.vmem %s453, 8 [#allocation7]
        %v952 = vld [vmem:[%s951] sm:$0xf]
        %v953 = vld [vmem:[%s951 + $0x4] sm:$0xf]
        %s954 = scalar_lea.vmem %s462, 4 [#allocation8]
        %v955 = vld [vmem:[%s954] sm:$0x7]
        %s956 = scalar_lea.vmem %s471, 4 [#allocation10]
        %v957 = vld [vmem:[%s956] sm:$0x7]
        %v959 = vsel %vm596, %v946, 0
        %v962 = vsel %vm596, %v949, 0
        %964 = vmatprep.subr.bf16.mxu0 0
        %965 = vmatpush1.bf16.xpose.msra.mxu0 %v962
        %966 = vmatprep.subr.bf16.mxu0 0
        %967 = vmatpush1.bf16.xpose.msra.mxu0 0
        %968 = vmatprep.subr.bf16.mxu0 0
        %969 = vmatpush1.bf16.xpose.msra.mxu0 0
        %970 = vmatprep.subr.bf16.mxu0 0
        %971 = vmatpush1.bf16.xpose.msra.mxu0 0
        %972 = vmatprep.subr.bf16.mxu0 0
        %973 = vmatpush1.bf16.xpose.msra.mxu0 0
        %974 = vmatprep.subr.bf16.mxu0 0
        %975 = vmatpush1.bf16.xpose.msra.mxu0 0
        %976 = vmatprep.subr.bf16.mxu0 0
        %977 = vmatpush1.bf16.xpose.msra.mxu0 0
        %978 = vmatprep.subr.bf16.mxu0 0
        %979 = vmatpush1.bf16.xpose.msra.mxu0 0
        %980 = vmatprep.subr.bf16.mxu0 0
        %981 = vmatpush1.bf16.xpose.msra.mxu0 0
        %982 = vmatprep.subr.bf16.mxu0 0
        %983 = vmatpush1.bf16.xpose.msra.mxu0 0
        %984 = vmatprep.subr.bf16.mxu0 0
        %985 = vmatpush1.bf16.xpose.msra.mxu0 0
        %986 = vmatprep.subr.bf16.mxu0 0
        %987 = vmatpush1.bf16.xpose.msra.mxu0 0
        %988 = vmatprep.subr.bf16.mxu0 0
        %989 = vmatpush1.bf16.xpose.msra.mxu0 0
        %990 = vmatprep.subr.bf16.mxu0 0
        %991 = vmatpush1.bf16.xpose.msra.mxu0 0
        %992 = vmatprep.subr.bf16.mxu0 0
        %993 = vmatpush1.bf16.xpose.msra.mxu0 0
        %994 = vmatprep.subr.bf16.mxu0 0
        %995 = vmatpush1.bf16.xpose.msra.mxu0 0
        %996 = vmatprep.mubr.bf16.mxu0 0
        %997 = vmatmul.mubr.bf16.gmra.mrb[0].mxu0 %v959
        %v998 = vpop.f32.mrb[0].mxu0
        %v999 = vadd.f32 %v589, %v998
        %v1000 = vpop.f32.mrb[0].mxu0
        %v1001 = vpop.f32.mrb[0].mxu0
        %v1002 = vpop.f32.mrb[0].mxu0
        %1003 = vdwg.mxu0
        %v1005 = vsel %vm596, %v947, 0
        %v1008 = vsel %vm596, %v950, 0
        %1010 = vmatprep.subr.bf16.mxu0 0
        %1011 = vmatpush1.bf16.xpose.msra.mxu0 %v1008
        %1012 = vmatprep.subr.bf16.mxu0 0
        %1013 = vmatpush1.bf16.xpose.msra.mxu0 0
        %1014 = vmatprep.subr.bf16.mxu0 0
        %1015 = vmatpush1.bf16.xpose.msra.mxu0 0
        %1016 = vmatprep.subr.bf16.mxu0 0
        %1017 = vmatpush1.bf16.xpose.msra.mxu0 0
        %1018 = vmatprep.subr.bf16.mxu0 0
        %1019 = vmatpush1.bf16.xpose.msra.mxu0 0
        %1020 = vmatprep.subr.bf16.mxu0 0
        %1021 = vmatpush1.bf16.xpose.msra.mxu0 0
        %1022 = vmatprep.subr.bf16.mxu0 0
        %1023 = vmatpush1.bf16.xpose.msra.mxu0 0
        %1024 = vmatprep.subr.bf16.mxu0 0
        %1025 = vmatpush1.bf16.xpose.msra.mxu0 0
        %1026 = vmatprep.subr.bf16.mxu0 0
        %1027 = vmatpush1.bf16.xpose.msra.mxu0 0
        %1028 = vmatprep.subr.bf16.mxu0 0
        %1029 = vmatpush1.bf16.xpose.msra.mxu0 0
        %1030 = vmatprep.subr.bf16.mxu0 0
        %1031 = vmatpush1.bf16.xpose.msra.mxu0 0
        %1032 = vmatprep.subr.bf16.mxu0 0
        %1033 = vmatpush1.bf16.xpose.msra.mxu0 0
        %1034 = vmatprep.subr.bf16.mxu0 0
        %1035 = vmatpush1.bf16.xpose.msra.mxu0 0
        %1036 = vmatprep.subr.bf16.mxu0 0
        %1037 = vmatpush1.bf16.xpose.msra.mxu0 0
        %1038 = vmatprep.subr.bf16.mxu0 0
        %1039 = vmatpush1.bf16.xpose.msra.mxu0 0
        %1040 = vmatprep.subr.bf16.mxu0 0
        %1041 = vmatpush1.bf16.xpose.msra.mxu0 0
        %1042 = vmatprep.mubr.bf16.mxu0 0
        %1043 = vmatmul.mubr.bf16.gmra.mrb[0].mxu0 %v1005
        %v1044 = vpop.f32.mrb[0].mxu0
        %v1045 = vadd.f32 %v593, %v1044
        %v1046 = vpop.f32.mrb[0].mxu0
        %v1047 = vpop.f32.mrb[0].mxu0
        %v1048 = vpop.f32.mrb[0].mxu0
        %1049 = vdwg.mxu0
        %v1052 = vunpack.c.l.b16 %v946
        %v1053 = vunpack.c.l.b16 %v947
        %v1054 = vpack.c.b16 %v1053, %v1052
        %v1056 = vsel %vm596, %v1054, 0
        %v1059 = vsel %vm596, %v955, 0
        %1061 = vmatprep.subr.bf16.mxu0 0
        %1062 = vmatpush1.bf16.xpose.msra.mxu0 %v1059
        %1063 = vmatprep.subr.bf16.mxu0 0
        %1064 = vmatpush1.bf16.xpose.msra.mxu0 0
        %1065 = vmatprep.subr.bf16.mxu0 0
        %1066 = vmatpush1.bf16.xpose.msra.mxu0 0
        %1067 = vmatprep.subr.bf16.mxu0 0
        %1068 = vmatpush1.bf16.xpose.msra.mxu0 0
        %1069 = vmatprep.subr.bf16.mxu0 0
        %1070 = vmatpush1.bf16.xpose.msra.mxu0 0
        %1071 = vmatprep.subr.bf16.mxu0 0
        %1072 = vmatpush1.bf16.xpose.msra.mxu0 0
        %1073 = vmatprep.subr.bf16.mxu0 0
        %1074 = vmatpush1.bf16.xpose.msra.mxu0 0
        %1075 = vmatprep.subr.bf16.mxu0 0
        %1076 = vmatpush1.bf16.xpose.msra.mxu0 0
        %1077 = vmatprep.subr.bf16.mxu0 0
        %1078 = vmatpush1.bf16.xpose.msra.mxu0 0
        %1079 = vmatprep.subr.bf16.mxu0 0
        %1080 = vmatpush1.bf16.xpose.msra.mxu0 0
        %1081 = vmatprep.subr.bf16.mxu0 0
        %1082 = vmatpush1.bf16.xpose.msra.mxu0 0
        %1083 = vmatprep.subr.bf16.mxu0 0
        %1084 = vmatpush1.bf16.xpose.msra.mxu0 0
        %1085 = vmatprep.subr.bf16.mxu0 0
        %1086 = vmatpush1.bf16.xpose.msra.mxu0 0
        %1087 = vmatprep.subr.bf16.mxu0 0
        %1088 = vmatpush1.bf16.xpose.msra.mxu0 0
        %1089 = vmatprep.subr.bf16.mxu0 0
        %1090 = vmatpush1.bf16.xpose.msra.mxu0 0
        %1091 = vmatprep.subr.bf16.mxu0 0
        %1092 = vmatpush1.bf16.xpose.msra.mxu0 0
        %1093 = vmatprep.mubr.bf16.mxu0 0
        %1094 = vmatmul.mubr.bf16.gmra.mrb[0].mxu0 %v1056
        %v1095 = vpop.f32.mrb[0].mxu0
        %v1096 = vadd.f32 %v693, %v1095
        %v1097 = vpop.f32.mrb[0].mxu0
        %v1098 = vpop.f32.mrb[0].mxu0
        %v1099 = vadd.f32 %v693, %v1098
        %v1100 = vpop.f32.mrb[0].mxu0
        %1101 = vdwg.mxu0
        %v1102 = vsel %vm747, %v999, -inf
        %1103 = vmax.xlane.f32.xlu0 %v1102
        %v1104 = vpop.xlane.xlu0 %1103
        %v1105 = vsel %vm747, %v1045, -inf
        %1106 = vmax.xlane.f32.xlu0 %v1105
        %v1107 = vpop.xlane.xlu0 %1106
        %v1108 = vsel %vm754, %v1096, -inf
        %1109 = vmax.xlane.f32.xlu0 %v1108
        %v1110 = vpop.xlane.xlu0 %1109
        %v1111 = vsel %vm754, %v1099, -inf
        %1112 = vmax.xlane.f32.xlu0 %v1111
        %v1113 = vpop.xlane.xlu0 %1112
        %v1114 = vmax.f32 %v1104, %v1110
        %v1115 = vmax.f32 %v1107, %v1113
        %v1116 = vsub.f32 %v999, %v1114
        %v1117 = vsub.f32 %v1045, %v1115
        %v1118 = vmul.f32 %v1116, 1.442695
        %v1119 = vpow.pop %v1118
        %v1120 = vmul.f32 %v1117, 1.442695
        %v1121 = vpow.pop %v1120
        %v1122 = vsub.f32 %v1096, %v1114
        %v1123 = vsub.f32 %v1099, %v1115
        %v1124 = vmul.f32 %v1122, 1.442695
        %v1125 = vpow.pop %v1124
        %v1126 = vmul.f32 %v1123, 1.442695
        %v1127 = vpow.pop %v1126
        %v1128 = vsel %vm747, %v1119, 0.0
        %1129 = vadd.xlane.f32.xlu0 %v1128
        %v1130 = vpop.xlane.xlu0 %1129
        %v1131 = vsel %vm747, %v1121, 0.0
        %1132 = vadd.xlane.f32.xlu0 %v1131
        %v1133 = vpop.xlane.xlu0 %1132
        %v1134 = vsel %vm754, %v1125, 0.0
        %1135 = vadd.xlane.f32.xlu0 %v1134
        %v1136 = vpop.xlane.xlu0 %1135
        %v1137 = vsel %vm754, %v1127, 0.0
        %1138 = vadd.xlane.f32.xlu0 %v1137
        %v1139 = vpop.xlane.xlu0 %1138
        %v1140 = vadd.f32 %v1130, %v1136
        %v1141 = vadd.f32 %v1133, %v1139
        %v1142 = vrcp.pop %v1140
        %v1143 = vrcp.pop %v1141
        %v1144 = vpack.c.bf16 %v1119, %v1119
        %v1145 = vpack.c.bf16 %v1121, %v1121
        %v1146 = vpack.c.bf16 %v1125, %v1125
        %v1147 = vpack.c.bf16 %v1127, %v1127
        %v1150 = vunpack.c.l.b16 %v1146
        %v1151 = vunpack.c.l.b16 %v1147
        %v1152 = vpack.c.b16 %v1151, %v1150
        %v1154 = vsel %vm754, %v1152, 0
        %v1157 = vsel %vm803, %v957, 0
        %1159 = vmatprep.subr.bf16.mxu0 0
        %1160 = vmatpush1.bf16.msra.mxu0 %v1157
        %1161 = vmatprep.subr.bf16.mxu0 0
        %1162 = vmatpush1.bf16.msra.mxu0 0
        %1163 = vmatprep.subr.bf16.mxu0 0
        %1164 = vmatpush1.bf16.msra.mxu0 0
        %1165 = vmatprep.subr.bf16.mxu0 0
        %1166 = vmatpush1.bf16.msra.mxu0 0
        %1167 = vmatprep.subr.bf16.mxu0 0
        %1168 = vmatpush1.bf16.msra.mxu0 0
        %1169 = vmatprep.subr.bf16.mxu0 0
        %1170 = vmatpush1.bf16.msra.mxu0 0
        %1171 = vmatprep.subr.bf16.mxu0 0
        %1172 = vmatpush1.bf16.msra.mxu0 0
        %1173 = vmatprep.subr.bf16.mxu0 0
        %1174 = vmatpush1.bf16.msra.mxu0 0
        %1175 = vmatprep.subr.bf16.mxu0 0
        %1176 = vmatpush1.bf16.msra.mxu0 0
        %1177 = vmatprep.subr.bf16.mxu0 0
        %1178 = vmatpush1.bf16.msra.mxu0 0
        %1179 = vmatprep.subr.bf16.mxu0 0
        %1180 = vmatpush1.bf16.msra.mxu0 0
        %1181 = vmatprep.subr.bf16.mxu0 0
        %1182 = vmatpush1.bf16.msra.mxu0 0
        %1183 = vmatprep.subr.bf16.mxu0 0
        %1184 = vmatpush1.bf16.msra.mxu0 0
        %1185 = vmatprep.subr.bf16.mxu0 0
        %1186 = vmatpush1.bf16.msra.mxu0 0
        %1187 = vmatprep.subr.bf16.mxu0 0
        %1188 = vmatpush1.bf16.msra.mxu0 0
        %1189 = vmatprep.subr.bf16.mxu0 0
        %1190 = vmatpush1.bf16.msra.mxu0 0
        %1191 = vmatprep.mubr.bf16.mxu0 0
        %1192 = vmatmul.mubr.bf16.gmra.mrb[0].mxu0 %v1154
        %v1193 = vpop.f32.mrb[0].mxu0
        %v1194 = vadd.f32 0.0, %v1193
        %v1195 = vpop.f32.mrb[0].mxu0
        %v1196 = vpop.f32.mrb[0].mxu0
        %v1197 = vadd.f32 0.0, %v1196
        %v1198 = vpop.f32.mrb[0].mxu0
        %1199 = vdwg.mxu0
        %v1201 = vsel %vm747, %v1144, 0
        %v1204 = vsel %vm851, %v952, 0
        %1206 = vmatprep.subr.bf16.mxu0 0
        %1207 = vmatpush1.bf16.msra.mxu0 %v1204
        %1208 = vmatprep.subr.bf16.mxu0 0
        %1209 = vmatpush1.bf16.msra.mxu0 0
        %1210 = vmatprep.subr.bf16.mxu0 0
        %1211 = vmatpush1.bf16.msra.mxu0 0
        %1212 = vmatprep.subr.bf16.mxu0 0
        %1213 = vmatpush1.bf16.msra.mxu0 0
        %1214 = vmatprep.subr.bf16.mxu0 0
        %1215 = vmatpush1.bf16.msra.mxu0 0
        %1216 = vmatprep.subr.bf16.mxu0 0
        %1217 = vmatpush1.bf16.msra.mxu0 0
        %1218 = vmatprep.subr.bf16.mxu0 0
        %1219 = vmatpush1.bf16.msra.mxu0 0
        %1220 = vmatprep.subr.bf16.mxu0 0
        %1221 = vmatpush1.bf16.msra.mxu0 0
        %1222 = vmatprep.subr.bf16.mxu0 0
        %1223 = vmatpush1.bf16.msra.mxu0 0
        %1224 = vmatprep.subr.bf16.mxu0 0
        %1225 = vmatpush1.bf16.msra.mxu0 0
        %1226 = vmatprep.subr.bf16.mxu0 0
        %1227 = vmatpush1.bf16.msra.mxu0 0
        %1228 = vmatprep.subr.bf16.mxu0 0
        %1229 = vmatpush1.bf16.msra.mxu0 0
        %1230 = vmatprep.subr.bf16.mxu0 0
        %1231 = vmatpush1.bf16.msra.mxu0 0
        %1232 = vmatprep.subr.bf16.mxu0 0
        %1233 = vmatpush1.bf16.msra.mxu0 0
        %1234 = vmatprep.subr.bf16.mxu0 0
        %1235 = vmatpush1.bf16.msra.mxu0 0
        %1236 = vmatprep.subr.bf16.mxu0 0
        %1237 = vmatpush1.bf16.msra.mxu0 0
        %1238 = vmatprep.mubr.bf16.mxu0 0
        %1239 = vmatmul.mubr.bf16.gmra.mrb[0].mxu0 %v1201
        %v1240 = vpop.f32.mrb[0].mxu0
        %v1241 = vadd.f32 %v1194, %v1240
        %v1242 = vpop.f32.mrb[0].mxu0
        %v1243 = vpop.f32.mrb[0].mxu0
        %v1244 = vpop.f32.mrb[0].mxu0
        %1245 = vdwg.mxu0
        %v1247 = vsel %vm747, %v1145, 0
        %v1250 = vsel %vm851, %v953, 0
        %1252 = vmatprep.subr.bf16.mxu0 0
        %1253 = vmatpush1.bf16.msra.mxu0 %v1250
        %1254 = vmatprep.subr.bf16.mxu0 0
        %1255 = vmatpush1.bf16.msra.mxu0 0
        %1256 = vmatprep.subr.bf16.mxu0 0
        %1257 = vmatpush1.bf16.msra.mxu0 0
        %1258 = vmatprep.subr.bf16.mxu0 0
        %1259 = vmatpush1.bf16.msra.mxu0 0
        %1260 = vmatprep.subr.bf16.mxu0 0
        %1261 = vmatpush1.bf16.msra.mxu0 0
        %1262 = vmatprep.subr.bf16.mxu0 0
        %1263 = vmatpush1.bf16.msra.mxu0 0
        %1264 = vmatprep.subr.bf16.mxu0 0
        %1265 = vmatpush1.bf16.msra.mxu0 0
        %1266 = vmatprep.subr.bf16.mxu0 0
        %1267 = vmatpush1.bf16.msra.mxu0 0
        %1268 = vmatprep.subr.bf16.mxu0 0
        %1269 = vmatpush1.bf16.msra.mxu0 0
        %1270 = vmatprep.subr.bf16.mxu0 0
        %1271 = vmatpush1.bf16.msra.mxu0 0
        %1272 = vmatprep.subr.bf16.mxu0 0
        %1273 = vmatpush1.bf16.msra.mxu0 0
        %1274 = vmatprep.subr.bf16.mxu0 0
        %1275 = vmatpush1.bf16.msra.mxu0 0
        %1276 = vmatprep.subr.bf16.mxu0 0
        %1277 = vmatpush1.bf16.msra.mxu0 0
        %1278 = vmatprep.subr.bf16.mxu0 0
        %1279 = vmatpush1.bf16.msra.mxu0 0
        %1280 = vmatprep.subr.bf16.mxu0 0
        %1281 = vmatpush1.bf16.msra.mxu0 0
        %1282 = vmatprep.subr.bf16.mxu0 0
        %1283 = vmatpush1.bf16.msra.mxu0 0
        %1284 = vmatprep.mubr.bf16.mxu0 0
        %1285 = vmatmul.mubr.bf16.gmra.mrb[0].mxu0 %v1247
        %v1286 = vpop.f32.mrb[0].mxu0
        %v1287 = vadd.f32 %v1197, %v1286
        %v1288 = vpop.f32.mrb[0].mxu0
        %v1289 = vpop.f32.mrb[0].mxu0
        %v1290 = vpop.f32.mrb[0].mxu0
        %1291 = vdwg.mxu0
        %v1292 = vmul.f32 %v1241, %v1142
        %v1293 = vmul.f32 %v1287, %v1143
        %1296 = vrot.lane.b32.xlu0 %v1292, 16
        %v1297 = vpop.permute.xlu0 %1296
        %1298 = vrot.lane.b32.xlu0 %v1293, 16
        %v1299 = vpop.permute.xlu0 %1298
        %vm1302 = vcmask 261248
        %1303 = vst.msk [vmem:[%s547] sm:$0xff] %vm1302, %v1297
        %1304 = vst.msk [vmem:[%s547 + $0x8] sm:$0xff] %vm1302, %v1299
        %s1305 = sand.u32 %s245, 1
        %s1306 = scalar_lea.sflag [#allocation4], %s1305
        %s1307 = sand.u32 %s245, 1
        %s1308 = smul.addr %s1307, 16
        %s1309 = scalar_lea.vmem [#allocation14], %s1308
        // Predicated region
        $region77: #{tpu_custom_call.1} parent=47 // pred_check
          %p1310 = pneg %p255
        $region78: #{tpu_custom_call.1} parent=47 // pred_check_branch
          %1312 = sbr.rel (%p1310) target = $region80
        $region79: #{tpu_custom_call.1} parent=47 // pred_region
          %s1313 = smul.u32 2, %s38
          %s1315 = ssub.s32 256, 256
          %1316 = vsyncadd %s1306, %s1315
          %s1317 = smul.addr %s37, 2
          %s1318 = sadd.s32 %s1313, %s1317
          %s1319 = smul.addr %s1318, 128
          %s1320 = scalar_lea.hbm %s7, %s1319
          %s1321 = sshll.u32 %s1309, 4
          %s1322 = int_to_ptr.vmem [resolvable:$true] %s1321
          %1327 = dma.vmem_to_hbm [thread:$0]  %s1322, 256, %s1320, %s1306, 128, 128, 8
        $region80: #{tpu_custom_call.1} parent=47 // pred_fallthru
          _
      $region48: #{tpu_custom_call.1} parent=5 // pred_fallthru
        _
      %p1328 = scmp.le.s32.totalorder 2, %s28
      // Predicated region
      $region81: #{tpu_custom_call.1} parent=5 // pred_check
        %p1329 = pneg %p1328
      $region82: #{tpu_custom_call.1} parent=5 // pred_check_branch
        %1331 = sbr.rel (%p1329) target = $region84
      $region83: #{tpu_custom_call.1} parent=5 // pred_region
        %s1332 = ssub.s32 %s28, 2
        // Predicated region
        $region85: #{tpu_custom_call.1} parent=83 // pred_check
          %p1333 = pneg %p261
        $region86: #{tpu_custom_call.1} parent=83 // pred_check_branch
          %1335 = sbr.rel (%p1333) target = $region88
        $region87: #{tpu_custom_call.1} parent=83 // pred_region
          %s1336 = sand.u32 %s246, 1
          %s1337 = scalar_lea.sflag [#allocation4], %s1336
          %s1338 = sand.u32 %s246, 1
          %s1339 = smul.addr %s1338, 16
          %s1340 = scalar_lea.vmem [#allocation14], %s1339
          %1341 = dma.done %s1337, 256
        $region88: #{tpu_custom_call.1} parent=83 // pred_fallthru
          _
      $region84: #{tpu_custom_call.1} parent=5 // pred_fallthru
        _
    $region6: #{tpu_custom_call.1} parent=1 // loop_footer
      %s32 = sadd.s32 1, %s28
    $region7: #{tpu_custom_call.1} parent=1 // loop_footer_branch
      %27 = sbr.rel target = $region3
    $region8: #{tpu_custom_call.1} parent=1 // loop_exit
      _
    %1342 = vsyncpa [#allocation3], 1
    %s1343 = scalar_lea.sflag [#allocation3], 1
    %1344 = vsyncpa %s1343, 1
    %1345 = vsyncpa [#allocation6], 1
    %s1346 = scalar_lea.sflag [#allocation6], 1
    %1347 = vsyncpa %s1346, 1
    %1348 = vsyncpa [#allocation9], 1
    %s1349 = scalar_lea.sflag [#allocation9], 1
    %1350 = vsyncpa %s1349, 1
    %1351 = vsyncpa [#allocation12], 1
    %s1352 = scalar_lea.sflag [#allocation12], 1
    %1353 = vsyncpa %s1352, 1
    %1354 = vsyncpa [#allocation4], 1
    %s1355 = scalar_lea.sflag [#allocation4], 1
    %1356 = vsyncpa %s1355, 1

</llo_original>
